<compile_context>
chip_gen: v7x
topology: tpu7x:2x2x1
jax: 0.10.0
libtpu: 0.0.40
codegen_flags: <defaults>
</compile_context>

<pallas_src>
import functools

import numpy as np
import jax
import jax.numpy as jnp
from jax.experimental import pallas as pl
from jax.experimental.pallas import tpu as pltpu


def _mod(v, m):
    """Vector modulo; uses bitwise AND when m is a power of two (VPU-native)."""
    if m & (m - 1) == 0:
        return jnp.bitwise_and(v, m - 1)
    return v % m  # non power-of-two fallback


# ----------------------------------------------------------------------------
# Pallas kernel: one batch-block per grid step, whole feature plane in VMEM.
# ----------------------------------------------------------------------------
def _senext_kernel(NB, H, W, Cin, Ch, Cout,
                   x_ref,
                   w1_ref, a1_ref, b1_ref,
                   w2d_ref, w2o_ref, psw_ref, a2_ref, b2_ref,
                   w3_ref, a3_ref, b3_ref,
                   sw1_ref, sb1_ref, sw2_ref, sb2_ref,
                   pool_ref, scat_ref,
                   o_ref):
    HW = H * W
    M = NB * HW

    x3 = x_ref[...]                          # (NB, HW, Cin)
    x = x3.reshape(M, Cin)                   # merge leading dims (lane dim unchanged)

    # --- conv_bn1: 1x1 conv + BN + ReLU -> (M, Ch)
    z1 = jnp.dot(x, w1_ref[...], preferred_element_type=jnp.float32)
    z1 = jnp.maximum(z1 * a1_ref[...] + b1_ref[...], 0.0)

    # --- conv_bn2: grouped 3x3 (2 channels per group) on the VPU.
    # Boundary predicates for the 3x3 taps (per flat row), no integer division.
    rows = jax.lax.broadcasted_iota(jnp.int32, (M, 1), 0)
    pix = _mod(rows, HW)                     # pixel index within one image
    px = _mod(pix, W)                        # column within a row
    top = pix >= W                           # has a row above    (y >= 1)
    bottom = pix < HW - W                    # has a row below    (y <= H-2)
    left = px >= 1                           # has a column left  (x >= 1)
    right = px <= W - 2                      # has a column right (x <= W-2)

    accA = jnp.zeros((M, Ch), jnp.float32)   # same-channel accumulation
    accB = jnp.zeros((M, Ch), jnp.float32)   # partner-channel accumulation
    for dy in range(3):
        for dx in range(3):
            k = dy * 3 + dx
            off = (dy - 1) * W + (dx - 1)    # flat source offset of this tap
            shift = (-off) % M
            zs = pltpu.roll(z1, shift=shift, axis=0) if shift else z1
            conds = []
            if dy == 0:
                conds.append(top)
            if dy == 2:
                conds.append(bottom)
            if dx == 0:
                conds.append(left)
            if dx == 2:
                conds.append(right)
            if conds:
                m = conds[0]
                for c in conds[1:]:
                    m = jnp.logical_and(m, c)
                zs = jnp.where(m, zs, 0.0)
            accA = accA + zs * w2d_ref[k]    # (M, Ch) * (1, Ch)
            accB = accB + zs * w2o_ref[k]
    # Route the partner-channel accumulation to its output channel (exact:
    # psw is a 0/1 pair-swap permutation matrix).
    acc = accA + jnp.dot(accB, psw_ref[...], preferred_element_type=jnp.float32)
    z2 = jnp.maximum(acc * a2_ref[...] + b2_ref[...], 0.0)          # (M, Ch)

    # --- conv_bn3: 1x1 conv + BN -> (M, Cout)
    z3 = jnp.dot(z2, w3_ref[...], preferred_element_type=jnp.float32)
    z3 = z3 * a3_ref[...] + b3_ref[...]

    # --- SqueezeExcite: per-image average pool -> fc1 -> relu -> fc2 -> sigmoid
    # pool_ref is (NB, M) with 1/HW over each image's rows -> exact per-image mean.
    pooled = jnp.dot(pool_ref[...], z3, preferred_element_type=jnp.float32)   # (NB, Cout)
    s = jnp.dot(pooled, sw1_ref[...], preferred_element_type=jnp.float32)
    s = jnp.maximum(s + sb1_ref[...], 0.0)                                    # (NB, Cr)
    s = jnp.dot(s, sw2_ref[...], preferred_element_type=jnp.float32)
    s = jax.nn.sigmoid(s + sb2_ref[...])                                      # (NB, Cout)
    # scat_ref is (M, NB) 0/1 -> broadcasts each image's gate back to its rows.
    s_rows = jnp.dot(scat_ref[...], s, preferred_element_type=jnp.float32)    # (M, Cout)

    # --- scale, identity residual, final ReLU
    # TODO(synk): is_shortcut=True / stride>1 residual branch (extra strided
    # 1x1 conv+bn) not implemented; this config uses the identity residual.
    z = jnp.maximum(z3 * s_rows + x, 0.0)
    o_ref[...] = z.reshape(NB, HW, Cout).astype(o_ref.dtype)


# ----------------------------------------------------------------------------
# Wrapper: NHWC in / NHWC out (no boundary transposes), builds the pallas_call.
# ----------------------------------------------------------------------------
def senext_forward_pallas(x_nhwc, kp, *, batch_block=None):
    N, H, W, Cin = x_nhwc.shape
    Ch = kp["w1"].shape[1]
    Cout = kp["w3"].shape[1]
    Cr = kp["sw1"].shape[1]
    HW = H * W

    # Identity residual (is_shortcut=False, stride=1) requires matching shapes.
    assert Cin == Cout, "identity residual requires in_channel == out_channel"

    if batch_block is None:
        # Fold the whole batch into the matmul M dimension (best MXU occupancy
        # on v5e/v6e).  On v7x use batch_block = N // 2 to keep a "parallel"
        # grid axis for the two TensorCores.
        batch_block = N
    assert N % batch_block == 0
    NB = batch_block
    GN = N // NB
    M = NB * HW

    x = x_nhwc.reshape(N, HW, Cin)           # free reshape, channels stay minor

    # Constant 0/1 matrices for per-image SE pooling / re-broadcast.
    pool = np.zeros((NB, M), np.float32)
    for n in range(NB):
        pool[n, n * HW:(n + 1) * HW] = 1.0 / HW
    scat = (pool > 0).astype(np.float32).T   # (M, NB)
    pool = jnp.asarray(pool)
    scat = jnp.asarray(scat)

    kernel = functools.partial(_senext_kernel, NB, H, W, Cin, Ch, Cout)

    out = pl.pallas_call(
        kernel,
        out_shape=jax.ShapeDtypeStruct((N, HW, Cout), jnp.float32),
        grid_spec=pltpu.PrefetchScalarGridSpec(
            num_scalar_prefetch=0,
            grid=(GN,),
            in_specs=[
                pl.BlockSpec((NB, HW, Cin), lambda g: (g, 0, 0)),     # x
                pl.BlockSpec((Cin, Ch), lambda g: (0, 0)),            # w1
                pl.BlockSpec((1, Ch), lambda g: (0, 0)),              # bn1 scale
                pl.BlockSpec((1, Ch), lambda g: (0, 0)),              # bn1 bias
                pl.BlockSpec((9, 1, Ch), lambda g: (0, 0, 0)),        # conv2 diag taps
                pl.BlockSpec((9, 1, Ch), lambda g: (0, 0, 0)),        # conv2 partner taps
                pl.BlockSpec((Ch, Ch), lambda g: (0, 0)),             # pair-swap permutation
                pl.BlockSpec((1, Ch), lambda g: (0, 0)),              # bn2 scale
                pl.BlockSpec((1, Ch), lambda g: (0, 0)),              # bn2 bias
                pl.BlockSpec((Ch, Cout), lambda g: (0, 0)),           # w3
                pl.BlockSpec((1, Cout), lambda g: (0, 0)),            # bn3 scale
                pl.BlockSpec((1, Cout), lambda g: (0, 0)),            # bn3 bias
                pl.BlockSpec((Cout, Cr), lambda g: (0, 0)),           # se fc1 w
                pl.BlockSpec((1, Cr), lambda g: (0, 0)),              # se fc1 b
                pl.BlockSpec((Cr, Cout), lambda g: (0, 0)),           # se fc2 w
                pl.BlockSpec((1, Cout), lambda g: (0, 0)),            # se fc2 b
                pl.BlockSpec((NB, M), lambda g: (0, 0)),              # pooling matrix
                pl.BlockSpec((M, NB), lambda g: (0, 0)),              # scatter matrix
            ],
            out_specs=pl.BlockSpec((NB, HW, Cout), lambda g: (g, 0, 0)),
        ),
        compiler_params=pltpu.CompilerParams(
            dimension_semantics=("parallel",)),
    )(x, kp["w1"], kp["a1"], kp["b1"],
      kp["w2d"], kp["w2o"], kp["psw"], kp["a2"], kp["b2"],
      kp["w3"], kp["a3"], kp["b3"],
      kp["sw1"], kp["sb1"], kp["sw2"], kp["sb2"],
      pool, scat)

    return out.reshape(N, H, W, Cout)


# ----------------------------------------------------------------------------
# Parameter construction (deterministic, torch-shaped) + folding helpers.
# ----------------------------------------------------------------------------
def make_params(key, Cin, Ch, Cout, groups, reduction):
    Cr = Cout // reduction
    ks = iter(jax.random.split(key, 32))

    def nrm(shape, scale=0.1):
        return scale * jax.random.normal(next(ks), shape, dtype=jnp.float32)

    def bn(c):
        return dict(gamma=1.0 + nrm((c,)), beta=nrm((c,)), mean=nrm((c,)),
                    var=0.5 + jax.random.uniform(next(ks), (c,), dtype=jnp.float32))

    return dict(
        conv1_w=nrm((Ch, Cin, 1, 1)), bn1=bn(Ch),
        conv2_w=nrm((Ch, Ch // groups, 3, 3), scale=0.2), bn2=bn(Ch),
        conv3_w=nrm((Cout, Ch, 1, 1)), bn3=bn(Cout),
        fc1_w=nrm((Cr, Cout, 1, 1)), fc1_b=nrm((Cr,)),
        fc2_w=nrm((Cout, Cr, 1, 1)), fc2_b=nrm((Cout,)),
    )


def fold_bn(b, eps=1e-5):
    a = b["gamma"] / jnp.sqrt(b["var"] + eps)
    return a.reshape(1, -1), (b["beta"] - b["mean"] * a).reshape(1, -1)


def compact_grouped_3x3(w, groups):
    """(Ch, Ch//groups, 3, 3) grouped weight -> compact per-tap channel vectors.

    Returns (wd, wo, psw) with
      wd[k, 0, c] = weight(out=c,   in=c,   tap k)
      wo[k, 0, c] = weight(out=c^1, in=c,   tap k)   (routed via psw pair-swap)
      psw         = (Ch, Ch) pair-swap permutation matrix.
    """
    w = np.asarray(w, np.float32)
    Ch, cg, KH, KW = w.shape
    assert Ch % groups == 0 and cg == Ch // groups
    # TODO(synk): general channels-per-group (> 2) grouped conv not implemented.
    assert cg == 2, "VPU grouped-conv path implemented for 2 channels per group"
    c = np.arange(Ch)
    wd = w[c, c % 2].transpose(1, 2, 0).reshape(KH * KW, 1, Ch)
    wo = w[c ^ 1, c % 2].transpose(1, 2, 0).reshape(KH * KW, 1, Ch)
    psw = np.zeros((Ch, Ch), np.float32)
    psw[c, c ^ 1] = 1.0
    return jnp.asarray(wd), jnp.asarray(wo), jnp.asarray(psw)


def prepare_kernel_params(p, groups):
    Ch, Cin = p["conv1_w"].shape[:2]
    Cout = p["conv3_w"].shape[0]
    Cr = p["fc1_w"].shape[0]
    a1, b1 = fold_bn(p["bn1"])
    a2, b2 = fold_bn(p["bn2"])
    a3, b3 = fold_bn(p["bn3"])
    w2d, w2o, psw = compact_grouped_3x3(p["conv2_w"], groups)
    return dict(
        w1=jnp.transpose(p["conv1_w"].reshape(Ch, Cin)),      # (Cin, Ch)
        a1=a1, b1=b1,
        w2d=w2d, w2o=w2o, psw=psw,
        a2=a2, b2=b2,
        w3=jnp.transpose(p["conv3_w"].reshape(Cout, Ch)),     # (Ch, Cout)
        a3=a3, b3=b3,
        sw1=jnp.transpose(p["fc1_w"].reshape(Cr, Cout)),      # (Cout, Cr)
        sb1=p["fc1_b"].reshape(1, Cr),
        sw2=jnp.transpose(p["fc2_w"].reshape(Cout, Cr)),      # (Cr, Cout)
        sb2=p["fc2_b"].reshape(1, Cout),
    )


# ----------------------------------------------------------------------------
# Pure-JAX reference (mirrors the PyTorch forward, eval-mode BN), NCHW.
# ----------------------------------------------------------------------------
def reference_forward(x, p, groups, eps=1e-5):
    def conv(x, w, padding=0, fgc=1):
        return jax.lax.conv_general_dilated(
            x, w, window_strides=(1, 1),
            padding=[(padding, padding), (padding, padding)],
            dimension_numbers=("NCHW", "OIHW", "NCHW"),
            feature_group_count=fgc)

    def bn(y, b):
        a = b["gamma"] / jnp.sqrt(b["var"] + eps)
        return y * a[None, :, None, None] + (b["beta"] - b["mean"] * a)[None, :, None, None]

    z = jax.nn.relu(bn(conv(x, p["conv1_w"]), p["bn1"]))
    z = jax.nn.relu(bn(conv(z, p["conv2_w"], padding=1, fgc=groups), p["bn2"]))
    z = bn(conv(z, p["conv3_w"]), p["bn3"])
    s = jnp.mean(z, axis=(2, 3), keepdims=True)
    s = jax.nn.relu(conv(s, p["fc1_w"]) + p["fc1_b"][None, :, None, None])
    s = jax.nn.sigmoid(conv(s, p["fc2_w"]) + p["fc2_b"][None, :, None, None])
    z = z * s
    z = z + x            # is_shortcut=False -> identity residual
    return jax.nn.relu(z)


# ----------------------------------------------------------------------------
if __name__ == "__main__":
    # Module config: SENextBottleneckBlock(64, 64, 64, stride=1, group=32,
    #                                      reduction=16, is_shortcut=False)
    N, H, W = 2, 8, 8
    in_channel, channel, out_channel = 64, 64, 64
    group, reduction = 32, 16

    key = jax.random.PRNGKey(0)
    kx, kparam = jax.random.split(key)
    # Kernel-native layout is NHWC (channels on the TPU lane axis); the input is
    # built directly in NHWC so the wrapper needs no NCHW<->NHWC transposes.
    x_nhwc = jax.random.normal(kx, (N, H, W, in_channel), dtype=jnp.float32)

    params = make_params(kparam, in_channel, channel, out_channel, group, reduction)
    kparams = prepare_kernel_params(params, group)

    out = jax.block_until_ready(senext_forward_pallas(x_nhwc, kparams))

    x_nchw = jnp.transpose(x_nhwc, (0, 3, 1, 2))
    ref = reference_forward(x_nchw, params, group)
    ref_nhwc = jax.block_until_ready(jnp.transpose(ref, (0, 2, 3, 1)))
    np.testing.assert_allclose(np.asarray(out), np.asarray(ref_nhwc),
                               rtol=2e-3, atol=2e-3)
    print("KERNEL_OK")
</pallas_src>

<mosaic_0001>
module attributes {stable_mosaic.version = 11 : i64} {
  func.func @_senext_kernel(%arg0: i32, %arg1: memref<2x64x64xf32, #tpu.memory_space<vmem>>, %arg2: memref<64x64xf32, #tpu.memory_space<vmem>>, %arg3: memref<1x64xf32, #tpu.memory_space<vmem>>, %arg4: memref<1x64xf32, #tpu.memory_space<vmem>>, %arg5: memref<9x1x64xf32, #tpu.memory_space<vmem>>, %arg6: memref<9x1x64xf32, #tpu.memory_space<vmem>>, %arg7: memref<64x64xf32, #tpu.memory_space<vmem>>, %arg8: memref<1x64xf32, #tpu.memory_space<vmem>>, %arg9: memref<1x64xf32, #tpu.memory_space<vmem>>, %arg10: memref<64x64xf32, #tpu.memory_space<vmem>>, %arg11: memref<1x64xf32, #tpu.memory_space<vmem>>, %arg12: memref<1x64xf32, #tpu.memory_space<vmem>>, %arg13: memref<64x4xf32, #tpu.memory_space<vmem>>, %arg14: memref<1x4xf32, #tpu.memory_space<vmem>>, %arg15: memref<4x64xf32, #tpu.memory_space<vmem>>, %arg16: memref<1x64xf32, #tpu.memory_space<vmem>>, %arg17: memref<2x128xf32, #tpu.memory_space<vmem>>, %arg18: memref<128x2xf32, #tpu.memory_space<vmem>>, %arg19: memref<2x64x64xf32, #tpu.memory_space<vmem>>) attributes {dimension_semantics = [#tpu.dimension_semantics<parallel>], iteration_bounds = array<i64: 1>, scalar_prefetch = 0 : i64, scratch_operands = 0 : i64, tpu.core_type = #tpu.core_type<tc>, window_params = [{transform_indices = @transform_0, window_bounds = array<i64: 2, 64, 64>}, {pipeline_mode = #tpu.pipeline_mode<synchronous>, transform_indices = @transform_1, window_bounds = array<i64: 64, 64>}, {pipeline_mode = #tpu.pipeline_mode<synchronous>, transform_indices = @transform_2, window_bounds = array<i64: 1, 64>}, {pipeline_mode = #tpu.pipeline_mode<synchronous>, transform_indices = @transform_3, window_bounds = array<i64: 1, 64>}, {pipeline_mode = #tpu.pipeline_mode<synchronous>, transform_indices = @transform_4, window_bounds = array<i64: 9, 1, 64>}, {pipeline_mode = #tpu.pipeline_mode<synchronous>, transform_indices = @transform_5, window_bounds = array<i64: 9, 1, 64>}, {pipeline_mode = #tpu.pipeline_mode<synchronous>, transform_indices = @transform_6, window_bounds = array<i64: 64, 64>}, {pipeline_mode = #tpu.pipeline_mode<synchronous>, transform_indices = @transform_7, window_bounds = array<i64: 1, 64>}, {pipeline_mode = #tpu.pipeline_mode<synchronous>, transform_indices = @transform_8, window_bounds = array<i64: 1, 64>}, {pipeline_mode = #tpu.pipeline_mode<synchronous>, transform_indices = @transform_9, window_bounds = array<i64: 64, 64>}, {pipeline_mode = #tpu.pipeline_mode<synchronous>, transform_indices = @transform_10, window_bounds = array<i64: 1, 64>}, {pipeline_mode = #tpu.pipeline_mode<synchronous>, transform_indices = @transform_11, window_bounds = array<i64: 1, 64>}, {pipeline_mode = #tpu.pipeline_mode<synchronous>, transform_indices = @transform_12, window_bounds = array<i64: 64, 4>}, {pipeline_mode = #tpu.pipeline_mode<synchronous>, transform_indices = @transform_13, window_bounds = array<i64: 1, 4>}, {pipeline_mode = #tpu.pipeline_mode<synchronous>, transform_indices = @transform_14, window_bounds = array<i64: 4, 64>}, {pipeline_mode = #tpu.pipeline_mode<synchronous>, transform_indices = @transform_15, window_bounds = array<i64: 1, 64>}, {pipeline_mode = #tpu.pipeline_mode<synchronous>, transform_indices = @transform_16, window_bounds = array<i64: 2, 128>}, {pipeline_mode = #tpu.pipeline_mode<synchronous>, transform_indices = @transform_17, window_bounds = array<i64: 128, 2>}, {transform_indices = @transform_18, window_bounds = array<i64: 2, 64, 64>}]} {
    %c0 = arith.constant 0 : index
    %c0_0 = arith.constant 0 : index
    %c0_1 = arith.constant 0 : index
    %0 = vector.load %arg1[%c0, %c0_0, %c0_1] : memref<2x64x64xf32, #tpu.memory_space<vmem>>, vector<2x64x64xf32>
    %1 = vector.shape_cast %0 : vector<2x64x64xf32> to vector<128x64xf32>
    %c0_2 = arith.constant 0 : index
    %c0_3 = arith.constant 0 : index
    %2 = vector.load %arg2[%c0_2, %c0_3] : memref<64x64xf32, #tpu.memory_space<vmem>>, vector<64x64xf32>
    %cst = arith.constant dense<0.000000e+00> : vector<128x64xf32>
    %3 = tpu.matmul %1, %2, %cst {dimension_numbers = #tpu.dot_dimension_numbers<[1], [0], [0], [1], [0, 0, 1, 1], [], []>} : vector<128x64xf32>, vector<64x64xf32>, vector<128x64xf32> -> vector<128x64xf32>
    %c0_4 = arith.constant 0 : index
    %c0_5 = arith.constant 0 : index
    %4 = vector.load %arg3[%c0_4, %c0_5] : memref<1x64xf32, #tpu.memory_space<vmem>>, vector<1x64xf32>
    %5 = vector.broadcast %4 : vector<1x64xf32> to vector<128x64xf32>
    %6 = arith.mulf %3, %5 : vector<128x64xf32>
    %c0_6 = arith.constant 0 : index
    %c0_7 = arith.constant 0 : index
    %7 = vector.load %arg4[%c0_6, %c0_7] : memref<1x64xf32, #tpu.memory_space<vmem>>, vector<1x64xf32>
    %8 = vector.broadcast %7 : vector<1x64xf32> to vector<128x64xf32>
    %9 = arith.addf %6, %8 : vector<128x64xf32>
    %cst_8 = arith.constant 0.000000e+00 : f32
    %10 = vector.broadcast %cst_8 : f32 to vector<128x64xf32>
    %11 = arith.maximumf %9, %10 : vector<128x64xf32>
    %12 = tpu.iota {dimensions = array<i32: 0>} : vector<128x1xi32>
    %c63_i32 = arith.constant 63 : i32
    %13 = vector.broadcast %c63_i32 : i32 to vector<128x1xi32>
    %14 = arith.andi %12, %13 : vector<128x1xi32>
    %c7_i32 = arith.constant 7 : i32
    %15 = vector.broadcast %c7_i32 : i32 to vector<128x1xi32>
    %16 = arith.andi %14, %15 : vector<128x1xi32>
    %c8_i32 = arith.constant 8 : i32
    %17 = vector.broadcast %c8_i32 : i32 to vector<128x1xi32>
    %18 = arith.cmpi sge, %14, %17 : vector<128x1xi32>
    %c56_i32 = arith.constant 56 : i32
    %19 = vector.broadcast %c56_i32 : i32 to vector<128x1xi32>
    %20 = arith.cmpi slt, %14, %19 : vector<128x1xi32>
    %c1_i32 = arith.constant 1 : i32
    %21 = vector.broadcast %c1_i32 : i32 to vector<128x1xi32>
    %22 = arith.cmpi sge, %16, %21 : vector<128x1xi32>
    %c6_i32 = arith.constant 6 : i32
    %23 = vector.broadcast %c6_i32 : i32 to vector<128x1xi32>
    %24 = arith.cmpi sle, %16, %23 : vector<128x1xi32>
    %cst_9 = arith.constant 0.000000e+00 : f32
    %25 = vector.broadcast %cst_9 : f32 to vector<128x64xf32>
    %cst_10 = arith.constant 0.000000e+00 : f32
    %26 = vector.broadcast %cst_10 : f32 to vector<128x64xf32>
    %c9_i32 = arith.constant 9 : i32
    %27 = tpu.dynamic_rotate %11 by %c9_i32 dim 0 : vector<128x64xf32>, i32 -> vector<128x64xf32>
    %28 = arith.andi %18, %22 : vector<128x1xi1>
    %cst_11 = arith.constant 0.000000e+00 : f32
    %29 = vector.shape_cast %28 : vector<128x1xi1> to vector<128x1xi1>
    %30 = vector.broadcast %29 : vector<128x1xi1> to vector<128x64xi1>
    %31 = vector.broadcast %cst_11 : f32 to vector<128x64xf32>
    %32 = arith.select %30, %27, %31 : vector<128x64xi1>, vector<128x64xf32>
    %c0_12 = arith.constant 0 : index
    %c0_13 = arith.constant 0 : index
    %c0_14 = arith.constant 0 : index
    %33 = vector.load %arg5[%c0_12, %c0_13, %c0_14] : memref<9x1x64xf32, #tpu.memory_space<vmem>>, vector<1x1x64xf32>
    %34 = vector.shape_cast %33 : vector<1x1x64xf32> to vector<1x64xf32>
    %35 = vector.broadcast %34 : vector<1x64xf32> to vector<128x64xf32>
    %36 = arith.mulf %32, %35 : vector<128x64xf32>
    %37 = arith.addf %25, %36 : vector<128x64xf32>
    %c0_15 = arith.constant 0 : index
    %c0_16 = arith.constant 0 : index
    %c0_17 = arith.constant 0 : index
    %38 = vector.load %arg6[%c0_15, %c0_16, %c0_17] : memref<9x1x64xf32, #tpu.memory_space<vmem>>, vector<1x1x64xf32>
    %39 = vector.shape_cast %38 : vector<1x1x64xf32> to vector<1x64xf32>
    %40 = vector.broadcast %39 : vector<1x64xf32> to vector<128x64xf32>
    %41 = arith.mulf %32, %40 : vector<128x64xf32>
    %42 = arith.addf %26, %41 : vector<128x64xf32>
    %c8_i32_18 = arith.constant 8 : i32
    %43 = tpu.dynamic_rotate %11 by %c8_i32_18 dim 0 : vector<128x64xf32>, i32 -> vector<128x64xf32>
    %cst_19 = arith.constant 0.000000e+00 : f32
    %44 = vector.shape_cast %18 : vector<128x1xi1> to vector<128x1xi1>
    %45 = vector.broadcast %44 : vector<128x1xi1> to vector<128x64xi1>
    %46 = vector.broadcast %cst_19 : f32 to vector<128x64xf32>
    %47 = arith.select %45, %43, %46 : vector<128x64xi1>, vector<128x64xf32>
    %c1 = arith.constant 1 : index
    %c0_20 = arith.constant 0 : index
    %c0_21 = arith.constant 0 : index
    %48 = vector.load %arg5[%c1, %c0_20, %c0_21] : memref<9x1x64xf32, #tpu.memory_space<vmem>>, vector<1x1x64xf32>
    %49 = vector.shape_cast %48 : vector<1x1x64xf32> to vector<1x64xf32>
    %50 = vector.broadcast %49 : vector<1x64xf32> to vector<128x64xf32>
    %51 = arith.mulf %47, %50 : vector<128x64xf32>
    %52 = arith.addf %37, %51 : vector<128x64xf32>
    %c1_22 = arith.constant 1 : index
    %c0_23 = arith.constant 0 : index
    %c0_24 = arith.constant 0 : index
    %53 = vector.load %arg6[%c1_22, %c0_23, %c0_24] : memref<9x1x64xf32, #tpu.memory_space<vmem>>, vector<1x1x64xf32>
    %54 = vector.shape_cast %53 : vector<1x1x64xf32> to vector<1x64xf32>
    %55 = vector.broadcast %54 : vector<1x64xf32> to vector<128x64xf32>
    %56 = arith.mulf %47, %55 : vector<128x64xf32>
    %57 = arith.addf %42, %56 : vector<128x64xf32>
    %c7_i32_25 = arith.constant 7 : i32
    %58 = tpu.dynamic_rotate %11 by %c7_i32_25 dim 0 : vector<128x64xf32>, i32 -> vector<128x64xf32>
    %59 = arith.andi %18, %24 : vector<128x1xi1>
    %cst_26 = arith.constant 0.000000e+00 : f32
    %60 = vector.shape_cast %59 : vector<128x1xi1> to vector<128x1xi1>
    %61 = vector.broadcast %60 : vector<128x1xi1> to vector<128x64xi1>
    %62 = vector.broadcast %cst_26 : f32 to vector<128x64xf32>
    %63 = arith.select %61, %58, %62 : vector<128x64xi1>, vector<128x64xf32>
    %c2 = arith.constant 2 : index
    %c0_27 = arith.constant 0 : index
    %c0_28 = arith.constant 0 : index
    %64 = vector.load %arg5[%c2, %c0_27, %c0_28] : memref<9x1x64xf32, #tpu.memory_space<vmem>>, vector<1x1x64xf32>
    %65 = vector.shape_cast %64 : vector<1x1x64xf32> to vector<1x64xf32>
    %66 = vector.broadcast %65 : vector<1x64xf32> to vector<128x64xf32>
    %67 = arith.mulf %63, %66 : vector<128x64xf32>
    %68 = arith.addf %52, %67 : vector<128x64xf32>
    %c2_29 = arith.constant 2 : index
    %c0_30 = arith.constant 0 : index
    %c0_31 = arith.constant 0 : index
    %69 = vector.load %arg6[%c2_29, %c0_30, %c0_31] : memref<9x1x64xf32, #tpu.memory_space<vmem>>, vector<1x1x64xf32>
    %70 = vector.shape_cast %69 : vector<1x1x64xf32> to vector<1x64xf32>
    %71 = vector.broadcast %70 : vector<1x64xf32> to vector<128x64xf32>
    %72 = arith.mulf %63, %71 : vector<128x64xf32>
    %73 = arith.addf %57, %72 : vector<128x64xf32>
    %c1_i32_32 = arith.constant 1 : i32
    %74 = tpu.dynamic_rotate %11 by %c1_i32_32 dim 0 : vector<128x64xf32>, i32 -> vector<128x64xf32>
    %cst_33 = arith.constant 0.000000e+00 : f32
    %75 = vector.shape_cast %22 : vector<128x1xi1> to vector<128x1xi1>
    %76 = vector.broadcast %75 : vector<128x1xi1> to vector<128x64xi1>
    %77 = vector.broadcast %cst_33 : f32 to vector<128x64xf32>
    %78 = arith.select %76, %74, %77 : vector<128x64xi1>, vector<128x64xf32>
    %c3 = arith.constant 3 : index
    %c0_34 = arith.constant 0 : index
    %c0_35 = arith.constant 0 : index
    %79 = vector.load %arg5[%c3, %c0_34, %c0_35] : memref<9x1x64xf32, #tpu.memory_space<vmem>>, vector<1x1x64xf32>
    %80 = vector.shape_cast %79 : vector<1x1x64xf32> to vector<1x64xf32>
    %81 = vector.broadcast %80 : vector<1x64xf32> to vector<128x64xf32>
    %82 = arith.mulf %78, %81 : vector<128x64xf32>
    %83 = arith.addf %68, %82 : vector<128x64xf32>
    %c3_36 = arith.constant 3 : index
    %c0_37 = arith.constant 0 : index
    %c0_38 = arith.constant 0 : index
    %84 = vector.load %arg6[%c3_36, %c0_37, %c0_38] : memref<9x1x64xf32, #tpu.memory_space<vmem>>, vector<1x1x64xf32>
    %85 = vector.shape_cast %84 : vector<1x1x64xf32> to vector<1x64xf32>
    %86 = vector.broadcast %85 : vector<1x64xf32> to vector<128x64xf32>
    %87 = arith.mulf %78, %86 : vector<128x64xf32>
    %88 = arith.addf %73, %87 : vector<128x64xf32>
    %c4 = arith.constant 4 : index
    %c0_39 = arith.constant 0 : index
    %c0_40 = arith.constant 0 : index
    %89 = vector.load %arg5[%c4, %c0_39, %c0_40] : memref<9x1x64xf32, #tpu.memory_space<vmem>>, vector<1x1x64xf32>
    %90 = vector.shape_cast %89 : vector<1x1x64xf32> to vector<1x64xf32>
    %91 = vector.broadcast %90 : vector<1x64xf32> to vector<128x64xf32>
    %92 = arith.mulf %11, %91 : vector<128x64xf32>
    %93 = arith.addf %83, %92 : vector<128x64xf32>
    %c4_41 = arith.constant 4 : index
    %c0_42 = arith.constant 0 : index
    %c0_43 = arith.constant 0 : index
    %94 = vector.load %arg6[%c4_41, %c0_42, %c0_43] : memref<9x1x64xf32, #tpu.memory_space<vmem>>, vector<1x1x64xf32>
    %95 = vector.shape_cast %94 : vector<1x1x64xf32> to vector<1x64xf32>
    %96 = vector.broadcast %95 : vector<1x64xf32> to vector<128x64xf32>
    %97 = arith.mulf %11, %96 : vector<128x64xf32>
    %98 = arith.addf %88, %97 : vector<128x64xf32>
    %c127_i32 = arith.constant 127 : i32
    %99 = tpu.dynamic_rotate %11 by %c127_i32 dim 0 : vector<128x64xf32>, i32 -> vector<128x64xf32>
    %cst_44 = arith.constant 0.000000e+00 : f32
    %100 = vector.shape_cast %24 : vector<128x1xi1> to vector<128x1xi1>
    %101 = vector.broadcast %100 : vector<128x1xi1> to vector<128x64xi1>
    %102 = vector.broadcast %cst_44 : f32 to vector<128x64xf32>
    %103 = arith.select %101, %99, %102 : vector<128x64xi1>, vector<128x64xf32>
    %c5 = arith.constant 5 : index
    %c0_45 = arith.constant 0 : index
    %c0_46 = arith.constant 0 : index
    %104 = vector.load %arg5[%c5, %c0_45, %c0_46] : memref<9x1x64xf32, #tpu.memory_space<vmem>>, vector<1x1x64xf32>
    %105 = vector.shape_cast %104 : vector<1x1x64xf32> to vector<1x64xf32>
    %106 = vector.broadcast %105 : vector<1x64xf32> to vector<128x64xf32>
    %107 = arith.mulf %103, %106 : vector<128x64xf32>
    %108 = arith.addf %93, %107 : vector<128x64xf32>
    %c5_47 = arith.constant 5 : index
    %c0_48 = arith.constant 0 : index
    %c0_49 = arith.constant 0 : index
    %109 = vector.load %arg6[%c5_47, %c0_48, %c0_49] : memref<9x1x64xf32, #tpu.memory_space<vmem>>, vector<1x1x64xf32>
    %110 = vector.shape_cast %109 : vector<1x1x64xf32> to vector<1x64xf32>
    %111 = vector.broadcast %110 : vector<1x64xf32> to vector<128x64xf32>
    %112 = arith.mulf %103, %111 : vector<128x64xf32>
    %113 = arith.addf %98, %112 : vector<128x64xf32>
    %c121_i32 = arith.constant 121 : i32
    %114 = tpu.dynamic_rotate %11 by %c121_i32 dim 0 : vector<128x64xf32>, i32 -> vector<128x64xf32>
    %115 = arith.andi %20, %22 : vector<128x1xi1>
    %cst_50 = arith.constant 0.000000e+00 : f32
    %116 = vector.shape_cast %115 : vector<128x1xi1> to vector<128x1xi1>
    %117 = vector.broadcast %116 : vector<128x1xi1> to vector<128x64xi1>
    %118 = vector.broadcast %cst_50 : f32 to vector<128x64xf32>
    %119 = arith.select %117, %114, %118 : vector<128x64xi1>, vector<128x64xf32>
    %c6 = arith.constant 6 : index
    %c0_51 = arith.constant 0 : index
    %c0_52 = arith.constant 0 : index
    %120 = vector.load %arg5[%c6, %c0_51, %c0_52] : memref<9x1x64xf32, #tpu.memory_space<vmem>>, vector<1x1x64xf32>
    %121 = vector.shape_cast %120 : vector<1x1x64xf32> to vector<1x64xf32>
    %122 = vector.broadcast %121 : vector<1x64xf32> to vector<128x64xf32>
    %123 = arith.mulf %119, %122 : vector<128x64xf32>
    %124 = arith.addf %108, %123 : vector<128x64xf32>
    %c6_53 = arith.constant 6 : index
    %c0_54 = arith.constant 0 : index
    %c0_55 = arith.constant 0 : index
    %125 = vector.load %arg6[%c6_53, %c0_54, %c0_55] : memref<9x1x64xf32, #tpu.memory_space<vmem>>, vector<1x1x64xf32>
    %126 = vector.shape_cast %125 : vector<1x1x64xf32> to vector<1x64xf32>
    %127 = vector.broadcast %126 : vector<1x64xf32> to vector<128x64xf32>
    %128 = arith.mulf %119, %127 : vector<128x64xf32>
    %129 = arith.addf %113, %128 : vector<128x64xf32>
    %c120_i32 = arith.constant 120 : i32
    %130 = tpu.dynamic_rotate %11 by %c120_i32 dim 0 : vector<128x64xf32>, i32 -> vector<128x64xf32>
    %cst_56 = arith.constant 0.000000e+00 : f32
    %131 = vector.shape_cast %20 : vector<128x1xi1> to vector<128x1xi1>
    %132 = vector.broadcast %131 : vector<128x1xi1> to vector<128x64xi1>
    %133 = vector.broadcast %cst_56 : f32 to vector<128x64xf32>
    %134 = arith.select %132, %130, %133 : vector<128x64xi1>, vector<128x64xf32>
    %c7 = arith.constant 7 : index
    %c0_57 = arith.constant 0 : index
    %c0_58 = arith.constant 0 : index
    %135 = vector.load %arg5[%c7, %c0_57, %c0_58] : memref<9x1x64xf32, #tpu.memory_space<vmem>>, vector<1x1x64xf32>
    %136 = vector.shape_cast %135 : vector<1x1x64xf32> to vector<1x64xf32>
    %137 = vector.broadcast %136 : vector<1x64xf32> to vector<128x64xf32>
    %138 = arith.mulf %134, %137 : vector<128x64xf32>
    %139 = arith.addf %124, %138 : vector<128x64xf32>
    %c7_59 = arith.constant 7 : index
    %c0_60 = arith.constant 0 : index
    %c0_61 = arith.constant 0 : index
    %140 = vector.load %arg6[%c7_59, %c0_60, %c0_61] : memref<9x1x64xf32, #tpu.memory_space<vmem>>, vector<1x1x64xf32>
    %141 = vector.shape_cast %140 : vector<1x1x64xf32> to vector<1x64xf32>
    %142 = vector.broadcast %141 : vector<1x64xf32> to vector<128x64xf32>
    %143 = arith.mulf %134, %142 : vector<128x64xf32>
    %144 = arith.addf %129, %143 : vector<128x64xf32>
    %c119_i32 = arith.constant 119 : i32
    %145 = tpu.dynamic_rotate %11 by %c119_i32 dim 0 : vector<128x64xf32>, i32 -> vector<128x64xf32>
    %146 = arith.andi %20, %24 : vector<128x1xi1>
    %cst_62 = arith.constant 0.000000e+00 : f32
    %147 = vector.shape_cast %146 : vector<128x1xi1> to vector<128x1xi1>
    %148 = vector.broadcast %147 : vector<128x1xi1> to vector<128x64xi1>
    %149 = vector.broadcast %cst_62 : f32 to vector<128x64xf32>
    %150 = arith.select %148, %145, %149 : vector<128x64xi1>, vector<128x64xf32>
    %c8 = arith.constant 8 : index
    %c0_63 = arith.constant 0 : index
    %c0_64 = arith.constant 0 : index
    %151 = vector.load %arg5[%c8, %c0_63, %c0_64] : memref<9x1x64xf32, #tpu.memory_space<vmem>>, vector<1x1x64xf32>
    %152 = vector.shape_cast %151 : vector<1x1x64xf32> to vector<1x64xf32>
    %153 = vector.broadcast %152 : vector<1x64xf32> to vector<128x64xf32>
    %154 = arith.mulf %150, %153 : vector<128x64xf32>
    %155 = arith.addf %139, %154 : vector<128x64xf32>
    %c8_65 = arith.constant 8 : index
    %c0_66 = arith.constant 0 : index
    %c0_67 = arith.constant 0 : index
    %156 = vector.load %arg6[%c8_65, %c0_66, %c0_67] : memref<9x1x64xf32, #tpu.memory_space<vmem>>, vector<1x1x64xf32>
    %157 = vector.shape_cast %156 : vector<1x1x64xf32> to vector<1x64xf32>
    %158 = vector.broadcast %157 : vector<1x64xf32> to vector<128x64xf32>
    %159 = arith.mulf %150, %158 : vector<128x64xf32>
    %160 = arith.addf %144, %159 : vector<128x64xf32>
    %c0_68 = arith.constant 0 : index
    %c0_69 = arith.constant 0 : index
    %161 = vector.load %arg7[%c0_68, %c0_69] : memref<64x64xf32, #tpu.memory_space<vmem>>, vector<64x64xf32>
    %cst_70 = arith.constant dense<0.000000e+00> : vector<128x64xf32>
    %162 = tpu.matmul %160, %161, %cst_70 {dimension_numbers = #tpu.dot_dimension_numbers<[1], [0], [0], [1], [0, 0, 1, 1], [], []>} : vector<128x64xf32>, vector<64x64xf32>, vector<128x64xf32> -> vector<128x64xf32>
    %163 = arith.addf %155, %162 : vector<128x64xf32>
    %c0_71 = arith.constant 0 : index
    %c0_72 = arith.constant 0 : index
    %164 = vector.load %arg8[%c0_71, %c0_72] : memref<1x64xf32, #tpu.memory_space<vmem>>, vector<1x64xf32>
    %165 = vector.broadcast %164 : vector<1x64xf32> to vector<128x64xf32>
    %166 = arith.mulf %163, %165 : vector<128x64xf32>
    %c0_73 = arith.constant 0 : index
    %c0_74 = arith.constant 0 : index
    %167 = vector.load %arg9[%c0_73, %c0_74] : memref<1x64xf32, #tpu.memory_space<vmem>>, vector<1x64xf32>
    %168 = vector.broadcast %167 : vector<1x64xf32> to vector<128x64xf32>
    %169 = arith.addf %166, %168 : vector<128x64xf32>
    %cst_75 = arith.constant 0.000000e+00 : f32
    %170 = vector.broadcast %cst_75 : f32 to vector<128x64xf32>
    %171 = arith.maximumf %169, %170 : vector<128x64xf32>
    %c0_76 = arith.constant 0 : index
    %c0_77 = arith.constant 0 : index
    %172 = vector.load %arg10[%c0_76, %c0_77] : memref<64x64xf32, #tpu.memory_space<vmem>>, vector<64x64xf32>
    %cst_78 = arith.constant dense<0.000000e+00> : vector<128x64xf32>
    %173 = tpu.matmul %171, %172, %cst_78 {dimension_numbers = #tpu.dot_dimension_numbers<[1], [0], [0], [1], [0, 0, 1, 1], [], []>} : vector<128x64xf32>, vector<64x64xf32>, vector<128x64xf32> -> vector<128x64xf32>
    %c0_79 = arith.constant 0 : index
    %c0_80 = arith.constant 0 : index
    %174 = vector.load %arg11[%c0_79, %c0_80] : memref<1x64xf32, #tpu.memory_space<vmem>>, vector<1x64xf32>
    %175 = vector.broadcast %174 : vector<1x64xf32> to vector<128x64xf32>
    %176 = arith.mulf %173, %175 : vector<128x64xf32>
    %c0_81 = arith.constant 0 : index
    %c0_82 = arith.constant 0 : index
    %177 = vector.load %arg12[%c0_81, %c0_82] : memref<1x64xf32, #tpu.memory_space<vmem>>, vector<1x64xf32>
    %178 = vector.broadcast %177 : vector<1x64xf32> to vector<128x64xf32>
    %179 = arith.addf %176, %178 : vector<128x64xf32>
    %c0_83 = arith.constant 0 : index
    %c0_84 = arith.constant 0 : index
    %180 = vector.load %arg17[%c0_83, %c0_84] : memref<2x128xf32, #tpu.memory_space<vmem>>, vector<2x128xf32>
    %cst_85 = arith.constant dense<0.000000e+00> : vector<2x64xf32>
    %181 = tpu.matmul %180, %179, %cst_85 {dimension_numbers = #tpu.dot_dimension_numbers<[1], [0], [0], [1], [0, 0, 1, 1], [], []>} : vector<2x128xf32>, vector<128x64xf32>, vector<2x64xf32> -> vector<2x64xf32>
    %c0_86 = arith.constant 0 : index
    %c0_87 = arith.constant 0 : index
    %182 = vector.load %arg13[%c0_86, %c0_87] : memref<64x4xf32, #tpu.memory_space<vmem>>, vector<64x4xf32>
    %cst_88 = arith.constant dense<0.000000e+00> : vector<2x4xf32>
    %183 = tpu.matmul %181, %182, %cst_88 {dimension_numbers = #tpu.dot_dimension_numbers<[1], [0], [0], [1], [0, 0, 1, 1], [], []>} : vector<2x64xf32>, vector<64x4xf32>, vector<2x4xf32> -> vector<2x4xf32>
    %c0_89 = arith.constant 0 : index
    %c0_90 = arith.constant 0 : index
    %184 = vector.load %arg14[%c0_89, %c0_90] : memref<1x4xf32, #tpu.memory_space<vmem>>, vector<1x4xf32>
    %185 = vector.broadcast %184 : vector<1x4xf32> to vector<2x4xf32>
    %186 = arith.addf %183, %185 : vector<2x4xf32>
    %cst_91 = arith.constant 0.000000e+00 : f32
    %187 = vector.broadcast %cst_91 : f32 to vector<2x4xf32>
    %188 = arith.maximumf %186, %187 : vector<2x4xf32>
    %c0_92 = arith.constant 0 : index
    %c0_93 = arith.constant 0 : index
    %189 = vector.load %arg15[%c0_92, %c0_93] : memref<4x64xf32, #tpu.memory_space<vmem>>, vector<4x64xf32>
    %cst_94 = arith.constant dense<0.000000e+00> : vector<2x64xf32>
    %190 = tpu.matmul %188, %189, %cst_94 {dimension_numbers = #tpu.dot_dimension_numbers<[1], [0], [0], [1], [0, 0, 1, 1], [], []>} : vector<2x4xf32>, vector<4x64xf32>, vector<2x64xf32> -> vector<2x64xf32>
    %c0_95 = arith.constant 0 : index
    %c0_96 = arith.constant 0 : index
    %191 = vector.load %arg16[%c0_95, %c0_96] : memref<1x64xf32, #tpu.memory_space<vmem>>, vector<1x64xf32>
    %192 = vector.broadcast %191 : vector<1x64xf32> to vector<2x64xf32>
    %193 = arith.addf %190, %192 : vector<2x64xf32>
    %194 = arith.negf %193 : vector<2x64xf32>
    %195 = math.exp %194 : vector<2x64xf32>
    %cst_97 = arith.constant 1.000000e+00 : f32
    %196 = vector.broadcast %cst_97 : f32 to vector<2x64xf32>
    %197 = arith.addf %196, %195 : vector<2x64xf32>
    %198 = arith.divf %196, %197 : vector<2x64xf32>
    %c0_98 = arith.constant 0 : index
    %c0_99 = arith.constant 0 : index
    %199 = vector.load %arg18[%c0_98, %c0_99] : memref<128x2xf32, #tpu.memory_space<vmem>>, vector<128x2xf32>
    %cst_100 = arith.constant dense<0.000000e+00> : vector<128x64xf32>
    %200 = tpu.matmul %199, %198, %cst_100 {dimension_numbers = #tpu.dot_dimension_numbers<[1], [0], [0], [1], [0, 0, 1, 1], [], []>} : vector<128x2xf32>, vector<2x64xf32>, vector<128x64xf32> -> vector<128x64xf32>
    %201 = arith.mulf %179, %200 : vector<128x64xf32>
    %202 = arith.addf %201, %1 : vector<128x64xf32>
    %cst_101 = arith.constant 0.000000e+00 : f32
    %203 = vector.broadcast %cst_101 : f32 to vector<128x64xf32>
    %204 = arith.maximumf %202, %203 : vector<128x64xf32>
    %205 = vector.shape_cast %204 : vector<128x64xf32> to vector<2x64x64xf32>
    %c0_102 = arith.constant 0 : index
    %c0_103 = arith.constant 0 : index
    %c0_104 = arith.constant 0 : index
    %206 = vector.load %arg19[%c0_102, %c0_103, %c0_104] : memref<2x64x64xf32, #tpu.memory_space<vmem>>, vector<2x64x64xf32>
    tpu.vector_store %arg19[%c0_102, %c0_103, %c0_104], %205 {strides = array<i32>} : memref<2x64x64xf32, #tpu.memory_space<vmem>>, vector<2x64x64xf32>,
    return
  }
  func.func @transform_0(%arg0: i32) -> (i32, i32, i32) {
    %c0_i32 = arith.constant 0 : i32
    %c0_i32_0 = arith.constant 0 : i32
    %c0_i32_1 = arith.constant 0 : i32
    return %arg0, %c0_i32, %c0_i32_0 : i32, i32, i32
  }
  func.func @transform_1(%arg0: i32) -> (i32, i32) {
    %c0_i32 = arith.constant 0 : i32
    %c0_i32_0 = arith.constant 0 : i32
    %c0_i32_1 = arith.constant 0 : i32
    return %c0_i32, %c0_i32_0 : i32, i32
  }
  func.func @transform_2(%arg0: i32) -> (i32, i32) {
    %c0_i32 = arith.constant 0 : i32
    %c0_i32_0 = arith.constant 0 : i32
    %c0_i32_1 = arith.constant 0 : i32
    return %c0_i32, %c0_i32_0 : i32, i32
  }
  func.func @transform_3(%arg0: i32) -> (i32, i32) {
    %c0_i32 = arith.constant 0 : i32
    %c0_i32_0 = arith.constant 0 : i32
    %c0_i32_1 = arith.constant 0 : i32
    return %c0_i32, %c0_i32_0 : i32, i32
  }
  func.func @transform_4(%arg0: i32) -> (i32, i32, i32) {
    %c0_i32 = arith.constant 0 : i32
    %c0_i32_0 = arith.constant 0 : i32
    %c0_i32_1 = arith.constant 0 : i32
    %c0_i32_2 = arith.constant 0 : i32
    return %c0_i32, %c0_i32_0, %c0_i32_1 : i32, i32, i32
  }
  func.func @transform_5(%arg0: i32) -> (i32, i32, i32) {
    %c0_i32 = arith.constant 0 : i32
    %c0_i32_0 = arith.constant 0 : i32
    %c0_i32_1 = arith.constant 0 : i32
    %c0_i32_2 = arith.constant 0 : i32
    return %c0_i32, %c0_i32_0, %c0_i32_1 : i32, i32, i32
  }
  func.func @transform_6(%arg0: i32) -> (i32, i32) {
    %c0_i32 = arith.constant 0 : i32
    %c0_i32_0 = arith.constant 0 : i32
    %c0_i32_1 = arith.constant 0 : i32
    return %c0_i32, %c0_i32_0 : i32, i32
  }
  func.func @transform_7(%arg0: i32) -> (i32, i32) {
    %c0_i32 = arith.constant 0 : i32
    %c0_i32_0 = arith.constant 0 : i32
    %c0_i32_1 = arith.constant 0 : i32
    return %c0_i32, %c0_i32_0 : i32, i32
  }
  func.func @transform_8(%arg0: i32) -> (i32, i32) {
    %c0_i32 = arith.constant 0 : i32
    %c0_i32_0 = arith.constant 0 : i32
    %c0_i32_1 = arith.constant 0 : i32
    return %c0_i32, %c0_i32_0 : i32, i32
  }
  func.func @transform_9(%arg0: i32) -> (i32, i32) {
    %c0_i32 = arith.constant 0 : i32
    %c0_i32_0 = arith.constant 0 : i32
    %c0_i32_1 = arith.constant 0 : i32
    return %c0_i32, %c0_i32_0 : i32, i32
  }
  func.func @transform_10(%arg0: i32) -> (i32, i32) {
    %c0_i32 = arith.constant 0 : i32
    %c0_i32_0 = arith.constant 0 : i32
    %c0_i32_1 = arith.constant 0 : i32
    return %c0_i32, %c0_i32_0 : i32, i32
  }
  func.func @transform_11(%arg0: i32) -> (i32, i32) {
    %c0_i32 = arith.constant 0 : i32
    %c0_i32_0 = arith.constant 0 : i32
    %c0_i32_1 = arith.constant 0 : i32
    return %c0_i32, %c0_i32_0 : i32, i32
  }
  func.func @transform_12(%arg0: i32) -> (i32, i32) {
    %c0_i32 = arith.constant 0 : i32
    %c0_i32_0 = arith.constant 0 : i32
    %c0_i32_1 = arith.constant 0 : i32
    return %c0_i32, %c0_i32_0 : i32, i32
  }
  func.func @transform_13(%arg0: i32) -> (i32, i32) {
    %c0_i32 = arith.constant 0 : i32
    %c0_i32_0 = arith.constant 0 : i32
    %c0_i32_1 = arith.constant 0 : i32
    return %c0_i32, %c0_i32_0 : i32, i32
  }
  func.func @transform_14(%arg0: i32) -> (i32, i32) {
    %c0_i32 = arith.constant 0 : i32
    %c0_i32_0 = arith.constant 0 : i32
    %c0_i32_1 = arith.constant 0 : i32
    return %c0_i32, %c0_i32_0 : i32, i32
  }
  func.func @transform_15(%arg0: i32) -> (i32, i32) {
    %c0_i32 = arith.constant 0 : i32
    %c0_i32_0 = arith.constant 0 : i32
    %c0_i32_1 = arith.constant 0 : i32
    return %c0_i32, %c0_i32_0 : i32, i32
  }
  func.func @transform_16(%arg0: i32) -> (i32, i32) {
    %c0_i32 = arith.constant 0 : i32
    %c0_i32_0 = arith.constant 0 : i32
    %c0_i32_1 = arith.constant 0 : i32
    return %c0_i32, %c0_i32_0 : i32, i32
  }
  func.func @transform_17(%arg0: i32) -> (i32, i32) {
    %c0_i32 = arith.constant 0 : i32
    %c0_i32_0 = arith.constant 0 : i32
    %c0_i32_1 = arith.constant 0 : i32
    return %c0_i32, %c0_i32_0 : i32, i32
  }
  func.func @transform_18(%arg0: i32) -> (i32, i32, i32) {
    %c0_i32 = arith.constant 0 : i32
    %c0_i32_0 = arith.constant 0 : i32
    %c0_i32_1 = arith.constant 0 : i32
    return %arg0, %c0_i32, %c0_i32_0 : i32, i32, i32
  }
}

</mosaic_0001>

<llo_original>
// kernel: tpu_custom_call.1
$region0: #{tpu_custom_call.1}
  #allocation0 [shape = 'u32[]', space=smem, size = 0x4, offset = 0x4, fixed_abs, tag = 'smem constant byte address 0x4 - core index']
  #allocation1 [shape = 'u32[144,128]{1,0:T(1,128)}', space=vmem, size = 0x12000, scoped, tag = 'internal scratch']
  %s0 = inlined_call_operand.vmem [shape: f32[2,64,64], index: 0, kind: input, shape index: {}]
  %s1 = inlined_call_operand.vmem [shape: f32[64,64], index: 1, kind: input, shape index: {}]
  %s2 = inlined_call_operand.hbm [shape: f32[1,64], index: 2, kind: input, shape index: {}]
  %s3 = inlined_call_operand.hbm [shape: f32[1,64], index: 3, kind: input, shape index: {}]
  %s4 = inlined_call_operand.vmem [shape: f32[9,1,64], index: 4, kind: input, shape index: {}]
  %s5 = inlined_call_operand.vmem [shape: f32[9,1,64], index: 5, kind: input, shape index: {}]
  %s6 = inlined_call_operand.hbm [shape: f32[64,64], index: 6, kind: input, shape index: {}]
  %s7 = inlined_call_operand.vmem [shape: f32[1,64], index: 7, kind: input, shape index: {}]
  %s8 = inlined_call_operand.vmem [shape: f32[1,64], index: 8, kind: input, shape index: {}]
  %s9 = inlined_call_operand.hbm [shape: f32[64,64], index: 9, kind: input, shape index: {}]
  %s10 = inlined_call_operand.vmem [shape: f32[1,64], index: 10, kind: input, shape index: {}]
  %s11 = inlined_call_operand.vmem [shape: f32[1,64], index: 11, kind: input, shape index: {}]
  %s12 = inlined_call_operand.vmem [shape: f32[64,4], index: 12, kind: input, shape index: {}]
  %s13 = inlined_call_operand.vmem [shape: f32[1,4], index: 13, kind: input, shape index: {}]
  %s14 = inlined_call_operand.vmem [shape: f32[4,64], index: 14, kind: input, shape index: {}]
  %s15 = inlined_call_operand.vmem [shape: f32[1,64], index: 15, kind: input, shape index: {}]
  %s16 = inlined_call_operand.vmem [shape: f32[2,128], index: 16, kind: input, shape index: {}]
  %s17 = inlined_call_operand.vmem [shape: f32[128,2], index: 17, kind: input, shape index: {}]
  %s18 = inlined_call_operand.hbm [shape: f32[2,64,64], index: 18, kind: output, shape index: {}]
  %s19 = sld [smem:[#allocation0]]
  $region98: #{tpu_custom_call.1} parent=0
    _
  %s21 = ssub.s32 1, %s19
  %s22 = scalar_select 0, %s21, %s19
  $region1: #{tpu_custom_call.1} parent=0
    #allocation2 [shape = 'u8[512]{0}', space=vmem, size = 0x400, scoped, tag = 'input window, operand 2, single buffered']
    #allocation3 [shape = 's32[1]{0}', space=sflag, size = 0x4, scoped, tag = 'scoped memory for tpu_custom_call.1']
    #allocation4 [shape = 's32[1]{0}', space=sflag, size = 0x4, scoped, tag = 'scoped memory for tpu_custom_call.1']
    #allocation5 [shape = 'u8[512]{0}', space=vmem, size = 0x400, scoped, tag = 'input window, operand 3, single buffered']
    #allocation6 [shape = 's32[1]{0}', space=sflag, size = 0x4, scoped, tag = 'scoped memory for tpu_custom_call.1']
    #allocation7 [shape = 'u8[32768]{0}', space=vmem, size = 0x8000, scoped, tag = 'input window, operand 6, single buffered']
    #allocation8 [shape = 'u8[32768]{0}', space=vmem, size = 0x8000, scoped, tag = 'input window, operand 9, single buffered']
    #allocation9 [shape = 's32[1]{0}', space=sflag, size = 0x4, scoped, tag = 'scoped memory for tpu_custom_call.1']
    #allocation10 [shape = 'u8[65536]{0}', space=vmem, size = 0x10000, scoped, tag = 'output window, operand 0, single buffered']
    %23 = vsyncpa [#allocation3], 0
    %24 = vsyncpa [#allocation6], 0
    %25 = vsyncpa [#allocation9], 0
    %26 = vsyncpa [#allocation4], 0
    // Predicated region
    $region2: #{tpu_custom_call.1} parent=1 // pred_check
      _
    $region3: #{tpu_custom_call.1} parent=1 // pred_check_branch
      %28 = sbr.rel (0) target = $region5
    $region4: #{tpu_custom_call.1} parent=1 // pred_region
      _
    $region5: #{tpu_custom_call.1} parent=1 // pred_fallthru
      _
    // Predicated region
    $region6: #{tpu_custom_call.1} parent=1 // pred_check
      _
    $region7: #{tpu_custom_call.1} parent=1 // pred_check_branch
      %30 = sbr.rel (0) target = $region9
    $region8: #{tpu_custom_call.1} parent=1 // pred_region
      _
    $region9: #{tpu_custom_call.1} parent=1 // pred_fallthru
      _
    // Predicated region
    $region10: #{tpu_custom_call.1} parent=1 // pred_check
      _
    $region11: #{tpu_custom_call.1} parent=1 // pred_check_branch
      %32 = sbr.rel (0) target = $region13
    $region12: #{tpu_custom_call.1} parent=1 // pred_region
      %s34 = ssub.s32 16, 16
      %35 = vsyncadd [#allocation3], %s34
      %s37 = sshll.u32 [#allocation2], 4
      %s38 = int_to_ptr.vmem [resolvable:$true] %s37
      %40 = dma.hbm_to_vmem [thread:$0]  %s2, 16, %s38, [#allocation3]
    $region13: #{tpu_custom_call.1} parent=1 // pred_fallthru
      _
    // Predicated region
    $region14: #{tpu_custom_call.1} parent=1 // pred_check
      _
    $region15: #{tpu_custom_call.1} parent=1 // pred_check_branch
      %42 = sbr.rel (0) target = $region17
    $region16: #{tpu_custom_call.1} parent=1 // pred_region
      %s44 = ssub.s32 16, 16
      %45 = vsyncadd [#allocation6], %s44
      %s47 = sshll.u32 [#allocation5], 4
      %s48 = int_to_ptr.vmem [resolvable:$true] %s47
      %50 = dma.hbm_to_vmem [thread:$0]  %s3, 16, %s48, [#allocation6]
    $region17: #{tpu_custom_call.1} parent=1 // pred_fallthru
      _
    // Predicated region
    $region18: #{tpu_custom_call.1} parent=1 // pred_check
      _
    $region19: #{tpu_custom_call.1} parent=1 // pred_check_branch
      %52 = sbr.rel (0) target = $region21
    $region20: #{tpu_custom_call.1} parent=1 // pred_region
      _
    $region21: #{tpu_custom_call.1} parent=1 // pred_fallthru
      _
    // Predicated region
    $region22: #{tpu_custom_call.1} parent=1 // pred_check
      _
    $region23: #{tpu_custom_call.1} parent=1 // pred_check_branch
      %54 = sbr.rel (0) target = $region25
    $region24: #{tpu_custom_call.1} parent=1 // pred_region
      _
    $region25: #{tpu_custom_call.1} parent=1 // pred_fallthru
      _
    // Predicated region
    $region26: #{tpu_custom_call.1} parent=1 // pred_check
      _
    $region27: #{tpu_custom_call.1} parent=1 // pred_check_branch
      %56 = sbr.rel (0) target = $region29
    $region28: #{tpu_custom_call.1} parent=1 // pred_region
      %s58 = ssub.s32 1024, 1024
      %59 = vsyncadd [#allocation6], %s58
      %s60 = sshll.u32 [#allocation7], 4
      %s61 = int_to_ptr.vmem [resolvable:$true] %s60
      %66 = dma.hbm_to_vmem [thread:$0]  %s6, 1024, %s61, [#allocation6], 128, 128, 8
    $region29: #{tpu_custom_call.1} parent=1 // pred_fallthru
      _
    // Predicated region
    $region30: #{tpu_custom_call.1} parent=1 // pred_check
      _
    $region31: #{tpu_custom_call.1} parent=1 // pred_check_branch
      %68 = sbr.rel (0) target = $region33
    $region32: #{tpu_custom_call.1} parent=1 // pred_region
      _
    $region33: #{tpu_custom_call.1} parent=1 // pred_fallthru
      _
    // Predicated region
    $region34: #{tpu_custom_call.1} parent=1 // pred_check
      _
    $region35: #{tpu_custom_call.1} parent=1 // pred_check_branch
      %70 = sbr.rel (0) target = $region37
    $region36: #{tpu_custom_call.1} parent=1 // pred_region
      _
    $region37: #{tpu_custom_call.1} parent=1 // pred_fallthru
      _
    // Predicated region
    $region38: #{tpu_custom_call.1} parent=1 // pred_check
      _
    $region39: #{tpu_custom_call.1} parent=1 // pred_check_branch
      %72 = sbr.rel (0) target = $region41
    $region40: #{tpu_custom_call.1} parent=1 // pred_region
      %s74 = ssub.s32 1024, 1024
      %75 = vsyncadd [#allocation9], %s74
      %s76 = sshll.u32 [#allocation8], 4
      %s77 = int_to_ptr.vmem [resolvable:$true] %s76
      %82 = dma.hbm_to_vmem [thread:$0]  %s9, 1024, %s77, [#allocation9], 128, 128, 8
    $region41: #{tpu_custom_call.1} parent=1 // pred_fallthru
      _
    // Predicated region
    $region42: #{tpu_custom_call.1} parent=1 // pred_check
      _
    $region43: #{tpu_custom_call.1} parent=1 // pred_check_branch
      %84 = sbr.rel (0) target = $region45
    $region44: #{tpu_custom_call.1} parent=1 // pred_region
      _
    $region45: #{tpu_custom_call.1} parent=1 // pred_fallthru
      _
    // Predicated region
    $region46: #{tpu_custom_call.1} parent=1 // pred_check
      _
    $region47: #{tpu_custom_call.1} parent=1 // pred_check_branch
      %86 = sbr.rel (0) target = $region49
    $region48: #{tpu_custom_call.1} parent=1 // pred_region
      _
    $region49: #{tpu_custom_call.1} parent=1 // pred_fallthru
      _
    // Predicated region
    $region50: #{tpu_custom_call.1} parent=1 // pred_check
      _
    $region51: #{tpu_custom_call.1} parent=1 // pred_check_branch
      %88 = sbr.rel (0) target = $region53
    $region52: #{tpu_custom_call.1} parent=1 // pred_region
      _
    $region53: #{tpu_custom_call.1} parent=1 // pred_fallthru
      _
    // Predicated region
    $region54: #{tpu_custom_call.1} parent=1 // pred_check
      _
    $region55: #{tpu_custom_call.1} parent=1 // pred_check_branch
      %90 = sbr.rel (0) target = $region57
    $region56: #{tpu_custom_call.1} parent=1 // pred_region
      _
    $region57: #{tpu_custom_call.1} parent=1 // pred_fallthru
      _
    // Predicated region
    $region58: #{tpu_custom_call.1} parent=1 // pred_check
      _
    $region59: #{tpu_custom_call.1} parent=1 // pred_check_branch
      %92 = sbr.rel (0) target = $region61
    $region60: #{tpu_custom_call.1} parent=1 // pred_region
      _
    $region61: #{tpu_custom_call.1} parent=1 // pred_fallthru
      _
    // Predicated region
    $region62: #{tpu_custom_call.1} parent=1 // pred_check
      _
    $region63: #{tpu_custom_call.1} parent=1 // pred_check_branch
      %94 = sbr.rel (0) target = $region65
    $region64: #{tpu_custom_call.1} parent=1 // pred_region
      _
    $region65: #{tpu_custom_call.1} parent=1 // pred_fallthru
      _
    // Predicated region
    $region66: #{tpu_custom_call.1} parent=1 // pred_check
      _
    $region67: #{tpu_custom_call.1} parent=1 // pred_check_branch
      %96 = sbr.rel (0) target = $region69
    $region68: #{tpu_custom_call.1} parent=1 // pred_region
      _
    $region69: #{tpu_custom_call.1} parent=1 // pred_fallthru
      _
    // Predicated region
    $region70: #{tpu_custom_call.1} parent=1 // pred_check
      _
    $region71: #{tpu_custom_call.1} parent=1 // pred_check_branch
      %98 = sbr.rel (0) target = $region73
    $region72: #{tpu_custom_call.1} parent=1 // pred_region
      _
    $region73: #{tpu_custom_call.1} parent=1 // pred_fallthru
      _
    // Predicated region
    $region74: #{tpu_custom_call.1} parent=1 // pred_check
      _
    $region75: #{tpu_custom_call.1} parent=1 // pred_check_branch
      %100 = sbr.rel (0) target = $region77
    $region76: #{tpu_custom_call.1} parent=1 // pred_region
      %101 = dma.done [#allocation3], 16
    $region77: #{tpu_custom_call.1} parent=1 // pred_fallthru
      _
    // Predicated region
    $region78: #{tpu_custom_call.1} parent=1 // pred_check
      _
    $region79: #{tpu_custom_call.1} parent=1 // pred_check_branch
      %103 = sbr.rel (0) target = $region81
    $region80: #{tpu_custom_call.1} parent=1 // pred_region
      %104 = dma.done [#allocation6], 16
    $region81: #{tpu_custom_call.1} parent=1 // pred_fallthru
      _
    // Predicated region
    $region82: #{tpu_custom_call.1} parent=1 // pred_check
      _
    $region83: #{tpu_custom_call.1} parent=1 // pred_check_branch
      %106 = sbr.rel (0) target = $region85
    $region84: #{tpu_custom_call.1} parent=1 // pred_region
      %107 = dma.done [#allocation6], 1024
    $region85: #{tpu_custom_call.1} parent=1 // pred_fallthru
      _
    // Predicated region
    $region86: #{tpu_custom_call.1} parent=1 // pred_check
      _
    $region87: #{tpu_custom_call.1} parent=1 // pred_check_branch
      %109 = sbr.rel (0) target = $region89
    $region88: #{tpu_custom_call.1} parent=1 // pred_region
      %110 = dma.done [#allocation9], 1024
    $region89: #{tpu_custom_call.1} parent=1 // pred_fallthru
      _
    %v111 = vld [vmem:[%s0] sm:$0xff]
    %v112 = vld [vmem:[%s0 + $0x8] sm:$0xff]
    %v113 = vld [vmem:[%s0 + $0x10] sm:$0xff]
    %v114 = vld [vmem:[%s0 + $0x18] sm:$0xff]
    %v115 = vld [vmem:[%s0 + $0x20] sm:$0xff]
    %v116 = vld [vmem:[%s0 + $0x28] sm:$0xff]
    %v117 = vld [vmem:[%s0 + $0x30] sm:$0xff]
    %v118 = vld [vmem:[%s0 + $0x38] sm:$0xff]
    %v119 = vld [vmem:[%s0 + $0x40] sm:$0xff]
    %v120 = vld [vmem:[%s0 + $0x48] sm:$0xff]
    %v121 = vld [vmem:[%s0 + $0x50] sm:$0xff]
    %v122 = vld [vmem:[%s0 + $0x58] sm:$0xff]
    %v123 = vld [vmem:[%s0 + $0x60] sm:$0xff]
    %v124 = vld [vmem:[%s0 + $0x68] sm:$0xff]
    %v125 = vld [vmem:[%s0 + $0x70] sm:$0xff]
    %v126 = vld [vmem:[%s0 + $0x78] sm:$0xff]
    %v127 = vld [vmem:[%s1] sm:$0xff]
    %v128 = vld [vmem:[%s1 + $0x8] sm:$0xff]
    %v129 = vld [vmem:[%s1 + $0x10] sm:$0xff]
    %v130 = vld [vmem:[%s1 + $0x18] sm:$0xff]
    %v131 = vld [vmem:[%s1 + $0x20] sm:$0xff]
    %v132 = vld [vmem:[%s1 + $0x28] sm:$0xff]
    %v133 = vld [vmem:[%s1 + $0x30] sm:$0xff]
    %v134 = vld [vmem:[%s1 + $0x38] sm:$0xff]
    %vm135 = vcmask 523264
    %v137 = vsel %vm135, %v111, 0
    %v140 = vsel %vm135, %v112, 0
    %v143 = vsel %vm135, %v113, 0
    %v146 = vsel %vm135, %v114, 0
    %v149 = vsel %vm135, %v115, 0
    %v152 = vsel %vm135, %v116, 0
    %v155 = vsel %vm135, %v117, 0
    %v158 = vsel %vm135, %v118, 0
    %v161 = vsel %vm135, %v119, 0
    %v164 = vsel %vm135, %v120, 0
    %v167 = vsel %vm135, %v121, 0
    %v170 = vsel %vm135, %v122, 0
    %v173 = vsel %vm135, %v123, 0
    %v176 = vsel %vm135, %v124, 0
    %v179 = vsel %vm135, %v125, 0
    %v182 = vsel %vm135, %v126, 0
    %184 = vmatprep.subr.mxu0 0.0
    %185 = vmatpush1.msra.mxu0 %v127
    %186 = vmatprep.subr.mxu0 0.0
    %187 = vmatpush1.msra.mxu0 %v128
    %188 = vmatprep.subr.mxu0 0.0
    %189 = vmatpush1.msra.mxu0 %v129
    %190 = vmatprep.subr.mxu0 0.0
    %191 = vmatpush1.msra.mxu0 %v130
    %192 = vmatprep.subr.mxu0 0.0
    %193 = vmatpush1.msra.mxu0 %v131
    %194 = vmatprep.subr.mxu0 0.0
    %195 = vmatpush1.msra.mxu0 %v132
    %196 = vmatprep.subr.mxu0 0.0
    %197 = vmatpush1.msra.mxu0 %v133
    %198 = vmatprep.subr.mxu0 0.0
    %199 = vmatpush1.msra.mxu0 %v134
    %200 = vmatprep.subr.mxu0 0.0
    %201 = vmatpush1.msra.mxu0 0.0
    %202 = vmatprep.subr.mxu0 0.0
    %203 = vmatpush1.msra.mxu0 0.0
    %204 = vmatprep.subr.mxu0 0.0
    %205 = vmatpush1.msra.mxu0 0.0
    %206 = vmatprep.subr.mxu0 0.0
    %207 = vmatpush1.msra.mxu0 0.0
    %208 = vmatprep.subr.mxu0 0.0
    %209 = vmatpush1.msra.mxu0 0.0
    %210 = vmatprep.subr.mxu0 0.0
    %211 = vmatpush1.msra.mxu0 0.0
    %212 = vmatprep.subr.mxu0 0.0
    %213 = vmatpush1.msra.mxu0 0.0
    %214 = vmatprep.subr.mxu0 0.0
    %215 = vmatpush1.msra.mxu0 0.0
    %216 = vmatprep.subr.mxu0 0.0
    %217 = vmatpush1.msra.mxu0 0.0
    %218 = vmatprep.subr.mxu0 0.0
    %219 = vmatpush1.msra.mxu0 0.0
    %220 = vmatprep.subr.mxu0 0.0
    %221 = vmatpush1.msra.mxu0 0.0
    %222 = vmatprep.subr.mxu0 0.0
    %223 = vmatpush1.msra.mxu0 0.0
    %224 = vmatprep.subr.mxu0 0.0
    %225 = vmatpush1.msra.mxu0 0.0
    %226 = vmatprep.subr.mxu0 0.0
    %227 = vmatpush1.msra.mxu0 0.0
    %228 = vmatprep.subr.mxu0 0.0
    %229 = vmatpush1.msra.mxu0 0.0
    %230 = vmatprep.subr.mxu0 0.0
    %231 = vmatpush1.msra.mxu0 0.0
    %232 = vmatprep.subr.mxu0 0.0
    %233 = vmatpush1.msra.mxu0 0.0
    %234 = vmatprep.subr.mxu0 0.0
    %235 = vmatpush1.msra.mxu0 0.0
    %236 = vmatprep.subr.mxu0 0.0
    %237 = vmatpush1.msra.mxu0 0.0
    %238 = vmatprep.subr.mxu0 0.0
    %239 = vmatpush1.msra.mxu0 0.0
    %240 = vmatprep.subr.mxu0 0.0
    %241 = vmatpush1.msra.mxu0 0.0
    %242 = vmatprep.subr.mxu0 0.0
    %243 = vmatpush1.msra.mxu0 0.0
    %244 = vmatprep.subr.mxu0 0.0
    %245 = vmatpush1.msra.mxu0 0.0
    %246 = vmatprep.subr.mxu0 0.0
    %247 = vmatpush1.msra.mxu0 0.0
    %248 = vmatprep.mubr.f32.mxu0 0.0
    %249 = vmatmul.mubr.f32.gmra.mrb[0].mxu0 %v137
    %v250 = vpop.f32.mrb[0].mxu0
    %v251 = vadd.f32 0.0, %v250
    %v252 = vpop.f32.mrb[0].mxu0
    %253 = vmatprep.mubr.f32.mxu0 0.0
    %254 = vmatmul.mubr.f32.gmra.mrb[0].mxu0 %v140
    %v255 = vpop.f32.mrb[0].mxu0
    %v256 = vadd.f32 0.0, %v255
    %v257 = vpop.f32.mrb[0].mxu0
    %258 = vmatprep.mubr.f32.mxu0 0.0
    %259 = vmatmul.mubr.f32.gmra.mrb[0].mxu0 %v143
    %v260 = vpop.f32.mrb[0].mxu0
    %v261 = vadd.f32 0.0, %v260
    %v262 = vpop.f32.mrb[0].mxu0
    %263 = vmatprep.mubr.f32.mxu0 0.0
    %264 = vmatmul.mubr.f32.gmra.mrb[0].mxu0 %v146
    %v265 = vpop.f32.mrb[0].mxu0
    %v266 = vadd.f32 0.0, %v265
    %v267 = vpop.f32.mrb[0].mxu0
    %268 = vmatprep.mubr.f32.mxu0 0.0
    %269 = vmatmul.mubr.f32.gmra.mrb[0].mxu0 %v149
    %v270 = vpop.f32.mrb[0].mxu0
    %v271 = vadd.f32 0.0, %v270
    %v272 = vpop.f32.mrb[0].mxu0
    %273 = vmatprep.mubr.f32.mxu0 0.0
    %274 = vmatmul.mubr.f32.gmra.mrb[0].mxu0 %v152
    %v275 = vpop.f32.mrb[0].mxu0
    %v276 = vadd.f32 0.0, %v275
    %v277 = vpop.f32.mrb[0].mxu0
    %278 = vmatprep.mubr.f32.mxu0 0.0
    %279 = vmatmul.mubr.f32.gmra.mrb[0].mxu0 %v155
    %v280 = vpop.f32.mrb[0].mxu0
    %v281 = vadd.f32 0.0, %v280
    %v282 = vpop.f32.mrb[0].mxu0
    %283 = vmatprep.mubr.f32.mxu0 0.0
    %284 = vmatmul.mubr.f32.gmra.mrb[0].mxu0 %v158
    %v285 = vpop.f32.mrb[0].mxu0
    %v286 = vadd.f32 0.0, %v285
    %v287 = vpop.f32.mrb[0].mxu0
    %288 = vmatprep.mubr.f32.mxu0 0.0
    %289 = vmatmul.mubr.f32.gmra.mrb[0].mxu0 %v161
    %v290 = vpop.f32.mrb[0].mxu0
    %v291 = vadd.f32 0.0, %v290
    %v292 = vpop.f32.mrb[0].mxu0
    %293 = vmatprep.mubr.f32.mxu0 0.0
    %294 = vmatmul.mubr.f32.gmra.mrb[0].mxu0 %v164
    %v295 = vpop.f32.mrb[0].mxu0
    %v296 = vadd.f32 0.0, %v295
    %v297 = vpop.f32.mrb[0].mxu0
    %298 = vmatprep.mubr.f32.mxu0 0.0
    %299 = vmatmul.mubr.f32.gmra.mrb[0].mxu0 %v167
    %v300 = vpop.f32.mrb[0].mxu0
    %v301 = vadd.f32 0.0, %v300
    %v302 = vpop.f32.mrb[0].mxu0
    %303 = vmatprep.mubr.f32.mxu0 0.0
    %304 = vmatmul.mubr.f32.gmra.mrb[0].mxu0 %v170
    %v305 = vpop.f32.mrb[0].mxu0
    %v306 = vadd.f32 0.0, %v305
    %v307 = vpop.f32.mrb[0].mxu0
    %308 = vmatprep.mubr.f32.mxu0 0.0
    %309 = vmatmul.mubr.f32.gmra.mrb[0].mxu0 %v173
    %v310 = vpop.f32.mrb[0].mxu0
    %v311 = vadd.f32 0.0, %v310
    %v312 = vpop.f32.mrb[0].mxu0
    %313 = vmatprep.mubr.f32.mxu0 0.0
    %314 = vmatmul.mubr.f32.gmra.mrb[0].mxu0 %v176
    %v315 = vpop.f32.mrb[0].mxu0
    %v316 = vadd.f32 0.0, %v315
    %v317 = vpop.f32.mrb[0].mxu0
    %318 = vmatprep.mubr.f32.mxu0 0.0
    %319 = vmatmul.mubr.f32.gmra.mrb[0].mxu0 %v179
    %v320 = vpop.f32.mrb[0].mxu0
    %v321 = vadd.f32 0.0, %v320
    %v322 = vpop.f32.mrb[0].mxu0
    %323 = vmatprep.mubr.f32.mxu0 0.0
    %324 = vmatmul.mubr.f32.gmra.mrb[0].mxu0 %v182
    %v325 = vpop.f32.mrb[0].mxu0
    %v326 = vadd.f32 0.0, %v325
    %v327 = vpop.f32.mrb[0].mxu0
    %328 = vdwg.mxu0
    %v329 = vld [vmem:[#allocation2] sm:$0x1]
    %v331 = vlaneseq
    %v332 = vshrl.u32 %v331, 7
    %v333 = vsub.s32 0, %v332
    %v334 = vrot.slane %v329, %v333
    %v336 = vmul.f32 %v251, %v334
    %v337 = vmul.f32 %v256, %v334
    %v338 = vmul.f32 %v261, %v334
    %v339 = vmul.f32 %v266, %v334
    %v340 = vmul.f32 %v271, %v334
    %v341 = vmul.f32 %v276, %v334
    %v342 = vmul.f32 %v281, %v334
    %v343 = vmul.f32 %v286, %v334
    %v344 = vmul.f32 %v291, %v334
    %v345 = vmul.f32 %v296, %v334
    %v346 = vmul.f32 %v301, %v334
    %v347 = vmul.f32 %v306, %v334
    %v348 = vmul.f32 %v311, %v334
    %v349 = vmul.f32 %v316, %v334
    %v350 = vmul.f32 %v321, %v334
    %v351 = vmul.f32 %v326, %v334
    %v352 = vld [vmem:[#allocation5] sm:$0x1]
    %v354 = vlaneseq
    %v355 = vshrl.u32 %v354, 7
    %v356 = vsub.s32 0, %v355
    %v357 = vrot.slane %v352, %v356
    %v359 = vadd.f32 %v336, %v357
    %v360 = vadd.f32 %v337, %v357
    %v361 = vadd.f32 %v338, %v357
    %v362 = vadd.f32 %v339, %v357
    %v363 = vadd.f32 %v340, %v357
    %v364 = vadd.f32 %v341, %v357
    %v365 = vadd.f32 %v342, %v357
    %v366 = vadd.f32 %v343, %v357
    %v367 = vadd.f32 %v344, %v357
    %v368 = vadd.f32 %v345, %v357
    %v369 = vadd.f32 %v346, %v357
    %v370 = vadd.f32 %v347, %v357
    %v371 = vadd.f32 %v348, %v357
    %v372 = vadd.f32 %v349, %v357
    %v373 = vadd.f32 %v350, %v357
    %v374 = vadd.f32 %v351, %v357
    %v375 = vmax.f32 %v359, 0.0
    %v376 = vmax.f32 %v360, 0.0
    %v377 = vmax.f32 %v361, 0.0
    %v378 = vmax.f32 %v362, 0.0
    %v379 = vmax.f32 %v363, 0.0
    %v380 = vmax.f32 %v364, 0.0
    %v381 = vmax.f32 %v365, 0.0
    %v382 = vmax.f32 %v366, 0.0
    %v383 = vmax.f32 %v367, 0.0
    %v384 = vmax.f32 %v368, 0.0
    %v385 = vmax.f32 %v369, 0.0
    %v386 = vmax.f32 %v370, 0.0
    %v387 = vmax.f32 %v371, 0.0
    %v388 = vmax.f32 %v372, 0.0
    %v389 = vmax.f32 %v373, 0.0
    %v390 = vmax.f32 %v374, 0.0
    %v391 = vlaneseq
    %v392 = vshrl.u32 %v391, 7
    %v393 = vadd.s32 %v392, 8
    %v394 = vadd.s32 %v392, 16
    %v395 = vadd.s32 %v392, 24
    %v396 = vadd.s32 %v392, 32
    %v397 = vadd.s32 %v392, 40
    %v398 = vadd.s32 %v392, 48
    %v399 = vadd.s32 %v392, 56
    %v400 = vadd.s32 %v392, 64
    %v401 = vadd.s32 %v392, 72
    %v402 = vadd.s32 %v392, 80
    %v403 = vadd.s32 %v392, 88
    %v404 = vadd.s32 %v392, 96
    %v405 = vadd.s32 %v392, 104
    %v406 = vadd.s32 %v392, 112
    %v407 = vadd.s32 %v392, 120
    %v408 = vand.u32 %v392, 63
    %v409 = vand.u32 %v393, 63
    %v410 = vand.u32 %v394, 63
    %v411 = vand.u32 %v395, 63
    %v412 = vand.u32 %v396, 63
    %v413 = vand.u32 %v397, 63
    %v414 = vand.u32 %v398, 63
    %v415 = vand.u32 %v399, 63
    %v416 = vand.u32 %v400, 63
    %v417 = vand.u32 %v401, 63
    %v418 = vand.u32 %v402, 63
    %v419 = vand.u32 %v403, 63
    %v420 = vand.u32 %v404, 63
    %v421 = vand.u32 %v405, 63
    %v422 = vand.u32 %v406, 63
    %v423 = vand.u32 %v407, 63
    %v424 = vand.u32 %v408, 7
    %v425 = vand.u32 %v409, 7
    %v426 = vand.u32 %v410, 7
    %v427 = vand.u32 %v411, 7
    %v428 = vand.u32 %v412, 7
    %v429 = vand.u32 %v413, 7
    %v430 = vand.u32 %v414, 7
    %v431 = vand.u32 %v415, 7
    %v432 = vand.u32 %v416, 7
    %v433 = vand.u32 %v417, 7
    %v434 = vand.u32 %v418, 7
    %v435 = vand.u32 %v419, 7
    %v436 = vand.u32 %v420, 7
    %v437 = vand.u32 %v421, 7
    %v438 = vand.u32 %v422, 7
    %v439 = vand.u32 %v423, 7
    %vm440 = vcmp.ge.s32.totalorder %v408, 8
    %vm441 = vcmp.ge.s32.totalorder %v409, 8
    %vm442 = vcmp.ge.s32.totalorder %v410, 8
    %vm443 = vcmp.ge.s32.totalorder %v411, 8
    %vm444 = vcmp.ge.s32.totalorder %v412, 8
    %vm445 = vcmp.ge.s32.totalorder %v413, 8
    %vm446 = vcmp.ge.s32.totalorder %v414, 8
    %vm447 = vcmp.ge.s32.totalorder %v415, 8
    %vm448 = vcmp.ge.s32.totalorder %v416, 8
    %vm449 = vcmp.ge.s32.totalorder %v417, 8
    %vm450 = vcmp.ge.s32.totalorder %v418, 8
    %vm451 = vcmp.ge.s32.totalorder %v419, 8
    %vm452 = vcmp.ge.s32.totalorder %v420, 8
    %vm453 = vcmp.ge.s32.totalorder %v421, 8
    %vm454 = vcmp.ge.s32.totalorder %v422, 8
    %vm455 = vcmp.ge.s32.totalorder %v423, 8
    %vm456 = vcmp.lt.s32.totalorder %v408, 56
    %vm457 = vcmp.lt.s32.totalorder %v409, 56
    %vm458 = vcmp.lt.s32.totalorder %v410, 56
    %vm459 = vcmp.lt.s32.totalorder %v411, 56
    %vm460 = vcmp.lt.s32.totalorder %v412, 56
    %vm461 = vcmp.lt.s32.totalorder %v413, 56
    %vm462 = vcmp.lt.s32.totalorder %v414, 56
    %vm463 = vcmp.lt.s32.totalorder %v415, 56
    %vm464 = vcmp.lt.s32.totalorder %v416, 56
    %vm465 = vcmp.lt.s32.totalorder %v417, 56
    %vm466 = vcmp.lt.s32.totalorder %v418, 56
    %vm467 = vcmp.lt.s32.totalorder %v419, 56
    %vm468 = vcmp.lt.s32.totalorder %v420, 56
    %vm469 = vcmp.lt.s32.totalorder %v421, 56
    %vm470 = vcmp.lt.s32.totalorder %v422, 56
    %vm471 = vcmp.lt.s32.totalorder %v423, 56
    %vm472 = vcmp.ge.s32.totalorder %v424, 1
    %vm473 = vcmp.ge.s32.totalorder %v425, 1
    %vm474 = vcmp.ge.s32.totalorder %v426, 1
    %vm475 = vcmp.ge.s32.totalorder %v427, 1
    %vm476 = vcmp.ge.s32.totalorder %v428, 1
    %vm477 = vcmp.ge.s32.totalorder %v429, 1
    %vm478 = vcmp.ge.s32.totalorder %v430, 1
    %vm479 = vcmp.ge.s32.totalorder %v431, 1
    %vm480 = vcmp.ge.s32.totalorder %v432, 1
    %vm481 = vcmp.ge.s32.totalorder %v433, 1
    %vm482 = vcmp.ge.s32.totalorder %v434, 1
    %vm483 = vcmp.ge.s32.totalorder %v435, 1
    %vm484 = vcmp.ge.s32.totalorder %v436, 1
    %vm485 = vcmp.ge.s32.totalorder %v437, 1
    %vm486 = vcmp.ge.s32.totalorder %v438, 1
    %vm487 = vcmp.ge.s32.totalorder %v439, 1
    %vm488 = vcmp.le.s32.totalorder %v424, 6
    %vm489 = vcmp.le.s32.totalorder %v425, 6
    %vm490 = vcmp.le.s32.totalorder %v426, 6
    %vm491 = vcmp.le.s32.totalorder %v427, 6
    %vm492 = vcmp.le.s32.totalorder %v428, 6
    %vm493 = vcmp.le.s32.totalorder %v429, 6
    %vm494 = vcmp.le.s32.totalorder %v430, 6
    %vm495 = vcmp.le.s32.totalorder %v431, 6
    %vm496 = vcmp.le.s32.totalorder %v432, 6
    %vm497 = vcmp.le.s32.totalorder %v433, 6
    %vm498 = vcmp.le.s32.totalorder %v434, 6
    %vm499 = vcmp.le.s32.totalorder %v435, 6
    %vm500 = vcmp.le.s32.totalorder %v436, 6
    %vm501 = vcmp.le.s32.totalorder %v437, 6
    %vm502 = vcmp.le.s32.totalorder %v438, 6
    %vm503 = vcmp.le.s32.totalorder %v439, 6
    %v504 = vrot.slane %v375, 7
    %v505 = vrot.slane %v376, 7
    %v506 = vrot.slane %v377, 7
    %v507 = vrot.slane %v378, 7
    %v508 = vrot.slane %v379, 7
    %v509 = vrot.slane %v380, 7
    %v510 = vrot.slane %v381, 7
    %v511 = vrot.slane %v382, 7
    %v512 = vrot.slane %v383, 7
    %v513 = vrot.slane %v384, 7
    %v514 = vrot.slane %v385, 7
    %v515 = vrot.slane %v386, 7
    %v516 = vrot.slane %v387, 7
    %v517 = vrot.slane %v388, 7
    %v518 = vrot.slane %v389, 7
    %v519 = vrot.slane %v390, 7
    %vm520 = vcmp.lt.s32.totalorder %v392, 1
    %v521 = vsel %vm520, %v518, %v519
    %v522 = vsel %vm520, %v517, %v518
    %v523 = vsel %vm520, %v516, %v517
    %v524 = vsel %vm520, %v515, %v516
    %v525 = vsel %vm520, %v514, %v515
    %v526 = vsel %vm520, %v513, %v514
    %v527 = vsel %vm520, %v512, %v513
    %v528 = vsel %vm520, %v511, %v512
    %v529 = vsel %vm520, %v510, %v511
    %v530 = vsel %vm520, %v509, %v510
    %v531 = vsel %vm520, %v508, %v509
    %v532 = vsel %vm520, %v507, %v508
    %v533 = vsel %vm520, %v506, %v507
    %v534 = vsel %vm520, %v505, %v506
    %v535 = vsel %vm520, %v504, %v505
    %v536 = vsel %vm520, %v519, %v504
    %vm537 = vmand %vm440, %vm472
    %vm538 = vmand %vm441, %vm473
    %vm539 = vmand %vm442, %vm474
    %vm540 = vmand %vm443, %vm475
    %vm541 = vmand %vm444, %vm476
    %vm542 = vmand %vm445, %vm477
    %vm543 = vmand %vm446, %vm478
    %vm544 = vmand %vm447, %vm479
    %vm545 = vmand %vm448, %vm480
    %vm546 = vmand %vm449, %vm481
    %vm547 = vmand %vm450, %vm482
    %vm548 = vmand %vm451, %vm483
    %vm549 = vmand %vm452, %vm484
    %vm550 = vmand %vm453, %vm485
    %vm551 = vmand %vm454, %vm486
    %vm552 = vmand %vm455, %vm487
    %v553 = vsel %vm537, 1, 0
    %v554 = vsel %vm538, 1, 0
    %v555 = vsel %vm539, 1, 0
    %v556 = vsel %vm540, 1, 0
    %v557 = vsel %vm541, 1, 0
    %v558 = vsel %vm542, 1, 0
    %v559 = vsel %vm543, 1, 0
    %v560 = vsel %vm544, 1, 0
    %v561 = vsel %vm545, 1, 0
    %v562 = vsel %vm546, 1, 0
    %v563 = vsel %vm547, 1, 0
    %v564 = vsel %vm548, 1, 0
    %v565 = vsel %vm549, 1, 0
    %v566 = vsel %vm550, 1, 0
    %v567 = vsel %vm551, 1, 0
    %v568 = vsel %vm552, 1, 0
    %vm569 = vcmp.eq.s32.totalorder %v553, 1
    %vm570 = vcmp.eq.s32.totalorder %v554, 1
    %vm571 = vcmp.eq.s32.totalorder %v555, 1
    %vm572 = vcmp.eq.s32.totalorder %v556, 1
    %vm573 = vcmp.eq.s32.totalorder %v557, 1
    %vm574 = vcmp.eq.s32.totalorder %v558, 1
    %vm575 = vcmp.eq.s32.totalorder %v559, 1
    %vm576 = vcmp.eq.s32.totalorder %v560, 1
    %vm577 = vcmp.eq.s32.totalorder %v561, 1
    %vm578 = vcmp.eq.s32.totalorder %v562, 1
    %vm579 = vcmp.eq.s32.totalorder %v563, 1
    %vm580 = vcmp.eq.s32.totalorder %v564, 1
    %vm581 = vcmp.eq.s32.totalorder %v565, 1
    %vm582 = vcmp.eq.s32.totalorder %v566, 1
    %vm583 = vcmp.eq.s32.totalorder %v567, 1
    %vm584 = vcmp.eq.s32.totalorder %v568, 1
    %v585 = vsel %vm569, %v521, 0.0
    %v586 = vsel %vm570, %v536, 0.0
    %v587 = vsel %vm571, %v535, 0.0
    %v588 = vsel %vm572, %v534, 0.0
    %v589 = vsel %vm573, %v533, 0.0
    %v590 = vsel %vm574, %v532, 0.0
    %v591 = vsel %vm575, %v531, 0.0
    %v592 = vsel %vm576, %v530, 0.0
    %v593 = vsel %vm577, %v529, 0.0
    %v594 = vsel %vm578, %v528, 0.0
    %v595 = vsel %vm579, %v527, 0.0
    %v596 = vsel %vm580, %v526, 0.0
    %v597 = vsel %vm581, %v525, 0.0
    %v598 = vsel %vm582, %v524, 0.0
    %v599 = vsel %vm583, %v523, 0.0
    %v600 = vsel %vm584, %v522, 0.0
    %v601 = vld [vmem:[%s4] sm:$0x1]
    %v603 = vlaneseq
    %v604 = vshrl.u32 %v603, 7
    %v605 = vsub.s32 0, %v604
    %v606 = vrot.slane %v601, %v605
    %v608 = vmul.f32 %v585, %v606
    %v609 = vmul.f32 %v586, %v606
    %v610 = vmul.f32 %v587, %v606
    %v611 = vmul.f32 %v588, %v606
    %v612 = vmul.f32 %v589, %v606
    %v613 = vmul.f32 %v590, %v606
    %v614 = vmul.f32 %v591, %v606
    %v615 = vmul.f32 %v592, %v606
    %v616 = vmul.f32 %v593, %v606
    %v617 = vmul.f32 %v594, %v606
    %v618 = vmul.f32 %v595, %v606
    %v619 = vmul.f32 %v596, %v606
    %v620 = vmul.f32 %v597, %v606
    %v621 = vmul.f32 %v598, %v606
    %v622 = vmul.f32 %v599, %v606
    %v623 = vmul.f32 %v600, %v606
    %v624 = vadd.f32 %v608, 0.0
    %v625 = vadd.f32 %v609, 0.0
    %v626 = vadd.f32 %v610, 0.0
    %v627 = vadd.f32 %v611, 0.0
    %v628 = vadd.f32 %v612, 0.0
    %v629 = vadd.f32 %v613, 0.0
    %v630 = vadd.f32 %v614, 0.0
    %v631 = vadd.f32 %v615, 0.0
    %v632 = vadd.f32 %v616, 0.0
    %v633 = vadd.f32 %v617, 0.0
    %v634 = vadd.f32 %v618, 0.0
    %v635 = vadd.f32 %v619, 0.0
    %v636 = vadd.f32 %v620, 0.0
    %v637 = vadd.f32 %v621, 0.0
    %v638 = vadd.f32 %v622, 0.0
    %v639 = vadd.f32 %v623, 0.0
    %v640 = vld [vmem:[%s5] sm:$0x1]
    %v642 = vlaneseq
    %v643 = vshrl.u32 %v642, 7
    %v644 = vsub.s32 0, %v643
    %v645 = vrot.slane %v640, %v644
    %v647 = vmul.f32 %v585, %v645
    %v648 = vmul.f32 %v586, %v645
    %v649 = vmul.f32 %v587, %v645
    %v650 = vmul.f32 %v588, %v645
    %v651 = vmul.f32 %v589, %v645
    %v652 = vmul.f32 %v590, %v645
    %v653 = vmul.f32 %v591, %v645
    %v654 = vmul.f32 %v592, %v645
    %v655 = vmul.f32 %v593, %v645
    %v656 = vmul.f32 %v594, %v645
    %v657 = vmul.f32 %v595, %v645
    %v658 = vmul.f32 %v596, %v645
    %v659 = vmul.f32 %v597, %v645
    %v660 = vmul.f32 %v598, %v645
    %v661 = vmul.f32 %v599, %v645
    %v662 = vmul.f32 %v600, %v645
    %v663 = vadd.f32 %v647, 0.0
    %v664 = vadd.f32 %v648, 0.0
    %v665 = vadd.f32 %v649, 0.0
    %v666 = vadd.f32 %v650, 0.0
    %v667 = vadd.f32 %v651, 0.0
    %v668 = vadd.f32 %v652, 0.0
    %v669 = vadd.f32 %v653, 0.0
    %v670 = vadd.f32 %v654, 0.0
    %v671 = vadd.f32 %v655, 0.0
    %v672 = vadd.f32 %v656, 0.0
    %v673 = vadd.f32 %v657, 0.0
    %v674 = vadd.f32 %v658, 0.0
    %v675 = vadd.f32 %v659, 0.0
    %v676 = vadd.f32 %v660, 0.0
    %v677 = vadd.f32 %v661, 0.0
    %v678 = vadd.f32 %v662, 0.0
    %v679 = vsel %vm440, 1, 0
    %v680 = vsel %vm441, 1, 0
    %v681 = vsel %vm442, 1, 0
    %v682 = vsel %vm443, 1, 0
    %v683 = vsel %vm444, 1, 0
    %v684 = vsel %vm445, 1, 0
    %v685 = vsel %vm446, 1, 0
    %v686 = vsel %vm447, 1, 0
    %v687 = vsel %vm448, 1, 0
    %v688 = vsel %vm449, 1, 0
    %v689 = vsel %vm450, 1, 0
    %v690 = vsel %vm451, 1, 0
    %v691 = vsel %vm452, 1, 0
    %v692 = vsel %vm453, 1, 0
    %v693 = vsel %vm454, 1, 0
    %v694 = vsel %vm455, 1, 0
    %vm695 = vcmp.eq.s32.totalorder %v679, 1
    %vm696 = vcmp.eq.s32.totalorder %v680, 1
    %vm697 = vcmp.eq.s32.totalorder %v681, 1
    %vm698 = vcmp.eq.s32.totalorder %v682, 1
    %vm699 = vcmp.eq.s32.totalorder %v683, 1
    %vm700 = vcmp.eq.s32.totalorder %v684, 1
    %vm701 = vcmp.eq.s32.totalorder %v685, 1
    %vm702 = vcmp.eq.s32.totalorder %v686, 1
    %vm703 = vcmp.eq.s32.totalorder %v687, 1
    %vm704 = vcmp.eq.s32.totalorder %v688, 1
    %vm705 = vcmp.eq.s32.totalorder %v689, 1
    %vm706 = vcmp.eq.s32.totalorder %v690, 1
    %vm707 = vcmp.eq.s32.totalorder %v691, 1
    %vm708 = vcmp.eq.s32.totalorder %v692, 1
    %vm709 = vcmp.eq.s32.totalorder %v693, 1
    %vm710 = vcmp.eq.s32.totalorder %v694, 1
    %v711 = vsel %vm695, %v390, 0.0
    %v712 = vsel %vm696, %v375, 0.0
    %v713 = vsel %vm697, %v376, 0.0
    %v714 = vsel %vm698, %v377, 0.0
    %v715 = vsel %vm699, %v378, 0.0
    %v716 = vsel %vm700, %v379, 0.0
    %v717 = vsel %vm701, %v380, 0.0
    %v718 = vsel %vm702, %v381, 0.0
    %v719 = vsel %vm703, %v382, 0.0
    %v720 = vsel %vm704, %v383, 0.0
    %v721 = vsel %vm705, %v384, 0.0
    %v722 = vsel %vm706, %v385, 0.0
    %v723 = vsel %vm707, %v386, 0.0
    %v724 = vsel %vm708, %v387, 0.0
    %v725 = vsel %vm709, %v388, 0.0
    %v726 = vsel %vm710, %v389, 0.0
    %s727 = scalar_lea.vmem %s4, 1
    %v728 = vld [vmem:[%s727] sm:$0x1]
    %v730 = vlaneseq
    %v731 = vshrl.u32 %v730, 7
    %v732 = vsub.s32 0, %v731
    %v733 = vrot.slane %v728, %v732
    %v735 = vmul.f32 %v711, %v733
    %v736 = vmul.f32 %v712, %v733
    %v737 = vmul.f32 %v713, %v733
    %v738 = vmul.f32 %v714, %v733
    %v739 = vmul.f32 %v715, %v733
    %v740 = vmul.f32 %v716, %v733
    %v741 = vmul.f32 %v717, %v733
    %v742 = vmul.f32 %v718, %v733
    %v743 = vmul.f32 %v719, %v733
    %v744 = vmul.f32 %v720, %v733
    %v745 = vmul.f32 %v721, %v733
    %v746 = vmul.f32 %v722, %v733
    %v747 = vmul.f32 %v723, %v733
    %v748 = vmul.f32 %v724, %v733
    %v749 = vmul.f32 %v725, %v733
    %v750 = vmul.f32 %v726, %v733
    %v751 = vadd.f32 %v624, %v735
    %v752 = vadd.f32 %v625, %v736
    %v753 = vadd.f32 %v626, %v737
    %v754 = vadd.f32 %v627, %v738
    %v755 = vadd.f32 %v628, %v739
    %v756 = vadd.f32 %v629, %v740
    %v757 = vadd.f32 %v630, %v741
    %v758 = vadd.f32 %v631, %v742
    %v759 = vadd.f32 %v632, %v743
    %v760 = vadd.f32 %v633, %v744
    %v761 = vadd.f32 %v634, %v745
    %v762 = vadd.f32 %v635, %v746
    %v763 = vadd.f32 %v636, %v747
    %v764 = vadd.f32 %v637, %v748
    %v765 = vadd.f32 %v638, %v749
    %v766 = vadd.f32 %v639, %v750
    %s767 = scalar_lea.vmem %s5, 1
    %v768 = vld [vmem:[%s767] sm:$0x1]
    %v770 = vlaneseq
    %v771 = vshrl.u32 %v770, 7
    %v772 = vsub.s32 0, %v771
    %v773 = vrot.slane %v768, %v772
    %v775 = vmul.f32 %v711, %v773
    %v776 = vmul.f32 %v712, %v773
    %v777 = vmul.f32 %v713, %v773
    %v778 = vmul.f32 %v714, %v773
    %v779 = vmul.f32 %v715, %v773
    %v780 = vmul.f32 %v716, %v773
    %v781 = vmul.f32 %v717, %v773
    %v782 = vmul.f32 %v718, %v773
    %v783 = vmul.f32 %v719, %v773
    %v784 = vmul.f32 %v720, %v773
    %v785 = vmul.f32 %v721, %v773
    %v786 = vmul.f32 %v722, %v773
    %v787 = vmul.f32 %v723, %v773
    %v788 = vmul.f32 %v724, %v773
    %v789 = vmul.f32 %v725, %v773
    %v790 = vmul.f32 %v726, %v773
    %v791 = vadd.f32 %v663, %v775
    %v792 = vadd.f32 %v664, %v776
    %v793 = vadd.f32 %v665, %v777
    %v794 = vadd.f32 %v666, %v778
    %v795 = vadd.f32 %v667, %v779
    %v796 = vadd.f32 %v668, %v780
    %v797 = vadd.f32 %v669, %v781
    %v798 = vadd.f32 %v670, %v782
    %v799 = vadd.f32 %v671, %v783
    %v800 = vadd.f32 %v672, %v784
    %v801 = vadd.f32 %v673, %v785
    %v802 = vadd.f32 %v674, %v786
    %v803 = vadd.f32 %v675, %v787
    %v804 = vadd.f32 %v676, %v788
    %v805 = vadd.f32 %v677, %v789
    %v806 = vadd.f32 %v678, %v790
    %v807 = vrot.slane %v375, 1
    %v808 = vrot.slane %v376, 1
    %v809 = vrot.slane %v377, 1
    %v810 = vrot.slane %v378, 1
    %v811 = vrot.slane %v379, 1
    %v812 = vrot.slane %v380, 1
    %v813 = vrot.slane %v381, 1
    %v814 = vrot.slane %v382, 1
    %v815 = vrot.slane %v383, 1
    %v816 = vrot.slane %v384, 1
    %v817 = vrot.slane %v385, 1
    %v818 = vrot.slane %v386, 1
    %v819 = vrot.slane %v387, 1
    %v820 = vrot.slane %v388, 1
    %v821 = vrot.slane %v389, 1
    %v822 = vrot.slane %v390, 1
    %vm823 = vcmp.lt.s32.totalorder %v392, 7
    %v824 = vsel %vm823, %v821, %v822
    %v825 = vsel %vm823, %v820, %v821
    %v826 = vsel %vm823, %v819, %v820
    %v827 = vsel %vm823, %v818, %v819
    %v828 = vsel %vm823, %v817, %v818
    %v829 = vsel %vm823, %v816, %v817
    %v830 = vsel %vm823, %v815, %v816
    %v831 = vsel %vm823, %v814, %v815
    %v832 = vsel %vm823, %v813, %v814
    %v833 = vsel %vm823, %v812, %v813
    %v834 = vsel %vm823, %v811, %v812
    %v835 = vsel %vm823, %v810, %v811
    %v836 = vsel %vm823, %v809, %v810
    %v837 = vsel %vm823, %v808, %v809
    %v838 = vsel %vm823, %v807, %v808
    %v839 = vsel %vm823, %v822, %v807
    %vm840 = vmand %vm440, %vm488
    %vm841 = vmand %vm441, %vm489
    %vm842 = vmand %vm442, %vm490
    %vm843 = vmand %vm443, %vm491
    %vm844 = vmand %vm444, %vm492
    %vm845 = vmand %vm445, %vm493
    %vm846 = vmand %vm446, %vm494
    %vm847 = vmand %vm447, %vm495
    %vm848 = vmand %vm448, %vm496
    %vm849 = vmand %vm449, %vm497
    %vm850 = vmand %vm450, %vm498
    %vm851 = vmand %vm451, %vm499
    %vm852 = vmand %vm452, %vm500
    %vm853 = vmand %vm453, %vm501
    %vm854 = vmand %vm454, %vm502
    %vm855 = vmand %vm455, %vm503
    %v856 = vsel %vm840, 1, 0
    %v857 = vsel %vm841, 1, 0
    %v858 = vsel %vm842, 1, 0
    %v859 = vsel %vm843, 1, 0
    %v860 = vsel %vm844, 1, 0
    %v861 = vsel %vm845, 1, 0
    %v862 = vsel %vm846, 1, 0
    %v863 = vsel %vm847, 1, 0
    %v864 = vsel %vm848, 1, 0
    %v865 = vsel %vm849, 1, 0
    %v866 = vsel %vm850, 1, 0
    %v867 = vsel %vm851, 1, 0
    %v868 = vsel %vm852, 1, 0
    %v869 = vsel %vm853, 1, 0
    %v870 = vsel %vm854, 1, 0
    %v871 = vsel %vm855, 1, 0
    %vm872 = vcmp.eq.s32.totalorder %v856, 1
    %vm873 = vcmp.eq.s32.totalorder %v857, 1
    %vm874 = vcmp.eq.s32.totalorder %v858, 1
    %vm875 = vcmp.eq.s32.totalorder %v859, 1
    %vm876 = vcmp.eq.s32.totalorder %v860, 1
    %vm877 = vcmp.eq.s32.totalorder %v861, 1
    %vm878 = vcmp.eq.s32.totalorder %v862, 1
    %vm879 = vcmp.eq.s32.totalorder %v863, 1
    %vm880 = vcmp.eq.s32.totalorder %v864, 1
    %vm881 = vcmp.eq.s32.totalorder %v865, 1
    %vm882 = vcmp.eq.s32.totalorder %v866, 1
    %vm883 = vcmp.eq.s32.totalorder %v867, 1
    %vm884 = vcmp.eq.s32.totalorder %v868, 1
    %vm885 = vcmp.eq.s32.totalorder %v869, 1
    %vm886 = vcmp.eq.s32.totalorder %v870, 1
    %vm887 = vcmp.eq.s32.totalorder %v871, 1
    %v888 = vsel %vm872, %v839, 0.0
    %v889 = vsel %vm873, %v838, 0.0
    %v890 = vsel %vm874, %v837, 0.0
    %v891 = vsel %vm875, %v836, 0.0
    %v892 = vsel %vm876, %v835, 0.0
    %v893 = vsel %vm877, %v834, 0.0
    %v894 = vsel %vm878, %v833, 0.0
    %v895 = vsel %vm879, %v832, 0.0
    %v896 = vsel %vm880, %v831, 0.0
    %v897 = vsel %vm881, %v830, 0.0
    %v898 = vsel %vm882, %v829, 0.0
    %v899 = vsel %vm883, %v828, 0.0
    %v900 = vsel %vm884, %v827, 0.0
    %v901 = vsel %vm885, %v826, 0.0
    %v902 = vsel %vm886, %v825, 0.0
    %v903 = vsel %vm887, %v824, 0.0
    %s904 = scalar_lea.vmem %s4, 2
    %v905 = vld [vmem:[%s904] sm:$0x1]
    %v907 = vlaneseq
    %v908 = vshrl.u32 %v907, 7
    %v909 = vsub.s32 0, %v908
    %v910 = vrot.slane %v905, %v909
    %v912 = vmul.f32 %v888, %v910
    %v913 = vmul.f32 %v889, %v910
    %v914 = vmul.f32 %v890, %v910
    %v915 = vmul.f32 %v891, %v910
    %v916 = vmul.f32 %v892, %v910
    %v917 = vmul.f32 %v893, %v910
    %v918 = vmul.f32 %v894, %v910
    %v919 = vmul.f32 %v895, %v910
    %v920 = vmul.f32 %v896, %v910
    %v921 = vmul.f32 %v897, %v910
    %v922 = vmul.f32 %v898, %v910
    %v923 = vmul.f32 %v899, %v910
    %v924 = vmul.f32 %v900, %v910
    %v925 = vmul.f32 %v901, %v910
    %v926 = vmul.f32 %v902, %v910
    %v927 = vmul.f32 %v903, %v910
    %v928 = vadd.f32 %v751, %v912
    %v929 = vadd.f32 %v752, %v913
    %v930 = vadd.f32 %v753, %v914
    %v931 = vadd.f32 %v754, %v915
    %v932 = vadd.f32 %v755, %v916
    %v933 = vadd.f32 %v756, %v917
    %v934 = vadd.f32 %v757, %v918
    %v935 = vadd.f32 %v758, %v919
    %v936 = vadd.f32 %v759, %v920
    %v937 = vadd.f32 %v760, %v921
    %v938 = vadd.f32 %v761, %v922
    %v939 = vadd.f32 %v762, %v923
    %v940 = vadd.f32 %v763, %v924
    %v941 = vadd.f32 %v764, %v925
    %v942 = vadd.f32 %v765, %v926
    %v943 = vadd.f32 %v766, %v927
    %s944 = scalar_lea.vmem %s5, 2
    %v945 = vld [vmem:[%s944] sm:$0x1]
    %v947 = vlaneseq
    %v948 = vshrl.u32 %v947, 7
    %v949 = vsub.s32 0, %v948
    %v950 = vrot.slane %v945, %v949
    %v952 = vmul.f32 %v888, %v950
    %v953 = vmul.f32 %v889, %v950
    %v954 = vmul.f32 %v890, %v950
    %v955 = vmul.f32 %v891, %v950
    %v956 = vmul.f32 %v892, %v950
    %v957 = vmul.f32 %v893, %v950
    %v958 = vmul.f32 %v894, %v950
    %v959 = vmul.f32 %v895, %v950
    %v960 = vmul.f32 %v896, %v950
    %v961 = vmul.f32 %v897, %v950
    %v962 = vmul.f32 %v898, %v950
    %v963 = vmul.f32 %v899, %v950
    %v964 = vmul.f32 %v900, %v950
    %v965 = vmul.f32 %v901, %v950
    %v966 = vmul.f32 %v902, %v950
    %v967 = vmul.f32 %v903, %v950
    %v968 = vadd.f32 %v791, %v952
    %v969 = vadd.f32 %v792, %v953
    %v970 = vadd.f32 %v793, %v954
    %v971 = vadd.f32 %v794, %v955
    %v972 = vadd.f32 %v795, %v956
    %v973 = vadd.f32 %v796, %v957
    %v974 = vadd.f32 %v797, %v958
    %v975 = vadd.f32 %v798, %v959
    %v976 = vadd.f32 %v799, %v960
    %v977 = vadd.f32 %v800, %v961
    %v978 = vadd.f32 %v801, %v962
    %v979 = vadd.f32 %v802, %v963
    %v980 = vadd.f32 %v803, %v964
    %v981 = vadd.f32 %v804, %v965
    %v982 = vadd.f32 %v805, %v966
    %v983 = vadd.f32 %v806, %v967
    %v984 = vsel %vm472, 1, 0
    %v985 = vsel %vm473, 1, 0
    %v986 = vsel %vm474, 1, 0
    %v987 = vsel %vm475, 1, 0
    %v988 = vsel %vm476, 1, 0
    %v989 = vsel %vm477, 1, 0
    %v990 = vsel %vm478, 1, 0
    %v991 = vsel %vm479, 1, 0
    %v992 = vsel %vm480, 1, 0
    %v993 = vsel %vm481, 1, 0
    %v994 = vsel %vm482, 1, 0
    %v995 = vsel %vm483, 1, 0
    %v996 = vsel %vm484, 1, 0
    %v997 = vsel %vm485, 1, 0
    %v998 = vsel %vm486, 1, 0
    %v999 = vsel %vm487, 1, 0
    %vm1000 = vcmp.eq.s32.totalorder %v984, 1
    %vm1001 = vcmp.eq.s32.totalorder %v985, 1
    %vm1002 = vcmp.eq.s32.totalorder %v986, 1
    %vm1003 = vcmp.eq.s32.totalorder %v987, 1
    %vm1004 = vcmp.eq.s32.totalorder %v988, 1
    %vm1005 = vcmp.eq.s32.totalorder %v989, 1
    %vm1006 = vcmp.eq.s32.totalorder %v990, 1
    %vm1007 = vcmp.eq.s32.totalorder %v991, 1
    %vm1008 = vcmp.eq.s32.totalorder %v992, 1
    %vm1009 = vcmp.eq.s32.totalorder %v993, 1
    %vm1010 = vcmp.eq.s32.totalorder %v994, 1
    %vm1011 = vcmp.eq.s32.totalorder %v995, 1
    %vm1012 = vcmp.eq.s32.totalorder %v996, 1
    %vm1013 = vcmp.eq.s32.totalorder %v997, 1
    %vm1014 = vcmp.eq.s32.totalorder %v998, 1
    %vm1015 = vcmp.eq.s32.totalorder %v999, 1
    %v1016 = vsel %vm1000, %v536, 0.0
    %v1017 = vsel %vm1001, %v535, 0.0
    %v1018 = vsel %vm1002, %v534, 0.0
    %v1019 = vsel %vm1003, %v533, 0.0
    %v1020 = vsel %vm1004, %v532, 0.0
    %v1021 = vsel %vm1005, %v531, 0.0
    %v1022 = vsel %vm1006, %v530, 0.0
    %v1023 = vsel %vm1007, %v529, 0.0
    %v1024 = vsel %vm1008, %v528, 0.0
    %v1025 = vsel %vm1009, %v527, 0.0
    %v1026 = vsel %vm1010, %v526, 0.0
    %v1027 = vsel %vm1011, %v525, 0.0
    %v1028 = vsel %vm1012, %v524, 0.0
    %v1029 = vsel %vm1013, %v523, 0.0
    %v1030 = vsel %vm1014, %v522, 0.0
    %v1031 = vsel %vm1015, %v521, 0.0
    %s1032 = scalar_lea.vmem %s4, 3
    %v1033 = vld [vmem:[%s1032] sm:$0x1]
    %v1035 = vlaneseq
    %v1036 = vshrl.u32 %v1035, 7
    %v1037 = vsub.s32 0, %v1036
    %v1038 = vrot.slane %v1033, %v1037
    %v1040 = vmul.f32 %v1016, %v1038
    %v1041 = vmul.f32 %v1017, %v1038
    %v1042 = vmul.f32 %v1018, %v1038
    %v1043 = vmul.f32 %v1019, %v1038
    %v1044 = vmul.f32 %v1020, %v1038
    %v1045 = vmul.f32 %v1021, %v1038
    %v1046 = vmul.f32 %v1022, %v1038
    %v1047 = vmul.f32 %v1023, %v1038
    %v1048 = vmul.f32 %v1024, %v1038
    %v1049 = vmul.f32 %v1025, %v1038
    %v1050 = vmul.f32 %v1026, %v1038
    %v1051 = vmul.f32 %v1027, %v1038
    %v1052 = vmul.f32 %v1028, %v1038
    %v1053 = vmul.f32 %v1029, %v1038
    %v1054 = vmul.f32 %v1030, %v1038
    %v1055 = vmul.f32 %v1031, %v1038
    %v1056 = vadd.f32 %v928, %v1040
    %v1057 = vadd.f32 %v929, %v1041
    %v1058 = vadd.f32 %v930, %v1042
    %v1059 = vadd.f32 %v931, %v1043
    %v1060 = vadd.f32 %v932, %v1044
    %v1061 = vadd.f32 %v933, %v1045
    %v1062 = vadd.f32 %v934, %v1046
    %v1063 = vadd.f32 %v935, %v1047
    %v1064 = vadd.f32 %v936, %v1048
    %v1065 = vadd.f32 %v937, %v1049
    %v1066 = vadd.f32 %v938, %v1050
    %v1067 = vadd.f32 %v939, %v1051
    %v1068 = vadd.f32 %v940, %v1052
    %v1069 = vadd.f32 %v941, %v1053
    %v1070 = vadd.f32 %v942, %v1054
    %v1071 = vadd.f32 %v943, %v1055
    %s1072 = scalar_lea.vmem %s5, 3
    %v1073 = vld [vmem:[%s1072] sm:$0x1]
    %v1075 = vlaneseq
    %v1076 = vshrl.u32 %v1075, 7
    %v1077 = vsub.s32 0, %v1076
    %v1078 = vrot.slane %v1073, %v1077
    %v1080 = vmul.f32 %v1016, %v1078
    %v1081 = vmul.f32 %v1017, %v1078
    %v1082 = vmul.f32 %v1018, %v1078
    %v1083 = vmul.f32 %v1019, %v1078
    %v1084 = vmul.f32 %v1020, %v1078
    %v1085 = vmul.f32 %v1021, %v1078
    %v1086 = vmul.f32 %v1022, %v1078
    %v1087 = vmul.f32 %v1023, %v1078
    %v1088 = vmul.f32 %v1024, %v1078
    %v1089 = vmul.f32 %v1025, %v1078
    %v1090 = vmul.f32 %v1026, %v1078
    %v1091 = vmul.f32 %v1027, %v1078
    %v1092 = vmul.f32 %v1028, %v1078
    %v1093 = vmul.f32 %v1029, %v1078
    %v1094 = vmul.f32 %v1030, %v1078
    %v1095 = vmul.f32 %v1031, %v1078
    %v1096 = vadd.f32 %v968, %v1080
    %v1097 = vadd.f32 %v969, %v1081
    %v1098 = vadd.f32 %v970, %v1082
    %v1099 = vadd.f32 %v971, %v1083
    %v1100 = vadd.f32 %v972, %v1084
    %v1101 = vadd.f32 %v973, %v1085
    %v1102 = vadd.f32 %v974, %v1086
    %v1103 = vadd.f32 %v975, %v1087
    %v1104 = vadd.f32 %v976, %v1088
    %v1105 = vadd.f32 %v977, %v1089
    %v1106 = vadd.f32 %v978, %v1090
    %v1107 = vadd.f32 %v979, %v1091
    %v1108 = vadd.f32 %v980, %v1092
    %v1109 = vadd.f32 %v981, %v1093
    %v1110 = vadd.f32 %v982, %v1094
    %v1111 = vadd.f32 %v983, %v1095
    %s1112 = scalar_lea.vmem %s4, 4
    %v1113 = vld [vmem:[%s1112] sm:$0x1]
    %v1115 = vlaneseq
    %v1116 = vshrl.u32 %v1115, 7
    %v1117 = vsub.s32 0, %v1116
    %v1118 = vrot.slane %v1113, %v1117
    %v1120 = vmul.f32 %v375, %v1118
    %v1121 = vmul.f32 %v376, %v1118
    %v1122 = vmul.f32 %v377, %v1118
    %v1123 = vmul.f32 %v378, %v1118
    %v1124 = vmul.f32 %v379, %v1118
    %v1125 = vmul.f32 %v380, %v1118
    %v1126 = vmul.f32 %v381, %v1118
    %v1127 = vmul.f32 %v382, %v1118
    %v1128 = vmul.f32 %v383, %v1118
    %v1129 = vmul.f32 %v384, %v1118
    %v1130 = vmul.f32 %v385, %v1118
    %v1131 = vmul.f32 %v386, %v1118
    %v1132 = vmul.f32 %v387, %v1118
    %v1133 = vmul.f32 %v388, %v1118
    %v1134 = vmul.f32 %v389, %v1118
    %v1135 = vmul.f32 %v390, %v1118
    %v1136 = vadd.f32 %v1056, %v1120
    %v1137 = vadd.f32 %v1057, %v1121
    %v1138 = vadd.f32 %v1058, %v1122
    %v1139 = vadd.f32 %v1059, %v1123
    %v1140 = vadd.f32 %v1060, %v1124
    %v1141 = vadd.f32 %v1061, %v1125
    %v1142 = vadd.f32 %v1062, %v1126
    %v1143 = vadd.f32 %v1063, %v1127
    %v1144 = vadd.f32 %v1064, %v1128
    %v1145 = vadd.f32 %v1065, %v1129
    %v1146 = vadd.f32 %v1066, %v1130
    %v1147 = vadd.f32 %v1067, %v1131
    %v1148 = vadd.f32 %v1068, %v1132
    %v1149 = vadd.f32 %v1069, %v1133
    %v1150 = vadd.f32 %v1070, %v1134
    %v1151 = vadd.f32 %v1071, %v1135
    %s1152 = scalar_lea.vmem %s5, 4
    %v1153 = vld [vmem:[%s1152] sm:$0x1]
    %v1155 = vlaneseq
    %v1156 = vshrl.u32 %v1155, 7
    %v1157 = vsub.s32 0, %v1156
    %v1158 = vrot.slane %v1153, %v1157
    %v1160 = vmul.f32 %v375, %v1158
    %v1161 = vmul.f32 %v376, %v1158
    %v1162 = vmul.f32 %v377, %v1158
    %v1163 = vmul.f32 %v378, %v1158
    %v1164 = vmul.f32 %v379, %v1158
    %v1165 = vmul.f32 %v380, %v1158
    %v1166 = vmul.f32 %v381, %v1158
    %v1167 = vmul.f32 %v382, %v1158
    %v1168 = vmul.f32 %v383, %v1158
    %v1169 = vmul.f32 %v384, %v1158
    %v1170 = vmul.f32 %v385, %v1158
    %v1171 = vmul.f32 %v386, %v1158
    %v1172 = vmul.f32 %v387, %v1158
    %v1173 = vmul.f32 %v388, %v1158
    %v1174 = vmul.f32 %v389, %v1158
    %v1175 = vmul.f32 %v390, %v1158
    %v1176 = vadd.f32 %v1096, %v1160
    %v1177 = vadd.f32 %v1097, %v1161
    %v1178 = vadd.f32 %v1098, %v1162
    %v1179 = vadd.f32 %v1099, %v1163
    %v1180 = vadd.f32 %v1100, %v1164
    %v1181 = vadd.f32 %v1101, %v1165
    %v1182 = vadd.f32 %v1102, %v1166
    %v1183 = vadd.f32 %v1103, %v1167
    %v1184 = vadd.f32 %v1104, %v1168
    %v1185 = vadd.f32 %v1105, %v1169
    %v1186 = vadd.f32 %v1106, %v1170
    %v1187 = vadd.f32 %v1107, %v1171
    %v1188 = vadd.f32 %v1108, %v1172
    %v1189 = vadd.f32 %v1109, %v1173
    %v1190 = vadd.f32 %v1110, %v1174
    %v1191 = vadd.f32 %v1111, %v1175
    %v1192 = vsel %vm488, 1, 0
    %v1193 = vsel %vm489, 1, 0
    %v1194 = vsel %vm490, 1, 0
    %v1195 = vsel %vm491, 1, 0
    %v1196 = vsel %vm492, 1, 0
    %v1197 = vsel %vm493, 1, 0
    %v1198 = vsel %vm494, 1, 0
    %v1199 = vsel %vm495, 1, 0
    %v1200 = vsel %vm496, 1, 0
    %v1201 = vsel %vm497, 1, 0
    %v1202 = vsel %vm498, 1, 0
    %v1203 = vsel %vm499, 1, 0
    %v1204 = vsel %vm500, 1, 0
    %v1205 = vsel %vm501, 1, 0
    %v1206 = vsel %vm502, 1, 0
    %v1207 = vsel %vm503, 1, 0
    %vm1208 = vcmp.eq.s32.totalorder %v1192, 1
    %vm1209 = vcmp.eq.s32.totalorder %v1193, 1
    %vm1210 = vcmp.eq.s32.totalorder %v1194, 1
    %vm1211 = vcmp.eq.s32.totalorder %v1195, 1
    %vm1212 = vcmp.eq.s32.totalorder %v1196, 1
    %vm1213 = vcmp.eq.s32.totalorder %v1197, 1
    %vm1214 = vcmp.eq.s32.totalorder %v1198, 1
    %vm1215 = vcmp.eq.s32.totalorder %v1199, 1
    %vm1216 = vcmp.eq.s32.totalorder %v1200, 1
    %vm1217 = vcmp.eq.s32.totalorder %v1201, 1
    %vm1218 = vcmp.eq.s32.totalorder %v1202, 1
    %vm1219 = vcmp.eq.s32.totalorder %v1203, 1
    %vm1220 = vcmp.eq.s32.totalorder %v1204, 1
    %vm1221 = vcmp.eq.s32.totalorder %v1205, 1
    %vm1222 = vcmp.eq.s32.totalorder %v1206, 1
    %vm1223 = vcmp.eq.s32.totalorder %v1207, 1
    %v1224 = vsel %vm1208, %v838, 0.0
    %v1225 = vsel %vm1209, %v837, 0.0
    %v1226 = vsel %vm1210, %v836, 0.0
    %v1227 = vsel %vm1211, %v835, 0.0
    %v1228 = vsel %vm1212, %v834, 0.0
    %v1229 = vsel %vm1213, %v833, 0.0
    %v1230 = vsel %vm1214, %v832, 0.0
    %v1231 = vsel %vm1215, %v831, 0.0
    %v1232 = vsel %vm1216, %v830, 0.0
    %v1233 = vsel %vm1217, %v829, 0.0
    %v1234 = vsel %vm1218, %v828, 0.0
    %v1235 = vsel %vm1219, %v827, 0.0
    %v1236 = vsel %vm1220, %v826, 0.0
    %v1237 = vsel %vm1221, %v825, 0.0
    %v1238 = vsel %vm1222, %v824, 0.0
    %v1239 = vsel %vm1223, %v839, 0.0
    %s1240 = scalar_lea.vmem %s4, 5
    %v1241 = vld [vmem:[%s1240] sm:$0x1]
    %v1243 = vlaneseq
    %v1244 = vshrl.u32 %v1243, 7
    %v1245 = vsub.s32 0, %v1244
    %v1246 = vrot.slane %v1241, %v1245
    %v1248 = vmul.f32 %v1224, %v1246
    %v1249 = vmul.f32 %v1225, %v1246
    %v1250 = vmul.f32 %v1226, %v1246
    %v1251 = vmul.f32 %v1227, %v1246
    %v1252 = vmul.f32 %v1228, %v1246
    %v1253 = vmul.f32 %v1229, %v1246
    %v1254 = vmul.f32 %v1230, %v1246
    %v1255 = vmul.f32 %v1231, %v1246
    %v1256 = vmul.f32 %v1232, %v1246
    %v1257 = vmul.f32 %v1233, %v1246
    %v1258 = vmul.f32 %v1234, %v1246
    %v1259 = vmul.f32 %v1235, %v1246
    %v1260 = vmul.f32 %v1236, %v1246
    %v1261 = vmul.f32 %v1237, %v1246
    %v1262 = vmul.f32 %v1238, %v1246
    %v1263 = vmul.f32 %v1239, %v1246
    %v1264 = vadd.f32 %v1136, %v1248
    %v1265 = vadd.f32 %v1137, %v1249
    %v1266 = vadd.f32 %v1138, %v1250
    %v1267 = vadd.f32 %v1139, %v1251
    %v1268 = vadd.f32 %v1140, %v1252
    %v1269 = vadd.f32 %v1141, %v1253
    %v1270 = vadd.f32 %v1142, %v1254
    %v1271 = vadd.f32 %v1143, %v1255
    %v1272 = vadd.f32 %v1144, %v1256
    %v1273 = vadd.f32 %v1145, %v1257
    %v1274 = vadd.f32 %v1146, %v1258
    %v1275 = vadd.f32 %v1147, %v1259
    %v1276 = vadd.f32 %v1148, %v1260
    %v1277 = vadd.f32 %v1149, %v1261
    %v1278 = vadd.f32 %v1150, %v1262
    %v1279 = vadd.f32 %v1151, %v1263
    %s1280 = scalar_lea.vmem %s5, 5
    %v1281 = vld [vmem:[%s1280] sm:$0x1]
    %v1283 = vlaneseq
    %v1284 = vshrl.u32 %v1283, 7
    %v1285 = vsub.s32 0, %v1284
    %v1286 = vrot.slane %v1281, %v1285
    %v1288 = vmul.f32 %v1224, %v1286
    %v1289 = vmul.f32 %v1225, %v1286
    %v1290 = vmul.f32 %v1226, %v1286
    %v1291 = vmul.f32 %v1227, %v1286
    %v1292 = vmul.f32 %v1228, %v1286
    %v1293 = vmul.f32 %v1229, %v1286
    %v1294 = vmul.f32 %v1230, %v1286
    %v1295 = vmul.f32 %v1231, %v1286
    %v1296 = vmul.f32 %v1232, %v1286
    %v1297 = vmul.f32 %v1233, %v1286
    %v1298 = vmul.f32 %v1234, %v1286
    %v1299 = vmul.f32 %v1235, %v1286
    %v1300 = vmul.f32 %v1236, %v1286
    %v1301 = vmul.f32 %v1237, %v1286
    %v1302 = vmul.f32 %v1238, %v1286
    %v1303 = vmul.f32 %v1239, %v1286
    %v1304 = vadd.f32 %v1176, %v1288
    %v1305 = vadd.f32 %v1177, %v1289
    %v1306 = vadd.f32 %v1178, %v1290
    %v1307 = vadd.f32 %v1179, %v1291
    %v1308 = vadd.f32 %v1180, %v1292
    %v1309 = vadd.f32 %v1181, %v1293
    %v1310 = vadd.f32 %v1182, %v1294
    %v1311 = vadd.f32 %v1183, %v1295
    %v1312 = vadd.f32 %v1184, %v1296
    %v1313 = vadd.f32 %v1185, %v1297
    %v1314 = vadd.f32 %v1186, %v1298
    %v1315 = vadd.f32 %v1187, %v1299
    %v1316 = vadd.f32 %v1188, %v1300
    %v1317 = vadd.f32 %v1189, %v1301
    %v1318 = vadd.f32 %v1190, %v1302
    %v1319 = vadd.f32 %v1191, %v1303
    %vm1320 = vmand %vm456, %vm472
    %vm1321 = vmand %vm457, %vm473
    %vm1322 = vmand %vm458, %vm474
    %vm1323 = vmand %vm459, %vm475
    %vm1324 = vmand %vm460, %vm476
    %vm1325 = vmand %vm461, %vm477
    %vm1326 = vmand %vm462, %vm478
    %vm1327 = vmand %vm463, %vm479
    %vm1328 = vmand %vm464, %vm480
    %vm1329 = vmand %vm465, %vm481
    %vm1330 = vmand %vm466, %vm482
    %vm1331 = vmand %vm467, %vm483
    %vm1332 = vmand %vm468, %vm484
    %vm1333 = vmand %vm469, %vm485
    %vm1334 = vmand %vm470, %vm486
    %vm1335 = vmand %vm471, %vm487
    %v1336 = vsel %vm1320, 1, 0
    %v1337 = vsel %vm1321, 1, 0
    %v1338 = vsel %vm1322, 1, 0
    %v1339 = vsel %vm1323, 1, 0
    %v1340 = vsel %vm1324, 1, 0
    %v1341 = vsel %vm1325, 1, 0
    %v1342 = vsel %vm1326, 1, 0
    %v1343 = vsel %vm1327, 1, 0
    %v1344 = vsel %vm1328, 1, 0
    %v1345 = vsel %vm1329, 1, 0
    %v1346 = vsel %vm1330, 1, 0
    %v1347 = vsel %vm1331, 1, 0
    %v1348 = vsel %vm1332, 1, 0
    %v1349 = vsel %vm1333, 1, 0
    %v1350 = vsel %vm1334, 1, 0
    %v1351 = vsel %vm1335, 1, 0
    %vm1352 = vcmp.eq.s32.totalorder %v1336, 1
    %vm1353 = vcmp.eq.s32.totalorder %v1337, 1
    %vm1354 = vcmp.eq.s32.totalorder %v1338, 1
    %vm1355 = vcmp.eq.s32.totalorder %v1339, 1
    %vm1356 = vcmp.eq.s32.totalorder %v1340, 1
    %vm1357 = vcmp.eq.s32.totalorder %v1341, 1
    %vm1358 = vcmp.eq.s32.totalorder %v1342, 1
    %vm1359 = vcmp.eq.s32.totalorder %v1343, 1
    %vm1360 = vcmp.eq.s32.totalorder %v1344, 1
    %vm1361 = vcmp.eq.s32.totalorder %v1345, 1
    %vm1362 = vcmp.eq.s32.totalorder %v1346, 1
    %vm1363 = vcmp.eq.s32.totalorder %v1347, 1
    %vm1364 = vcmp.eq.s32.totalorder %v1348, 1
    %vm1365 = vcmp.eq.s32.totalorder %v1349, 1
    %vm1366 = vcmp.eq.s32.totalorder %v1350, 1
    %vm1367 = vcmp.eq.s32.totalorder %v1351, 1
    %v1368 = vsel %vm1352, %v535, 0.0
    %v1369 = vsel %vm1353, %v534, 0.0
    %v1370 = vsel %vm1354, %v533, 0.0
    %v1371 = vsel %vm1355, %v532, 0.0
    %v1372 = vsel %vm1356, %v531, 0.0
    %v1373 = vsel %vm1357, %v530, 0.0
    %v1374 = vsel %vm1358, %v529, 0.0
    %v1375 = vsel %vm1359, %v528, 0.0
    %v1376 = vsel %vm1360, %v527, 0.0
    %v1377 = vsel %vm1361, %v526, 0.0
    %v1378 = vsel %vm1362, %v525, 0.0
    %v1379 = vsel %vm1363, %v524, 0.0
    %v1380 = vsel %vm1364, %v523, 0.0
    %v1381 = vsel %vm1365, %v522, 0.0
    %v1382 = vsel %vm1366, %v521, 0.0
    %v1383 = vsel %vm1367, %v536, 0.0
    %s1384 = scalar_lea.vmem %s4, 6
    %v1385 = vld [vmem:[%s1384] sm:$0x1]
    %v1387 = vlaneseq
    %v1388 = vshrl.u32 %v1387, 7
    %v1389 = vsub.s32 0, %v1388
    %v1390 = vrot.slane %v1385, %v1389
    %v1392 = vmul.f32 %v1368, %v1390
    %v1393 = vmul.f32 %v1369, %v1390
    %v1394 = vmul.f32 %v1370, %v1390
    %v1395 = vmul.f32 %v1371, %v1390
    %v1396 = vmul.f32 %v1372, %v1390
    %v1397 = vmul.f32 %v1373, %v1390
    %v1398 = vmul.f32 %v1374, %v1390
    %v1399 = vmul.f32 %v1375, %v1390
    %v1400 = vmul.f32 %v1376, %v1390
    %v1401 = vmul.f32 %v1377, %v1390
    %v1402 = vmul.f32 %v1378, %v1390
    %v1403 = vmul.f32 %v1379, %v1390
    %v1404 = vmul.f32 %v1380, %v1390
    %v1405 = vmul.f32 %v1381, %v1390
    %v1406 = vmul.f32 %v1382, %v1390
    %v1407 = vmul.f32 %v1383, %v1390
    %v1408 = vadd.f32 %v1264, %v1392
    %v1409 = vadd.f32 %v1265, %v1393
    %v1410 = vadd.f32 %v1266, %v1394
    %v1411 = vadd.f32 %v1267, %v1395
    %v1412 = vadd.f32 %v1268, %v1396
    %v1413 = vadd.f32 %v1269, %v1397
    %v1414 = vadd.f32 %v1270, %v1398
    %v1415 = vadd.f32 %v1271, %v1399
    %v1416 = vadd.f32 %v1272, %v1400
    %v1417 = vadd.f32 %v1273, %v1401
    %v1418 = vadd.f32 %v1274, %v1402
    %v1419 = vadd.f32 %v1275, %v1403
    %v1420 = vadd.f32 %v1276, %v1404
    %v1421 = vadd.f32 %v1277, %v1405
    %v1422 = vadd.f32 %v1278, %v1406
    %v1423 = vadd.f32 %v1279, %v1407
    %s1424 = scalar_lea.vmem %s5, 6
    %v1425 = vld [vmem:[%s1424] sm:$0x1]
    %v1427 = vlaneseq
    %v1428 = vshrl.u32 %v1427, 7
    %v1429 = vsub.s32 0, %v1428
    %v1430 = vrot.slane %v1425, %v1429
    %v1432 = vmul.f32 %v1368, %v1430
    %v1433 = vmul.f32 %v1369, %v1430
    %v1434 = vmul.f32 %v1370, %v1430
    %v1435 = vmul.f32 %v1371, %v1430
    %v1436 = vmul.f32 %v1372, %v1430
    %v1437 = vmul.f32 %v1373, %v1430
    %v1438 = vmul.f32 %v1374, %v1430
    %v1439 = vmul.f32 %v1375, %v1430
    %v1440 = vmul.f32 %v1376, %v1430
    %v1441 = vmul.f32 %v1377, %v1430
    %v1442 = vmul.f32 %v1378, %v1430
    %v1443 = vmul.f32 %v1379, %v1430
    %v1444 = vmul.f32 %v1380, %v1430
    %v1445 = vmul.f32 %v1381, %v1430
    %v1446 = vmul.f32 %v1382, %v1430
    %v1447 = vmul.f32 %v1383, %v1430
    %v1448 = vadd.f32 %v1304, %v1432
    %v1449 = vadd.f32 %v1305, %v1433
    %v1450 = vadd.f32 %v1306, %v1434
    %v1451 = vadd.f32 %v1307, %v1435
    %v1452 = vadd.f32 %v1308, %v1436
    %v1453 = vadd.f32 %v1309, %v1437
    %v1454 = vadd.f32 %v1310, %v1438
    %v1455 = vadd.f32 %v1311, %v1439
    %v1456 = vadd.f32 %v1312, %v1440
    %v1457 = vadd.f32 %v1313, %v1441
    %v1458 = vadd.f32 %v1314, %v1442
    %v1459 = vadd.f32 %v1315, %v1443
    %v1460 = vadd.f32 %v1316, %v1444
    %v1461 = vadd.f32 %v1317, %v1445
    %v1462 = vadd.f32 %v1318, %v1446
    %v1463 = vadd.f32 %v1319, %v1447
    %v1464 = vsel %vm456, 1, 0
    %v1465 = vsel %vm457, 1, 0
    %v1466 = vsel %vm458, 1, 0
    %v1467 = vsel %vm459, 1, 0
    %v1468 = vsel %vm460, 1, 0
    %v1469 = vsel %vm461, 1, 0
    %v1470 = vsel %vm462, 1, 0
    %v1471 = vsel %vm463, 1, 0
    %v1472 = vsel %vm464, 1, 0
    %v1473 = vsel %vm465, 1, 0
    %v1474 = vsel %vm466, 1, 0
    %v1475 = vsel %vm467, 1, 0
    %v1476 = vsel %vm468, 1, 0
    %v1477 = vsel %vm469, 1, 0
    %v1478 = vsel %vm470, 1, 0
    %v1479 = vsel %vm471, 1, 0
    %vm1480 = vcmp.eq.s32.totalorder %v1464, 1
    %vm1481 = vcmp.eq.s32.totalorder %v1465, 1
    %vm1482 = vcmp.eq.s32.totalorder %v1466, 1
    %vm1483 = vcmp.eq.s32.totalorder %v1467, 1
    %vm1484 = vcmp.eq.s32.totalorder %v1468, 1
    %vm1485 = vcmp.eq.s32.totalorder %v1469, 1
    %vm1486 = vcmp.eq.s32.totalorder %v1470, 1
    %vm1487 = vcmp.eq.s32.totalorder %v1471, 1
    %vm1488 = vcmp.eq.s32.totalorder %v1472, 1
    %vm1489 = vcmp.eq.s32.totalorder %v1473, 1
    %vm1490 = vcmp.eq.s32.totalorder %v1474, 1
    %vm1491 = vcmp.eq.s32.totalorder %v1475, 1
    %vm1492 = vcmp.eq.s32.totalorder %v1476, 1
    %vm1493 = vcmp.eq.s32.totalorder %v1477, 1
    %vm1494 = vcmp.eq.s32.totalorder %v1478, 1
    %vm1495 = vcmp.eq.s32.totalorder %v1479, 1
    %v1496 = vsel %vm1480, %v376, 0.0
    %v1497 = vsel %vm1481, %v377, 0.0
    %v1498 = vsel %vm1482, %v378, 0.0
    %v1499 = vsel %vm1483, %v379, 0.0
    %v1500 = vsel %vm1484, %v380, 0.0
    %v1501 = vsel %vm1485, %v381, 0.0
    %v1502 = vsel %vm1486, %v382, 0.0
    %v1503 = vsel %vm1487, %v383, 0.0
    %v1504 = vsel %vm1488, %v384, 0.0
    %v1505 = vsel %vm1489, %v385, 0.0
    %v1506 = vsel %vm1490, %v386, 0.0
    %v1507 = vsel %vm1491, %v387, 0.0
    %v1508 = vsel %vm1492, %v388, 0.0
    %v1509 = vsel %vm1493, %v389, 0.0
    %v1510 = vsel %vm1494, %v390, 0.0
    %v1511 = vsel %vm1495, %v375, 0.0
    %s1512 = scalar_lea.vmem %s4, 7
    %v1513 = vld [vmem:[%s1512] sm:$0x1]
    %v1515 = vlaneseq
    %v1516 = vshrl.u32 %v1515, 7
    %v1517 = vsub.s32 0, %v1516
    %v1518 = vrot.slane %v1513, %v1517
    %v1520 = vmul.f32 %v1496, %v1518
    %v1521 = vmul.f32 %v1497, %v1518
    %v1522 = vmul.f32 %v1498, %v1518
    %v1523 = vmul.f32 %v1499, %v1518
    %v1524 = vmul.f32 %v1500, %v1518
    %v1525 = vmul.f32 %v1501, %v1518
    %v1526 = vmul.f32 %v1502, %v1518
    %v1527 = vmul.f32 %v1503, %v1518
    %v1528 = vmul.f32 %v1504, %v1518
    %v1529 = vmul.f32 %v1505, %v1518
    %v1530 = vmul.f32 %v1506, %v1518
    %v1531 = vmul.f32 %v1507, %v1518
    %v1532 = vmul.f32 %v1508, %v1518
    %v1533 = vmul.f32 %v1509, %v1518
    %v1534 = vmul.f32 %v1510, %v1518
    %v1535 = vmul.f32 %v1511, %v1518
    %v1536 = vadd.f32 %v1408, %v1520
    %v1537 = vadd.f32 %v1409, %v1521
    %v1538 = vadd.f32 %v1410, %v1522
    %v1539 = vadd.f32 %v1411, %v1523
    %v1540 = vadd.f32 %v1412, %v1524
    %v1541 = vadd.f32 %v1413, %v1525
    %v1542 = vadd.f32 %v1414, %v1526
    %v1543 = vadd.f32 %v1415, %v1527
    %v1544 = vadd.f32 %v1416, %v1528
    %v1545 = vadd.f32 %v1417, %v1529
    %v1546 = vadd.f32 %v1418, %v1530
    %v1547 = vadd.f32 %v1419, %v1531
    %v1548 = vadd.f32 %v1420, %v1532
    %v1549 = vadd.f32 %v1421, %v1533
    %v1550 = vadd.f32 %v1422, %v1534
    %v1551 = vadd.f32 %v1423, %v1535
    %s1552 = scalar_lea.vmem %s5, 7
    %v1553 = vld [vmem:[%s1552] sm:$0x1]
    %v1555 = vlaneseq
    %v1556 = vshrl.u32 %v1555, 7
    %v1557 = vsub.s32 0, %v1556
    %v1558 = vrot.slane %v1553, %v1557
    %v1560 = vmul.f32 %v1496, %v1558
    %v1561 = vmul.f32 %v1497, %v1558
    %v1562 = vmul.f32 %v1498, %v1558
    %v1563 = vmul.f32 %v1499, %v1558
    %v1564 = vmul.f32 %v1500, %v1558
    %v1565 = vmul.f32 %v1501, %v1558
    %v1566 = vmul.f32 %v1502, %v1558
    %v1567 = vmul.f32 %v1503, %v1558
    %v1568 = vmul.f32 %v1504, %v1558
    %v1569 = vmul.f32 %v1505, %v1558
    %v1570 = vmul.f32 %v1506, %v1558
    %v1571 = vmul.f32 %v1507, %v1558
    %v1572 = vmul.f32 %v1508, %v1558
    %v1573 = vmul.f32 %v1509, %v1558
    %v1574 = vmul.f32 %v1510, %v1558
    %v1575 = vmul.f32 %v1511, %v1558
    %v1576 = vadd.f32 %v1448, %v1560
    %v1577 = vadd.f32 %v1449, %v1561
    %v1578 = vadd.f32 %v1450, %v1562
    %v1579 = vadd.f32 %v1451, %v1563
    %v1580 = vadd.f32 %v1452, %v1564
    %v1581 = vadd.f32 %v1453, %v1565
    %v1582 = vadd.f32 %v1454, %v1566
    %v1583 = vadd.f32 %v1455, %v1567
    %v1584 = vadd.f32 %v1456, %v1568
    %v1585 = vadd.f32 %v1457, %v1569
    %v1586 = vadd.f32 %v1458, %v1570
    %v1587 = vadd.f32 %v1459, %v1571
    %v1588 = vadd.f32 %v1460, %v1572
    %v1589 = vadd.f32 %v1461, %v1573
    %v1590 = vadd.f32 %v1462, %v1574
    %v1591 = vadd.f32 %v1463, %v1575
    %vm1592 = vmand %vm456, %vm488
    %vm1593 = vmand %vm457, %vm489
    %vm1594 = vmand %vm458, %vm490
    %vm1595 = vmand %vm459, %vm491
    %vm1596 = vmand %vm460, %vm492
    %vm1597 = vmand %vm461, %vm493
    %vm1598 = vmand %vm462, %vm494
    %vm1599 = vmand %vm463, %vm495
    %vm1600 = vmand %vm464, %vm496
    %vm1601 = vmand %vm465, %vm497
    %vm1602 = vmand %vm466, %vm498
    %vm1603 = vmand %vm467, %vm499
    %vm1604 = vmand %vm468, %vm500
    %vm1605 = vmand %vm469, %vm501
    %vm1606 = vmand %vm470, %vm502
    %vm1607 = vmand %vm471, %vm503
    %v1608 = vsel %vm1592, 1, 0
    %v1609 = vsel %vm1593, 1, 0
    %v1610 = vsel %vm1594, 1, 0
    %v1611 = vsel %vm1595, 1, 0
    %v1612 = vsel %vm1596, 1, 0
    %v1613 = vsel %vm1597, 1, 0
    %v1614 = vsel %vm1598, 1, 0
    %v1615 = vsel %vm1599, 1, 0
    %v1616 = vsel %vm1600, 1, 0
    %v1617 = vsel %vm1601, 1, 0
    %v1618 = vsel %vm1602, 1, 0
    %v1619 = vsel %vm1603, 1, 0
    %v1620 = vsel %vm1604, 1, 0
    %v1621 = vsel %vm1605, 1, 0
    %v1622 = vsel %vm1606, 1, 0
    %v1623 = vsel %vm1607, 1, 0
    %vm1624 = vcmp.eq.s32.totalorder %v1608, 1
    %vm1625 = vcmp.eq.s32.totalorder %v1609, 1
    %vm1626 = vcmp.eq.s32.totalorder %v1610, 1
    %vm1627 = vcmp.eq.s32.totalorder %v1611, 1
    %vm1628 = vcmp.eq.s32.totalorder %v1612, 1
    %vm1629 = vcmp.eq.s32.totalorder %v1613, 1
    %vm1630 = vcmp.eq.s32.totalorder %v1614, 1
    %vm1631 = vcmp.eq.s32.totalorder %v1615, 1
    %vm1632 = vcmp.eq.s32.totalorder %v1616, 1
    %vm1633 = vcmp.eq.s32.totalorder %v1617, 1
    %vm1634 = vcmp.eq.s32.totalorder %v1618, 1
    %vm1635 = vcmp.eq.s32.totalorder %v1619, 1
    %vm1636 = vcmp.eq.s32.totalorder %v1620, 1
    %vm1637 = vcmp.eq.s32.totalorder %v1621, 1
    %vm1638 = vcmp.eq.s32.totalorder %v1622, 1
    %vm1639 = vcmp.eq.s32.totalorder %v1623, 1
    %v1640 = vsel %vm1624, %v837, 0.0
    %v1641 = vsel %vm1625, %v836, 0.0
    %v1642 = vsel %vm1626, %v835, 0.0
    %v1643 = vsel %vm1627, %v834, 0.0
    %v1644 = vsel %vm1628, %v833, 0.0
    %v1645 = vsel %vm1629, %v832, 0.0
    %v1646 = vsel %vm1630, %v831, 0.0
    %v1647 = vsel %vm1631, %v830, 0.0
    %v1648 = vsel %vm1632, %v829, 0.0
    %v1649 = vsel %vm1633, %v828, 0.0
    %v1650 = vsel %vm1634, %v827, 0.0
    %v1651 = vsel %vm1635, %v826, 0.0
    %v1652 = vsel %vm1636, %v825, 0.0
    %v1653 = vsel %vm1637, %v824, 0.0
    %v1654 = vsel %vm1638, %v839, 0.0
    %v1655 = vsel %vm1639, %v838, 0.0
    %s1656 = scalar_lea.vmem %s4, 8
    %v1657 = vld [vmem:[%s1656] sm:$0x1]
    %v1659 = vlaneseq
    %v1660 = vshrl.u32 %v1659, 7
    %v1661 = vsub.s32 0, %v1660
    %v1662 = vrot.slane %v1657, %v1661
    %v1664 = vmul.f32 %v1640, %v1662
    %v1665 = vmul.f32 %v1641, %v1662
    %v1666 = vmul.f32 %v1642, %v1662
    %v1667 = vmul.f32 %v1643, %v1662
    %v1668 = vmul.f32 %v1644, %v1662
    %v1669 = vmul.f32 %v1645, %v1662
    %v1670 = vmul.f32 %v1646, %v1662
    %v1671 = vmul.f32 %v1647, %v1662
    %v1672 = vmul.f32 %v1648, %v1662
    %v1673 = vmul.f32 %v1649, %v1662
    %v1674 = vmul.f32 %v1650, %v1662
    %v1675 = vmul.f32 %v1651, %v1662
    %v1676 = vmul.f32 %v1652, %v1662
    %v1677 = vmul.f32 %v1653, %v1662
    %v1678 = vmul.f32 %v1654, %v1662
    %v1679 = vmul.f32 %v1655, %v1662
    %v1680 = vadd.f32 %v1536, %v1664
    %v1681 = vadd.f32 %v1537, %v1665
    %v1682 = vadd.f32 %v1538, %v1666
    %v1683 = vadd.f32 %v1539, %v1667
    %v1684 = vadd.f32 %v1540, %v1668
    %v1685 = vadd.f32 %v1541, %v1669
    %v1686 = vadd.f32 %v1542, %v1670
    %v1687 = vadd.f32 %v1543, %v1671
    %v1688 = vadd.f32 %v1544, %v1672
    %v1689 = vadd.f32 %v1545, %v1673
    %v1690 = vadd.f32 %v1546, %v1674
    %v1691 = vadd.f32 %v1547, %v1675
    %v1692 = vadd.f32 %v1548, %v1676
    %v1693 = vadd.f32 %v1549, %v1677
    %v1694 = vadd.f32 %v1550, %v1678
    %v1695 = vadd.f32 %v1551, %v1679
    %s1696 = scalar_lea.vmem %s5, 8
    %v1697 = vld [vmem:[%s1696] sm:$0x1]
    %v1699 = vlaneseq
    %v1700 = vshrl.u32 %v1699, 7
    %v1701 = vsub.s32 0, %v1700
    %v1702 = vrot.slane %v1697, %v1701
    %v1704 = vmul.f32 %v1640, %v1702
    %v1705 = vmul.f32 %v1641, %v1702
    %v1706 = vmul.f32 %v1642, %v1702
    %v1707 = vmul.f32 %v1643, %v1702
    %v1708 = vmul.f32 %v1644, %v1702
    %v1709 = vmul.f32 %v1645, %v1702
    %v1710 = vmul.f32 %v1646, %v1702
    %v1711 = vmul.f32 %v1647, %v1702
    %v1712 = vmul.f32 %v1648, %v1702
    %v1713 = vmul.f32 %v1649, %v1702
    %v1714 = vmul.f32 %v1650, %v1702
    %v1715 = vmul.f32 %v1651, %v1702
    %v1716 = vmul.f32 %v1652, %v1702
    %v1717 = vmul.f32 %v1653, %v1702
    %v1718 = vmul.f32 %v1654, %v1702
    %v1719 = vmul.f32 %v1655, %v1702
    %v1720 = vadd.f32 %v1576, %v1704
    %v1721 = vadd.f32 %v1577, %v1705
    %v1722 = vadd.f32 %v1578, %v1706
    %v1723 = vadd.f32 %v1579, %v1707
    %v1724 = vadd.f32 %v1580, %v1708
    %v1725 = vadd.f32 %v1581, %v1709
    %v1726 = vadd.f32 %v1582, %v1710
    %v1727 = vadd.f32 %v1583, %v1711
    %v1728 = vadd.f32 %v1584, %v1712
    %v1729 = vadd.f32 %v1585, %v1713
    %v1730 = vadd.f32 %v1586, %v1714
    %v1731 = vadd.f32 %v1587, %v1715
    %v1732 = vadd.f32 %v1588, %v1716
    %v1733 = vadd.f32 %v1589, %v1717
    %v1734 = vadd.f32 %v1590, %v1718
    %v1735 = vadd.f32 %v1591, %v1719
    %v1736 = vld [vmem:[#allocation7] sm:$0xff]
    %v1737 = vld [vmem:[#allocation7 + $0x8] sm:$0xff]
    %v1738 = vld [vmem:[#allocation7 + $0x10] sm:$0xff]
    %v1739 = vld [vmem:[#allocation7 + $0x18] sm:$0xff]
    %v1740 = vld [vmem:[#allocation7 + $0x20] sm:$0xff]
    %v1741 = vld [vmem:[#allocation7 + $0x28] sm:$0xff]
    %v1742 = vld [vmem:[#allocation7 + $0x30] sm:$0xff]
    %v1743 = vld [vmem:[#allocation7 + $0x38] sm:$0xff]
    %v1745 = vsel %vm135, %v1720, 0
    %v1748 = vsel %vm135, %v1721, 0
    %v1751 = vsel %vm135, %v1722, 0
    %v1754 = vsel %vm135, %v1723, 0
    %v1757 = vsel %vm135, %v1724, 0
    %v1760 = vsel %vm135, %v1725, 0
    %v1763 = vsel %vm135, %v1726, 0
    %v1766 = vsel %vm135, %v1727, 0
    %v1769 = vsel %vm135, %v1728, 0
    %v1772 = vsel %vm135, %v1729, 0
    %v1775 = vsel %vm135, %v1730, 0
    %v1778 = vsel %vm135, %v1731, 0
    %v1781 = vsel %vm135, %v1732, 0
    %v1784 = vsel %vm135, %v1733, 0
    %v1787 = vsel %vm135, %v1734, 0
    %v1790 = vsel %vm135, %v1735, 0
    %1792 = vmatprep.subr.mxu0 0.0
    %1793 = vmatpush1.msra.mxu0 %v1736
    %1794 = vmatprep.subr.mxu0 0.0
    %1795 = vmatpush1.msra.mxu0 %v1737
    %1796 = vmatprep.subr.mxu0 0.0
    %1797 = vmatpush1.msra.mxu0 %v1738
    %1798 = vmatprep.subr.mxu0 0.0
    %1799 = vmatpush1.msra.mxu0 %v1739
    %1800 = vmatprep.subr.mxu0 0.0
    %1801 = vmatpush1.msra.mxu0 %v1740
    %1802 = vmatprep.subr.mxu0 0.0
    %1803 = vmatpush1.msra.mxu0 %v1741
    %1804 = vmatprep.subr.mxu0 0.0
    %1805 = vmatpush1.msra.mxu0 %v1742
    %1806 = vmatprep.subr.mxu0 0.0
    %1807 = vmatpush1.msra.mxu0 %v1743
    %1808 = vmatprep.subr.mxu0 0.0
    %1809 = vmatpush1.msra.mxu0 0.0
    %1810 = vmatprep.subr.mxu0 0.0
    %1811 = vmatpush1.msra.mxu0 0.0
    %1812 = vmatprep.subr.mxu0 0.0
    %1813 = vmatpush1.msra.mxu0 0.0
    %1814 = vmatprep.subr.mxu0 0.0
    %1815 = vmatpush1.msra.mxu0 0.0
    %1816 = vmatprep.subr.mxu0 0.0
    %1817 = vmatpush1.msra.mxu0 0.0
    %1818 = vmatprep.subr.mxu0 0.0
    %1819 = vmatpush1.msra.mxu0 0.0
    %1820 = vmatprep.subr.mxu0 0.0
    %1821 = vmatpush1.msra.mxu0 0.0
    %1822 = vmatprep.subr.mxu0 0.0
    %1823 = vmatpush1.msra.mxu0 0.0
    %1824 = vmatprep.subr.mxu0 0.0
    %1825 = vmatpush1.msra.mxu0 0.0
    %1826 = vmatprep.subr.mxu0 0.0
    %1827 = vmatpush1.msra.mxu0 0.0
    %1828 = vmatprep.subr.mxu0 0.0
    %1829 = vmatpush1.msra.mxu0 0.0
    %1830 = vmatprep.subr.mxu0 0.0
    %1831 = vmatpush1.msra.mxu0 0.0
    %1832 = vmatprep.subr.mxu0 0.0
    %1833 = vmatpush1.msra.mxu0 0.0
    %1834 = vmatprep.subr.mxu0 0.0
    %1835 = vmatpush1.msra.mxu0 0.0
    %1836 = vmatprep.subr.mxu0 0.0
    %1837 = vmatpush1.msra.mxu0 0.0
    %1838 = vmatprep.subr.mxu0 0.0
    %1839 = vmatpush1.msra.mxu0 0.0
    %1840 = vmatprep.subr.mxu0 0.0
    %1841 = vmatpush1.msra.mxu0 0.0
    %1842 = vmatprep.subr.mxu0 0.0
    %1843 = vmatpush1.msra.mxu0 0.0
    %1844 = vmatprep.subr.mxu0 0.0
    %1845 = vmatpush1.msra.mxu0 0.0
    %1846 = vmatprep.subr.mxu0 0.0
    %1847 = vmatpush1.msra.mxu0 0.0
    %1848 = vmatprep.subr.mxu0 0.0
    %1849 = vmatpush1.msra.mxu0 0.0
    %1850 = vmatprep.subr.mxu0 0.0
    %1851 = vmatpush1.msra.mxu0 0.0
    %1852 = vmatprep.subr.mxu0 0.0
    %1853 = vmatpush1.msra.mxu0 0.0
    %1854 = vmatprep.subr.mxu0 0.0
    %1855 = vmatpush1.msra.mxu0 0.0
    %1856 = vmatprep.mubr.f32.mxu0 0.0
    %1857 = vmatmul.mubr.f32.gmra.mrb[0].mxu0 %v1745
    %v1858 = vpop.f32.mrb[0].mxu0
    %v1859 = vadd.f32 0.0, %v1858
    %v1860 = vpop.f32.mrb[0].mxu0
    %1861 = vmatprep.mubr.f32.mxu0 0.0
    %1862 = vmatmul.mubr.f32.gmra.mrb[0].mxu0 %v1748
    %v1863 = vpop.f32.mrb[0].mxu0
    %v1864 = vadd.f32 0.0, %v1863
    %v1865 = vpop.f32.mrb[0].mxu0
    %1866 = vmatprep.mubr.f32.mxu0 0.0
    %1867 = vmatmul.mubr.f32.gmra.mrb[0].mxu0 %v1751
    %v1868 = vpop.f32.mrb[0].mxu0
    %v1869 = vadd.f32 0.0, %v1868
    %v1870 = vpop.f32.mrb[0].mxu0
    %1871 = vmatprep.mubr.f32.mxu0 0.0
    %1872 = vmatmul.mubr.f32.gmra.mrb[0].mxu0 %v1754
    %v1873 = vpop.f32.mrb[0].mxu0
    %v1874 = vadd.f32 0.0, %v1873
    %v1875 = vpop.f32.mrb[0].mxu0
    %1876 = vmatprep.mubr.f32.mxu0 0.0
    %1877 = vmatmul.mubr.f32.gmra.mrb[0].mxu0 %v1757
    %v1878 = vpop.f32.mrb[0].mxu0
    %v1879 = vadd.f32 0.0, %v1878
    %v1880 = vpop.f32.mrb[0].mxu0
    %1881 = vmatprep.mubr.f32.mxu0 0.0
    %1882 = vmatmul.mubr.f32.gmra.mrb[0].mxu0 %v1760
    %v1883 = vpop.f32.mrb[0].mxu0
    %v1884 = vadd.f32 0.0, %v1883
    %v1885 = vpop.f32.mrb[0].mxu0
    %1886 = vmatprep.mubr.f32.mxu0 0.0
    %1887 = vmatmul.mubr.f32.gmra.mrb[0].mxu0 %v1763
    %v1888 = vpop.f32.mrb[0].mxu0
    %v1889 = vadd.f32 0.0, %v1888
    %v1890 = vpop.f32.mrb[0].mxu0
    %1891 = vmatprep.mubr.f32.mxu0 0.0
    %1892 = vmatmul.mubr.f32.gmra.mrb[0].mxu0 %v1766
    %v1893 = vpop.f32.mrb[0].mxu0
    %v1894 = vadd.f32 0.0, %v1893
    %v1895 = vpop.f32.mrb[0].mxu0
    %1896 = vmatprep.mubr.f32.mxu0 0.0
    %1897 = vmatmul.mubr.f32.gmra.mrb[0].mxu0 %v1769
    %v1898 = vpop.f32.mrb[0].mxu0
    %v1899 = vadd.f32 0.0, %v1898
    %v1900 = vpop.f32.mrb[0].mxu0
    %1901 = vmatprep.mubr.f32.mxu0 0.0
    %1902 = vmatmul.mubr.f32.gmra.mrb[0].mxu0 %v1772
    %v1903 = vpop.f32.mrb[0].mxu0
    %v1904 = vadd.f32 0.0, %v1903
    %v1905 = vpop.f32.mrb[0].mxu0
    %1906 = vmatprep.mubr.f32.mxu0 0.0
    %1907 = vmatmul.mubr.f32.gmra.mrb[0].mxu0 %v1775
    %v1908 = vpop.f32.mrb[0].mxu0
    %v1909 = vadd.f32 0.0, %v1908
    %v1910 = vpop.f32.mrb[0].mxu0
    %1911 = vmatprep.mubr.f32.mxu0 0.0
    %1912 = vmatmul.mubr.f32.gmra.mrb[0].mxu0 %v1778
    %v1913 = vpop.f32.mrb[0].mxu0
    %v1914 = vadd.f32 0.0, %v1913
    %v1915 = vpop.f32.mrb[0].mxu0
    %1916 = vmatprep.mubr.f32.mxu0 0.0
    %1917 = vmatmul.mubr.f32.gmra.mrb[0].mxu0 %v1781
    %v1918 = vpop.f32.mrb[0].mxu0
    %v1919 = vadd.f32 0.0, %v1918
    %v1920 = vpop.f32.mrb[0].mxu0
    %1921 = vmatprep.mubr.f32.mxu0 0.0
    %1922 = vmatmul.mubr.f32.gmra.mrb[0].mxu0 %v1784
    %v1923 = vpop.f32.mrb[0].mxu0
    %v1924 = vadd.f32 0.0, %v1923
    %v1925 = vpop.f32.mrb[0].mxu0
    %1926 = vmatprep.mubr.f32.mxu0 0.0
    %1927 = vmatmul.mubr.f32.gmra.mrb[0].mxu0 %v1787
    %v1928 = vpop.f32.mrb[0].mxu0
    %v1929 = vadd.f32 0.0, %v1928
    %v1930 = vpop.f32.mrb[0].mxu0
    %1931 = vmatprep.mubr.f32.mxu0 0.0
    %1932 = vmatmul.mubr.f32.gmra.mrb[0].mxu0 %v1790
    %v1933 = vpop.f32.mrb[0].mxu0
    %v1934 = vadd.f32 0.0, %v1933
    %v1935 = vpop.f32.mrb[0].mxu0
    %1936 = vdwg.mxu0
    %v1937 = vadd.f32 %v1680, %v1859
    %v1938 = vadd.f32 %v1681, %v1864
    %v1939 = vadd.f32 %v1682, %v1869
    %v1940 = vadd.f32 %v1683, %v1874
    %v1941 = vadd.f32 %v1684, %v1879
    %v1942 = vadd.f32 %v1685, %v1884
    %v1943 = vadd.f32 %v1686, %v1889
    %v1944 = vadd.f32 %v1687, %v1894
    %v1945 = vadd.f32 %v1688, %v1899
    %v1946 = vadd.f32 %v1689, %v1904
    %v1947 = vadd.f32 %v1690, %v1909
    %v1948 = vadd.f32 %v1691, %v1914
    %v1949 = vadd.f32 %v1692, %v1919
    %v1950 = vadd.f32 %v1693, %v1924
    %v1951 = vadd.f32 %v1694, %v1929
    %v1952 = vadd.f32 %v1695, %v1934
    %v1953 = vld [vmem:[%s7] sm:$0x1]
    %v1955 = vlaneseq
    %v1956 = vshrl.u32 %v1955, 7
    %v1957 = vsub.s32 0, %v1956
    %v1958 = vrot.slane %v1953, %v1957
    %v1960 = vmul.f32 %v1937, %v1958
    %v1961 = vmul.f32 %v1938, %v1958
    %v1962 = vmul.f32 %v1939, %v1958
    %v1963 = vmul.f32 %v1940, %v1958
    %v1964 = vmul.f32 %v1941, %v1958
    %v1965 = vmul.f32 %v1942, %v1958
    %v1966 = vmul.f32 %v1943, %v1958
    %v1967 = vmul.f32 %v1944, %v1958
    %v1968 = vmul.f32 %v1945, %v1958
    %v1969 = vmul.f32 %v1946, %v1958
    %v1970 = vmul.f32 %v1947, %v1958
    %v1971 = vmul.f32 %v1948, %v1958
    %v1972 = vmul.f32 %v1949, %v1958
    %v1973 = vmul.f32 %v1950, %v1958
    %v1974 = vmul.f32 %v1951, %v1958
    %v1975 = vmul.f32 %v1952, %v1958
    %v1976 = vld [vmem:[%s8] sm:$0x1]
    %v1978 = vlaneseq
    %v1979 = vshrl.u32 %v1978, 7
    %v1980 = vsub.s32 0, %v1979
    %v1981 = vrot.slane %v1976, %v1980
    %v1983 = vadd.f32 %v1960, %v1981
    %v1984 = vadd.f32 %v1961, %v1981
    %v1985 = vadd.f32 %v1962, %v1981
    %v1986 = vadd.f32 %v1963, %v1981
    %v1987 = vadd.f32 %v1964, %v1981
    %v1988 = vadd.f32 %v1965, %v1981
    %v1989 = vadd.f32 %v1966, %v1981
    %v1990 = vadd.f32 %v1967, %v1981
    %v1991 = vadd.f32 %v1968, %v1981
    %v1992 = vadd.f32 %v1969, %v1981
    %v1993 = vadd.f32 %v1970, %v1981
    %v1994 = vadd.f32 %v1971, %v1981
    %v1995 = vadd.f32 %v1972, %v1981
    %v1996 = vadd.f32 %v1973, %v1981
    %v1997 = vadd.f32 %v1974, %v1981
    %v1998 = vadd.f32 %v1975, %v1981
    %v1999 = vmax.f32 %v1983, 0.0
    %v2000 = vmax.f32 %v1984, 0.0
    %v2001 = vmax.f32 %v1985, 0.0
    %v2002 = vmax.f32 %v1986, 0.0
    %v2003 = vmax.f32 %v1987, 0.0
    %v2004 = vmax.f32 %v1988, 0.0
    %v2005 = vmax.f32 %v1989, 0.0
    %v2006 = vmax.f32 %v1990, 0.0
    %v2007 = vmax.f32 %v1991, 0.0
    %v2008 = vmax.f32 %v1992, 0.0
    %v2009 = vmax.f32 %v1993, 0.0
    %v2010 = vmax.f32 %v1994, 0.0
    %v2011 = vmax.f32 %v1995, 0.0
    %v2012 = vmax.f32 %v1996, 0.0
    %v2013 = vmax.f32 %v1997, 0.0
    %v2014 = vmax.f32 %v1998, 0.0
    %v2015 = vld [vmem:[#allocation8] sm:$0xff]
    %v2016 = vld [vmem:[#allocation8 + $0x8] sm:$0xff]
    %v2017 = vld [vmem:[#allocation8 + $0x10] sm:$0xff]
    %v2018 = vld [vmem:[#allocation8 + $0x18] sm:$0xff]
    %v2019 = vld [vmem:[#allocation8 + $0x20] sm:$0xff]
    %v2020 = vld [vmem:[#allocation8 + $0x28] sm:$0xff]
    %v2021 = vld [vmem:[#allocation8 + $0x30] sm:$0xff]
    %v2022 = vld [vmem:[#allocation8 + $0x38] sm:$0xff]
    %v2024 = vsel %vm135, %v1999, 0
    %v2027 = vsel %vm135, %v2000, 0
    %v2030 = vsel %vm135, %v2001, 0
    %v2033 = vsel %vm135, %v2002, 0
    %v2036 = vsel %vm135, %v2003, 0
    %v2039 = vsel %vm135, %v2004, 0
    %v2042 = vsel %vm135, %v2005, 0
    %v2045 = vsel %vm135, %v2006, 0
    %v2048 = vsel %vm135, %v2007, 0
    %v2051 = vsel %vm135, %v2008, 0
    %v2054 = vsel %vm135, %v2009, 0
    %v2057 = vsel %vm135, %v2010, 0
    %v2060 = vsel %vm135, %v2011, 0
    %v2063 = vsel %vm135, %v2012, 0
    %v2066 = vsel %vm135, %v2013, 0
    %v2069 = vsel %vm135, %v2014, 0
    %2071 = vmatprep.subr.mxu0 0.0
    %2072 = vmatpush1.msra.mxu0 %v2015
    %2073 = vmatprep.subr.mxu0 0.0
    %2074 = vmatpush1.msra.mxu0 %v2016
    %2075 = vmatprep.subr.mxu0 0.0
    %2076 = vmatpush1.msra.mxu0 %v2017
    %2077 = vmatprep.subr.mxu0 0.0
    %2078 = vmatpush1.msra.mxu0 %v2018
    %2079 = vmatprep.subr.mxu0 0.0
    %2080 = vmatpush1.msra.mxu0 %v2019
    %2081 = vmatprep.subr.mxu0 0.0
    %2082 = vmatpush1.msra.mxu0 %v2020
    %2083 = vmatprep.subr.mxu0 0.0
    %2084 = vmatpush1.msra.mxu0 %v2021
    %2085 = vmatprep.subr.mxu0 0.0
    %2086 = vmatpush1.msra.mxu0 %v2022
    %2087 = vmatprep.subr.mxu0 0.0
    %2088 = vmatpush1.msra.mxu0 0.0
    %2089 = vmatprep.subr.mxu0 0.0
    %2090 = vmatpush1.msra.mxu0 0.0
    %2091 = vmatprep.subr.mxu0 0.0
    %2092 = vmatpush1.msra.mxu0 0.0
    %2093 = vmatprep.subr.mxu0 0.0
    %2094 = vmatpush1.msra.mxu0 0.0
    %2095 = vmatprep.subr.mxu0 0.0
    %2096 = vmatpush1.msra.mxu0 0.0
    %2097 = vmatprep.subr.mxu0 0.0
    %2098 = vmatpush1.msra.mxu0 0.0
    %2099 = vmatprep.subr.mxu0 0.0
    %2100 = vmatpush1.msra.mxu0 0.0
    %2101 = vmatprep.subr.mxu0 0.0
    %2102 = vmatpush1.msra.mxu0 0.0
    %2103 = vmatprep.subr.mxu0 0.0
    %2104 = vmatpush1.msra.mxu0 0.0
    %2105 = vmatprep.subr.mxu0 0.0
    %2106 = vmatpush1.msra.mxu0 0.0
    %2107 = vmatprep.subr.mxu0 0.0
    %2108 = vmatpush1.msra.mxu0 0.0
    %2109 = vmatprep.subr.mxu0 0.0
    %2110 = vmatpush1.msra.mxu0 0.0
    %2111 = vmatprep.subr.mxu0 0.0
    %2112 = vmatpush1.msra.mxu0 0.0
    %2113 = vmatprep.subr.mxu0 0.0
    %2114 = vmatpush1.msra.mxu0 0.0
    %2115 = vmatprep.subr.mxu0 0.0
    %2116 = vmatpush1.msra.mxu0 0.0
    %2117 = vmatprep.subr.mxu0 0.0
    %2118 = vmatpush1.msra.mxu0 0.0
    %2119 = vmatprep.subr.mxu0 0.0
    %2120 = vmatpush1.msra.mxu0 0.0
    %2121 = vmatprep.subr.mxu0 0.0
    %2122 = vmatpush1.msra.mxu0 0.0
    %2123 = vmatprep.subr.mxu0 0.0
    %2124 = vmatpush1.msra.mxu0 0.0
    %2125 = vmatprep.subr.mxu0 0.0
    %2126 = vmatpush1.msra.mxu0 0.0
    %2127 = vmatprep.subr.mxu0 0.0
    %2128 = vmatpush1.msra.mxu0 0.0
    %2129 = vmatprep.subr.mxu0 0.0
    %2130 = vmatpush1.msra.mxu0 0.0
    %2131 = vmatprep.subr.mxu0 0.0
    %2132 = vmatpush1.msra.mxu0 0.0
    %2133 = vmatprep.subr.mxu0 0.0
    %2134 = vmatpush1.msra.mxu0 0.0
    %2135 = vmatprep.mubr.f32.mxu0 0.0
    %2136 = vmatmul.mubr.f32.gmra.mrb[0].mxu0 %v2024
    %v2137 = vpop.f32.mrb[0].mxu0
    %v2138 = vadd.f32 0.0, %v2137
    %v2139 = vpop.f32.mrb[0].mxu0
    %2140 = vmatprep.mubr.f32.mxu0 0.0
    %2141 = vmatmul.mubr.f32.gmra.mrb[0].mxu0 %v2027
    %v2142 = vpop.f32.mrb[0].mxu0
    %v2143 = vadd.f32 0.0, %v2142
    %v2144 = vpop.f32.mrb[0].mxu0
    %2145 = vmatprep.mubr.f32.mxu0 0.0
    %2146 = vmatmul.mubr.f32.gmra.mrb[0].mxu0 %v2030
    %v2147 = vpop.f32.mrb[0].mxu0
    %v2148 = vadd.f32 0.0, %v2147
    %v2149 = vpop.f32.mrb[0].mxu0
    %2150 = vmatprep.mubr.f32.mxu0 0.0
    %2151 = vmatmul.mubr.f32.gmra.mrb[0].mxu0 %v2033
    %v2152 = vpop.f32.mrb[0].mxu0
    %v2153 = vadd.f32 0.0, %v2152
    %v2154 = vpop.f32.mrb[0].mxu0
    %2155 = vmatprep.mubr.f32.mxu0 0.0
    %2156 = vmatmul.mubr.f32.gmra.mrb[0].mxu0 %v2036
    %v2157 = vpop.f32.mrb[0].mxu0
    %v2158 = vadd.f32 0.0, %v2157
    %v2159 = vpop.f32.mrb[0].mxu0
    %2160 = vmatprep.mubr.f32.mxu0 0.0
    %2161 = vmatmul.mubr.f32.gmra.mrb[0].mxu0 %v2039
    %v2162 = vpop.f32.mrb[0].mxu0
    %v2163 = vadd.f32 0.0, %v2162
    %v2164 = vpop.f32.mrb[0].mxu0
    %2165 = vmatprep.mubr.f32.mxu0 0.0
    %2166 = vmatmul.mubr.f32.gmra.mrb[0].mxu0 %v2042
    %v2167 = vpop.f32.mrb[0].mxu0
    %v2168 = vadd.f32 0.0, %v2167
    %v2169 = vpop.f32.mrb[0].mxu0
    %2170 = vmatprep.mubr.f32.mxu0 0.0
    %2171 = vmatmul.mubr.f32.gmra.mrb[0].mxu0 %v2045
    %v2172 = vpop.f32.mrb[0].mxu0
    %v2173 = vadd.f32 0.0, %v2172
    %v2174 = vpop.f32.mrb[0].mxu0
    %2175 = vmatprep.mubr.f32.mxu0 0.0
    %2176 = vmatmul.mubr.f32.gmra.mrb[0].mxu0 %v2048
    %v2177 = vpop.f32.mrb[0].mxu0
    %v2178 = vadd.f32 0.0, %v2177
    %v2179 = vpop.f32.mrb[0].mxu0
    %2180 = vmatprep.mubr.f32.mxu0 0.0
    %2181 = vmatmul.mubr.f32.gmra.mrb[0].mxu0 %v2051
    %v2182 = vpop.f32.mrb[0].mxu0
    %v2183 = vadd.f32 0.0, %v2182
    %v2184 = vpop.f32.mrb[0].mxu0
    %2185 = vmatprep.mubr.f32.mxu0 0.0
    %2186 = vmatmul.mubr.f32.gmra.mrb[0].mxu0 %v2054
    %v2187 = vpop.f32.mrb[0].mxu0
    %v2188 = vadd.f32 0.0, %v2187
    %v2189 = vpop.f32.mrb[0].mxu0
    %2190 = vmatprep.mubr.f32.mxu0 0.0
    %2191 = vmatmul.mubr.f32.gmra.mrb[0].mxu0 %v2057
    %v2192 = vpop.f32.mrb[0].mxu0
    %v2193 = vadd.f32 0.0, %v2192
    %v2194 = vpop.f32.mrb[0].mxu0
    %2195 = vmatprep.mubr.f32.mxu0 0.0
    %2196 = vmatmul.mubr.f32.gmra.mrb[0].mxu0 %v2060
    %v2197 = vpop.f32.mrb[0].mxu0
    %v2198 = vadd.f32 0.0, %v2197
    %v2199 = vpop.f32.mrb[0].mxu0
    %2200 = vmatprep.mubr.f32.mxu0 0.0
    %2201 = vmatmul.mubr.f32.gmra.mrb[0].mxu0 %v2063
    %v2202 = vpop.f32.mrb[0].mxu0
    %v2203 = vadd.f32 0.0, %v2202
    %v2204 = vpop.f32.mrb[0].mxu0
    %2205 = vmatprep.mubr.f32.mxu0 0.0
    %2206 = vmatmul.mubr.f32.gmra.mrb[0].mxu0 %v2066
    %v2207 = vpop.f32.mrb[0].mxu0
    %v2208 = vadd.f32 0.0, %v2207
    %v2209 = vpop.f32.mrb[0].mxu0
    %2210 = vmatprep.mubr.f32.mxu0 0.0
    %2211 = vmatmul.mubr.f32.gmra.mrb[0].mxu0 %v2069
    %v2212 = vpop.f32.mrb[0].mxu0
    %v2213 = vadd.f32 0.0, %v2212
    %v2214 = vpop.f32.mrb[0].mxu0
    %2215 = vdwg.mxu0
    %v2216 = vld [vmem:[%s10] sm:$0x1]
    %v2218 = vlaneseq
    %v2219 = vshrl.u32 %v2218, 7
    %v2220 = vsub.s32 0, %v2219
    %v2221 = vrot.slane %v2216, %v2220
    %v2223 = vmul.f32 %v2138, %v2221
    %v2224 = vmul.f32 %v2143, %v2221
    %v2225 = vmul.f32 %v2148, %v2221
    %v2226 = vmul.f32 %v2153, %v2221
    %v2227 = vmul.f32 %v2158, %v2221
    %v2228 = vmul.f32 %v2163, %v2221
    %v2229 = vmul.f32 %v2168, %v2221
    %v2230 = vmul.f32 %v2173, %v2221
    %v2231 = vmul.f32 %v2178, %v2221
    %v2232 = vmul.f32 %v2183, %v2221
    %v2233 = vmul.f32 %v2188, %v2221
    %v2234 = vmul.f32 %v2193, %v2221
    %v2235 = vmul.f32 %v2198, %v2221
    %v2236 = vmul.f32 %v2203, %v2221
    %v2237 = vmul.f32 %v2208, %v2221
    %v2238 = vmul.f32 %v2213, %v2221
    %v2239 = vld [vmem:[%s11] sm:$0x1]
    %v2241 = vlaneseq
    %v2242 = vshrl.u32 %v2241, 7
    %v2243 = vsub.s32 0, %v2242
    %v2244 = vrot.slane %v2239, %v2243
    %v2246 = vadd.f32 %v2223, %v2244
    %v2247 = vadd.f32 %v2224, %v2244
    %v2248 = vadd.f32 %v2225, %v2244
    %v2249 = vadd.f32 %v2226, %v2244
    %v2250 = vadd.f32 %v2227, %v2244
    %v2251 = vadd.f32 %v2228, %v2244
    %v2252 = vadd.f32 %v2229, %v2244
    %v2253 = vadd.f32 %v2230, %v2244
    %v2254 = vadd.f32 %v2231, %v2244
    %v2255 = vadd.f32 %v2232, %v2244
    %v2256 = vadd.f32 %v2233, %v2244
    %v2257 = vadd.f32 %v2234, %v2244
    %v2258 = vadd.f32 %v2235, %v2244
    %v2259 = vadd.f32 %v2236, %v2244
    %v2260 = vadd.f32 %v2237, %v2244
    %v2261 = vadd.f32 %v2238, %v2244
    %v2262 = vld [vmem:[%s16] sm:$0x3]
    %2263 = vmatprep.subr.mxu0 0.0
    %2264 = vmatpush1.msra.mxu0 %v2246
    %2265 = vmatprep.subr.mxu0 0.0
    %2266 = vmatpush1.msra.mxu0 %v2247
    %2267 = vmatprep.subr.mxu0 0.0
    %2268 = vmatpush1.msra.mxu0 %v2248
    %2269 = vmatprep.subr.mxu0 0.0
    %2270 = vmatpush1.msra.mxu0 %v2249
    %2271 = vmatprep.subr.mxu0 0.0
    %2272 = vmatpush1.msra.mxu0 %v2250
    %2273 = vmatprep.subr.mxu0 0.0
    %2274 = vmatpush1.msra.mxu0 %v2251
    %2275 = vmatprep.subr.mxu0 0.0
    %2276 = vmatpush1.msra.mxu0 %v2252
    %2277 = vmatprep.subr.mxu0 0.0
    %2278 = vmatpush1.msra.mxu0 %v2253
    %2279 = vmatprep.subr.mxu0 0.0
    %2280 = vmatpush1.msra.mxu0 %v2254
    %2281 = vmatprep.subr.mxu0 0.0
    %2282 = vmatpush1.msra.mxu0 %v2255
    %2283 = vmatprep.subr.mxu0 0.0
    %2284 = vmatpush1.msra.mxu0 %v2256
    %2285 = vmatprep.subr.mxu0 0.0
    %2286 = vmatpush1.msra.mxu0 %v2257
    %2287 = vmatprep.subr.mxu0 0.0
    %2288 = vmatpush1.msra.mxu0 %v2258
    %2289 = vmatprep.subr.mxu0 0.0
    %2290 = vmatpush1.msra.mxu0 %v2259
    %2291 = vmatprep.subr.mxu0 0.0
    %2292 = vmatpush1.msra.mxu0 %v2260
    %2293 = vmatprep.subr.mxu0 0.0
    %2294 = vmatpush1.msra.mxu0 %v2261
    %2295 = vmatprep.subr.mxu0 0.0
    %2296 = vmatpush1.msra.mxu0 0.0
    %2297 = vmatprep.subr.mxu0 0.0
    %2298 = vmatpush1.msra.mxu0 0.0
    %2299 = vmatprep.subr.mxu0 0.0
    %2300 = vmatpush1.msra.mxu0 0.0
    %2301 = vmatprep.subr.mxu0 0.0
    %2302 = vmatpush1.msra.mxu0 0.0
    %2303 = vmatprep.subr.mxu0 0.0
    %2304 = vmatpush1.msra.mxu0 0.0
    %2305 = vmatprep.subr.mxu0 0.0
    %2306 = vmatpush1.msra.mxu0 0.0
    %2307 = vmatprep.subr.mxu0 0.0
    %2308 = vmatpush1.msra.mxu0 0.0
    %2309 = vmatprep.subr.mxu0 0.0
    %2310 = vmatpush1.msra.mxu0 0.0
    %2311 = vmatprep.subr.mxu0 0.0
    %2312 = vmatpush1.msra.mxu0 0.0
    %2313 = vmatprep.subr.mxu0 0.0
    %2314 = vmatpush1.msra.mxu0 0.0
    %2315 = vmatprep.subr.mxu0 0.0
    %2316 = vmatpush1.msra.mxu0 0.0
    %2317 = vmatprep.subr.mxu0 0.0
    %2318 = vmatpush1.msra.mxu0 0.0
    %2319 = vmatprep.subr.mxu0 0.0
    %2320 = vmatpush1.msra.mxu0 0.0
    %2321 = vmatprep.subr.mxu0 0.0
    %2322 = vmatpush1.msra.mxu0 0.0
    %2323 = vmatprep.subr.mxu0 0.0
    %2324 = vmatpush1.msra.mxu0 0.0
    %2325 = vmatprep.subr.mxu0 0.0
    %2326 = vmatpush1.msra.mxu0 0.0
    %2327 = vmatprep.mubr.f32.mxu0 0.0
    %2328 = vmatmul.mubr.f32.gmra.mrb[0].mxu0 %v2262
    %v2329 = vpop.f32.mrb[0].mxu0
    %v2330 = vadd.f32 0.0, %v2329
    %v2331 = vpop.f32.mrb[0].mxu0
    %2332 = vdwg.mxu0
    %v2333 = vld [vmem:[%s12] sm:$0xff]
    %v2334 = vld [vmem:[%s12 + $0x8] sm:$0xff]
    %v2335 = vld [vmem:[%s12 + $0x10] sm:$0xff]
    %v2336 = vld [vmem:[%s12 + $0x18] sm:$0xff]
    %v2337 = vld [vmem:[%s12 + $0x20] sm:$0xff]
    %v2338 = vld [vmem:[%s12 + $0x28] sm:$0xff]
    %v2339 = vld [vmem:[%s12 + $0x30] sm:$0xff]
    %v2340 = vld [vmem:[%s12 + $0x38] sm:$0xff]
    %v2341 = vld [vmem:[%s13] sm:$0x1]
    %v2343 = vlaneseq
    %v2344 = vshrl.u32 %v2343, 7
    %v2345 = vsub.s32 0, %v2344
    %v2346 = vrot.slane %v2341, %v2345
    %v2349 = vsel %vm135, %v2330, 0
    %2351 = vmatprep.subr.mxu0 0.0
    %2352 = vmatpush1.msra.mxu0 %v2333
    %2353 = vmatprep.subr.mxu0 0.0
    %2354 = vmatpush1.msra.mxu0 %v2334
    %2355 = vmatprep.subr.mxu0 0.0
    %2356 = vmatpush1.msra.mxu0 %v2335
    %2357 = vmatprep.subr.mxu0 0.0
    %2358 = vmatpush1.msra.mxu0 %v2336
    %2359 = vmatprep.subr.mxu0 0.0
    %2360 = vmatpush1.msra.mxu0 %v2337
    %2361 = vmatprep.subr.mxu0 0.0
    %2362 = vmatpush1.msra.mxu0 %v2338
    %2363 = vmatprep.subr.mxu0 0.0
    %2364 = vmatpush1.msra.mxu0 %v2339
    %2365 = vmatprep.subr.mxu0 0.0
    %2366 = vmatpush1.msra.mxu0 %v2340
    %2367 = vmatprep.subr.mxu0 0.0
    %2368 = vmatpush1.msra.mxu0 0.0
    %2369 = vmatprep.subr.mxu0 0.0
    %2370 = vmatpush1.msra.mxu0 0.0
    %2371 = vmatprep.subr.mxu0 0.0
    %2372 = vmatpush1.msra.mxu0 0.0
    %2373 = vmatprep.subr.mxu0 0.0
    %2374 = vmatpush1.msra.mxu0 0.0
    %2375 = vmatprep.subr.mxu0 0.0
    %2376 = vmatpush1.msra.mxu0 0.0
    %2377 = vmatprep.subr.mxu0 0.0
    %2378 = vmatpush1.msra.mxu0 0.0
    %2379 = vmatprep.subr.mxu0 0.0
    %2380 = vmatpush1.msra.mxu0 0.0
    %2381 = vmatprep.subr.mxu0 0.0
    %2382 = vmatpush1.msra.mxu0 0.0
    %2383 = vmatprep.subr.mxu0 0.0
    %2384 = vmatpush1.msra.mxu0 0.0
    %2385 = vmatprep.subr.mxu0 0.0
    %2386 = vmatpush1.msra.mxu0 0.0
    %2387 = vmatprep.subr.mxu0 0.0
    %2388 = vmatpush1.msra.mxu0 0.0
    %2389 = vmatprep.subr.mxu0 0.0
    %2390 = vmatpush1.msra.mxu0 0.0
    %2391 = vmatprep.subr.mxu0 0.0
    %2392 = vmatpush1.msra.mxu0 0.0
    %2393 = vmatprep.subr.mxu0 0.0
    %2394 = vmatpush1.msra.mxu0 0.0
    %2395 = vmatprep.subr.mxu0 0.0
    %2396 = vmatpush1.msra.mxu0 0.0
    %2397 = vmatprep.subr.mxu0 0.0
    %2398 = vmatpush1.msra.mxu0 0.0
    %2399 = vmatprep.subr.mxu0 0.0
    %2400 = vmatpush1.msra.mxu0 0.0
    %2401 = vmatprep.subr.mxu0 0.0
    %2402 = vmatpush1.msra.mxu0 0.0
    %2403 = vmatprep.subr.mxu0 0.0
    %2404 = vmatpush1.msra.mxu0 0.0
    %2405 = vmatprep.subr.mxu0 0.0
    %2406 = vmatpush1.msra.mxu0 0.0
    %2407 = vmatprep.subr.mxu0 0.0
    %2408 = vmatpush1.msra.mxu0 0.0
    %2409 = vmatprep.subr.mxu0 0.0
    %2410 = vmatpush1.msra.mxu0 0.0
    %2411 = vmatprep.subr.mxu0 0.0
    %2412 = vmatpush1.msra.mxu0 0.0
    %2413 = vmatprep.subr.mxu0 0.0
    %2414 = vmatpush1.msra.mxu0 0.0
    %2415 = vmatprep.mubr.f32.mxu0 0.0
    %2416 = vmatmul.mubr.f32.gmra.mrb[0].mxu0 %v2349
    %v2417 = vpop.f32.mrb[0].mxu0
    %v2418 = vadd.f32 %v2346, %v2417
    %v2419 = vpop.f32.mrb[0].mxu0
    %2420 = vdwg.mxu0
    %v2421 = vmax.f32 %v2418, 0.0
    %v2422 = vld [vmem:[%s14] sm:$0xf]
    %v2423 = vld [vmem:[%s15] sm:$0x1]
    %v2425 = vlaneseq
    %v2426 = vshrl.u32 %v2425, 7
    %v2427 = vsub.s32 0, %v2426
    %v2428 = vrot.slane %v2423, %v2427
    %vm2430 = vcmask 31744
    %v2432 = vsel %vm2430, %v2421, 0
    %vm2434 = vcmask 1043456
    %v2436 = vsel %vm2434, %v2422, 0
    %2438 = vmatprep.subr.mxu0 0.0
    %2439 = vmatpush1.msra.mxu0 %v2436
    %2440 = vmatprep.subr.mxu0 0.0
    %2441 = vmatpush1.msra.mxu0 0.0
    %2442 = vmatprep.subr.mxu0 0.0
    %2443 = vmatpush1.msra.mxu0 0.0
    %2444 = vmatprep.subr.mxu0 0.0
    %2445 = vmatpush1.msra.mxu0 0.0
    %2446 = vmatprep.subr.mxu0 0.0
    %2447 = vmatpush1.msra.mxu0 0.0
    %2448 = vmatprep.subr.mxu0 0.0
    %2449 = vmatpush1.msra.mxu0 0.0
    %2450 = vmatprep.subr.mxu0 0.0
    %2451 = vmatpush1.msra.mxu0 0.0
    %2452 = vmatprep.subr.mxu0 0.0
    %2453 = vmatpush1.msra.mxu0 0.0
    %2454 = vmatprep.subr.mxu0 0.0
    %2455 = vmatpush1.msra.mxu0 0.0
    %2456 = vmatprep.subr.mxu0 0.0
    %2457 = vmatpush1.msra.mxu0 0.0
    %2458 = vmatprep.subr.mxu0 0.0
    %2459 = vmatpush1.msra.mxu0 0.0
    %2460 = vmatprep.subr.mxu0 0.0
    %2461 = vmatpush1.msra.mxu0 0.0
    %2462 = vmatprep.subr.mxu0 0.0
    %2463 = vmatpush1.msra.mxu0 0.0
    %2464 = vmatprep.subr.mxu0 0.0
    %2465 = vmatpush1.msra.mxu0 0.0
    %2466 = vmatprep.subr.mxu0 0.0
    %2467 = vmatpush1.msra.mxu0 0.0
    %2468 = vmatprep.subr.mxu0 0.0
    %2469 = vmatpush1.msra.mxu0 0.0
    %2470 = vmatprep.subr.mxu0 0.0
    %2471 = vmatpush1.msra.mxu0 0.0
    %2472 = vmatprep.subr.mxu0 0.0
    %2473 = vmatpush1.msra.mxu0 0.0
    %2474 = vmatprep.subr.mxu0 0.0
    %2475 = vmatpush1.msra.mxu0 0.0
    %2476 = vmatprep.subr.mxu0 0.0
    %2477 = vmatpush1.msra.mxu0 0.0
    %2478 = vmatprep.subr.mxu0 0.0
    %2479 = vmatpush1.msra.mxu0 0.0
    %2480 = vmatprep.subr.mxu0 0.0
    %2481 = vmatpush1.msra.mxu0 0.0
    %2482 = vmatprep.subr.mxu0 0.0
    %2483 = vmatpush1.msra.mxu0 0.0
    %2484 = vmatprep.subr.mxu0 0.0
    %2485 = vmatpush1.msra.mxu0 0.0
    %2486 = vmatprep.subr.mxu0 0.0
    %2487 = vmatpush1.msra.mxu0 0.0
    %2488 = vmatprep.subr.mxu0 0.0
    %2489 = vmatpush1.msra.mxu0 0.0
    %2490 = vmatprep.subr.mxu0 0.0
    %2491 = vmatpush1.msra.mxu0 0.0
    %2492 = vmatprep.subr.mxu0 0.0
    %2493 = vmatpush1.msra.mxu0 0.0
    %2494 = vmatprep.subr.mxu0 0.0
    %2495 = vmatpush1.msra.mxu0 0.0
    %2496 = vmatprep.subr.mxu0 0.0
    %2497 = vmatpush1.msra.mxu0 0.0
    %2498 = vmatprep.subr.mxu0 0.0
    %2499 = vmatpush1.msra.mxu0 0.0
    %2500 = vmatprep.subr.mxu0 0.0
    %2501 = vmatpush1.msra.mxu0 0.0
    %2502 = vmatprep.mubr.f32.mxu0 0.0
    %2503 = vmatmul.mubr.f32.gmra.mrb[0].mxu0 %v2432
    %v2504 = vpop.f32.mrb[0].mxu0
    %v2505 = vadd.f32 %v2428, %v2504
    %v2506 = vpop.f32.mrb[0].mxu0
    %2507 = vdwg.mxu0
    %v2508 = vxor.u32 %v2505, 2147483648
    %v2509 = vmul.f32 %v2508, 1.442695
    %v2510 = vpow.pop %v2509
    %v2511 = vadd.f32 %v2510, 1.0
    %v2512 = vrcp.pop %v2511
    %v2513 = vmul.f32 1.0, %v2512
    %v2514 = vld [vmem:[%s17] sm:$0xff]
    %v2515 = vld [vmem:[%s17 + $0x8] sm:$0xff]
    %v2516 = vld [vmem:[%s17 + $0x10] sm:$0xff]
    %v2517 = vld [vmem:[%s17 + $0x18] sm:$0xff]
    %v2518 = vld [vmem:[%s17 + $0x20] sm:$0xff]
    %v2519 = vld [vmem:[%s17 + $0x28] sm:$0xff]
    %v2520 = vld [vmem:[%s17 + $0x30] sm:$0xff]
    %v2521 = vld [vmem:[%s17 + $0x38] sm:$0xff]
    %v2522 = vld [vmem:[%s17 + $0x40] sm:$0xff]
    %v2523 = vld [vmem:[%s17 + $0x48] sm:$0xff]
    %v2524 = vld [vmem:[%s17 + $0x50] sm:$0xff]
    %v2525 = vld [vmem:[%s17 + $0x58] sm:$0xff]
    %v2526 = vld [vmem:[%s17 + $0x60] sm:$0xff]
    %v2527 = vld [vmem:[%s17 + $0x68] sm:$0xff]
    %v2528 = vld [vmem:[%s17 + $0x70] sm:$0xff]
    %v2529 = vld [vmem:[%s17 + $0x78] sm:$0xff]
    %vm2530 = vcmask 15360
    %v2532 = vsel %vm2530, %v2514, 0
    %v2535 = vsel %vm2530, %v2515, 0
    %v2538 = vsel %vm2530, %v2516, 0
    %v2541 = vsel %vm2530, %v2517, 0
    %v2544 = vsel %vm2530, %v2518, 0
    %v2547 = vsel %vm2530, %v2519, 0
    %v2550 = vsel %vm2530, %v2520, 0
    %v2553 = vsel %vm2530, %v2521, 0
    %v2556 = vsel %vm2530, %v2522, 0
    %v2559 = vsel %vm2530, %v2523, 0
    %v2562 = vsel %vm2530, %v2524, 0
    %v2565 = vsel %vm2530, %v2525, 0
    %v2568 = vsel %vm2530, %v2526, 0
    %v2571 = vsel %vm2530, %v2527, 0
    %v2574 = vsel %vm2530, %v2528, 0
    %v2577 = vsel %vm2530, %v2529, 0
    %vm2579 = vcmask 1041408
    %v2581 = vsel %vm2579, %v2513, 0
    %2583 = vmatprep.subr.mxu0 0.0
    %2584 = vmatpush1.msra.mxu0 %v2581
    %2585 = vmatprep.subr.mxu0 0.0
    %2586 = vmatpush1.msra.mxu0 0.0
    %2587 = vmatprep.subr.mxu0 0.0
    %2588 = vmatpush1.msra.mxu0 0.0
    %2589 = vmatprep.subr.mxu0 0.0
    %2590 = vmatpush1.msra.mxu0 0.0
    %2591 = vmatprep.subr.mxu0 0.0
    %2592 = vmatpush1.msra.mxu0 0.0
    %2593 = vmatprep.subr.mxu0 0.0
    %2594 = vmatpush1.msra.mxu0 0.0
    %2595 = vmatprep.subr.mxu0 0.0
    %2596 = vmatpush1.msra.mxu0 0.0
    %2597 = vmatprep.subr.mxu0 0.0
    %2598 = vmatpush1.msra.mxu0 0.0
    %2599 = vmatprep.subr.mxu0 0.0
    %2600 = vmatpush1.msra.mxu0 0.0
    %2601 = vmatprep.subr.mxu0 0.0
    %2602 = vmatpush1.msra.mxu0 0.0
    %2603 = vmatprep.subr.mxu0 0.0
    %2604 = vmatpush1.msra.mxu0 0.0
    %2605 = vmatprep.subr.mxu0 0.0
    %2606 = vmatpush1.msra.mxu0 0.0
    %2607 = vmatprep.subr.mxu0 0.0
    %2608 = vmatpush1.msra.mxu0 0.0
    %2609 = vmatprep.subr.mxu0 0.0
    %2610 = vmatpush1.msra.mxu0 0.0
    %2611 = vmatprep.subr.mxu0 0.0
    %2612 = vmatpush1.msra.mxu0 0.0
    %2613 = vmatprep.subr.mxu0 0.0
    %2614 = vmatpush1.msra.mxu0 0.0
    %2615 = vmatprep.subr.mxu0 0.0
    %2616 = vmatpush1.msra.mxu0 0.0
    %2617 = vmatprep.subr.mxu0 0.0
    %2618 = vmatpush1.msra.mxu0 0.0
    %2619 = vmatprep.subr.mxu0 0.0
    %2620 = vmatpush1.msra.mxu0 0.0
    %2621 = vmatprep.subr.mxu0 0.0
    %2622 = vmatpush1.msra.mxu0 0.0
    %2623 = vmatprep.subr.mxu0 0.0
    %2624 = vmatpush1.msra.mxu0 0.0
    %2625 = vmatprep.subr.mxu0 0.0
    %2626 = vmatpush1.msra.mxu0 0.0
    %2627 = vmatprep.subr.mxu0 0.0
    %2628 = vmatpush1.msra.mxu0 0.0
    %2629 = vmatprep.subr.mxu0 0.0
    %2630 = vmatpush1.msra.mxu0 0.0
    %2631 = vmatprep.subr.mxu0 0.0
    %2632 = vmatpush1.msra.mxu0 0.0
    %2633 = vmatprep.subr.mxu0 0.0
    %2634 = vmatpush1.msra.mxu0 0.0
    %2635 = vmatprep.subr.mxu0 0.0
    %2636 = vmatpush1.msra.mxu0 0.0
    %2637 = vmatprep.subr.mxu0 0.0
    %2638 = vmatpush1.msra.mxu0 0.0
    %2639 = vmatprep.subr.mxu0 0.0
    %2640 = vmatpush1.msra.mxu0 0.0
    %2641 = vmatprep.subr.mxu0 0.0
    %2642 = vmatpush1.msra.mxu0 0.0
    %2643 = vmatprep.subr.mxu0 0.0
    %2644 = vmatpush1.msra.mxu0 0.0
    %2645 = vmatprep.subr.mxu0 0.0
    %2646 = vmatpush1.msra.mxu0 0.0
    %2647 = vmatprep.mubr.f32.mxu0 0.0
    %2648 = vmatmul.mubr.f32.gmra.mrb[0].mxu0 %v2532
    %v2649 = vpop.f32.mrb[0].mxu0
    %v2650 = vadd.f32 0.0, %v2649
    %v2651 = vpop.f32.mrb[0].mxu0
    %2652 = vmatprep.mubr.f32.mxu0 0.0
    %2653 = vmatmul.mubr.f32.gmra.mrb[0].mxu0 %v2535
    %v2654 = vpop.f32.mrb[0].mxu0
    %v2655 = vadd.f32 0.0, %v2654
    %v2656 = vpop.f32.mrb[0].mxu0
    %2657 = vmatprep.mubr.f32.mxu0 0.0
    %2658 = vmatmul.mubr.f32.gmra.mrb[0].mxu0 %v2538
    %v2659 = vpop.f32.mrb[0].mxu0
    %v2660 = vadd.f32 0.0, %v2659
    %v2661 = vpop.f32.mrb[0].mxu0
    %2662 = vmatprep.mubr.f32.mxu0 0.0
    %2663 = vmatmul.mubr.f32.gmra.mrb[0].mxu0 %v2541
    %v2664 = vpop.f32.mrb[0].mxu0
    %v2665 = vadd.f32 0.0, %v2664
    %v2666 = vpop.f32.mrb[0].mxu0
    %2667 = vmatprep.mubr.f32.mxu0 0.0
    %2668 = vmatmul.mubr.f32.gmra.mrb[0].mxu0 %v2544
    %v2669 = vpop.f32.mrb[0].mxu0
    %v2670 = vadd.f32 0.0, %v2669
    %v2671 = vpop.f32.mrb[0].mxu0
    %2672 = vmatprep.mubr.f32.mxu0 0.0
    %2673 = vmatmul.mubr.f32.gmra.mrb[0].mxu0 %v2547
    %v2674 = vpop.f32.mrb[0].mxu0
    %v2675 = vadd.f32 0.0, %v2674
    %v2676 = vpop.f32.mrb[0].mxu0
    %2677 = vmatprep.mubr.f32.mxu0 0.0
    %2678 = vmatmul.mubr.f32.gmra.mrb[0].mxu0 %v2550
    %v2679 = vpop.f32.mrb[0].mxu0
    %v2680 = vadd.f32 0.0, %v2679
    %v2681 = vpop.f32.mrb[0].mxu0
    %2682 = vmatprep.mubr.f32.mxu0 0.0
    %2683 = vmatmul.mubr.f32.gmra.mrb[0].mxu0 %v2553
    %v2684 = vpop.f32.mrb[0].mxu0
    %v2685 = vadd.f32 0.0, %v2684
    %v2686 = vpop.f32.mrb[0].mxu0
    %2687 = vmatprep.mubr.f32.mxu0 0.0
    %2688 = vmatmul.mubr.f32.gmra.mrb[0].mxu0 %v2556
    %v2689 = vpop.f32.mrb[0].mxu0
    %v2690 = vadd.f32 0.0, %v2689
    %v2691 = vpop.f32.mrb[0].mxu0
    %2692 = vmatprep.mubr.f32.mxu0 0.0
    %2693 = vmatmul.mubr.f32.gmra.mrb[0].mxu0 %v2559
    %v2694 = vpop.f32.mrb[0].mxu0
    %v2695 = vadd.f32 0.0, %v2694
    %v2696 = vpop.f32.mrb[0].mxu0
    %2697 = vmatprep.mubr.f32.mxu0 0.0
    %2698 = vmatmul.mubr.f32.gmra.mrb[0].mxu0 %v2562
    %v2699 = vpop.f32.mrb[0].mxu0
    %v2700 = vadd.f32 0.0, %v2699
    %v2701 = vpop.f32.mrb[0].mxu0
    %2702 = vmatprep.mubr.f32.mxu0 0.0
    %2703 = vmatmul.mubr.f32.gmra.mrb[0].mxu0 %v2565
    %v2704 = vpop.f32.mrb[0].mxu0
    %v2705 = vadd.f32 0.0, %v2704
    %v2706 = vpop.f32.mrb[0].mxu0
    %2707 = vmatprep.mubr.f32.mxu0 0.0
    %2708 = vmatmul.mubr.f32.gmra.mrb[0].mxu0 %v2568
    %v2709 = vpop.f32.mrb[0].mxu0
    %v2710 = vadd.f32 0.0, %v2709
    %v2711 = vpop.f32.mrb[0].mxu0
    %2712 = vmatprep.mubr.f32.mxu0 0.0
    %2713 = vmatmul.mubr.f32.gmra.mrb[0].mxu0 %v2571
    %v2714 = vpop.f32.mrb[0].mxu0
    %v2715 = vadd.f32 0.0, %v2714
    %v2716 = vpop.f32.mrb[0].mxu0
    %2717 = vmatprep.mubr.f32.mxu0 0.0
    %2718 = vmatmul.mubr.f32.gmra.mrb[0].mxu0 %v2574
    %v2719 = vpop.f32.mrb[0].mxu0
    %v2720 = vadd.f32 0.0, %v2719
    %v2721 = vpop.f32.mrb[0].mxu0
    %2722 = vmatprep.mubr.f32.mxu0 0.0
    %2723 = vmatmul.mubr.f32.gmra.mrb[0].mxu0 %v2577
    %v2724 = vpop.f32.mrb[0].mxu0
    %v2725 = vadd.f32 0.0, %v2724
    %v2726 = vpop.f32.mrb[0].mxu0
    %2727 = vdwg.mxu0
    %v2728 = vmul.f32 %v2246, %v2650
    %v2729 = vmul.f32 %v2247, %v2655
    %v2730 = vmul.f32 %v2248, %v2660
    %v2731 = vmul.f32 %v2249, %v2665
    %v2732 = vmul.f32 %v2250, %v2670
    %v2733 = vmul.f32 %v2251, %v2675
    %v2734 = vmul.f32 %v2252, %v2680
    %v2735 = vmul.f32 %v2253, %v2685
    %v2736 = vmul.f32 %v2254, %v2690
    %v2737 = vmul.f32 %v2255, %v2695
    %v2738 = vmul.f32 %v2256, %v2700
    %v2739 = vmul.f32 %v2257, %v2705
    %v2740 = vmul.f32 %v2258, %v2710
    %v2741 = vmul.f32 %v2259, %v2715
    %v2742 = vmul.f32 %v2260, %v2720
    %v2743 = vmul.f32 %v2261, %v2725
    %v2744 = vadd.f32 %v2728, %v111
    %v2745 = vadd.f32 %v2729, %v112
    %v2746 = vadd.f32 %v2730, %v113
    %v2747 = vadd.f32 %v2731, %v114
    %v2748 = vadd.f32 %v2732, %v115
    %v2749 = vadd.f32 %v2733, %v116
    %v2750 = vadd.f32 %v2734, %v117
    %v2751 = vadd.f32 %v2735, %v118
    %v2752 = vadd.f32 %v2736, %v119
    %v2753 = vadd.f32 %v2737, %v120
    %v2754 = vadd.f32 %v2738, %v121
    %v2755 = vadd.f32 %v2739, %v122
    %v2756 = vadd.f32 %v2740, %v123
    %v2757 = vadd.f32 %v2741, %v124
    %v2758 = vadd.f32 %v2742, %v125
    %v2759 = vadd.f32 %v2743, %v126
    %v2760 = vmax.f32 %v2744, 0.0
    %v2761 = vmax.f32 %v2745, 0.0
    %v2762 = vmax.f32 %v2746, 0.0
    %v2763 = vmax.f32 %v2747, 0.0
    %v2764 = vmax.f32 %v2748, 0.0
    %v2765 = vmax.f32 %v2749, 0.0
    %v2766 = vmax.f32 %v2750, 0.0
    %v2767 = vmax.f32 %v2751, 0.0
    %v2768 = vmax.f32 %v2752, 0.0
    %v2769 = vmax.f32 %v2753, 0.0
    %v2770 = vmax.f32 %v2754, 0.0
    %v2771 = vmax.f32 %v2755, 0.0
    %v2772 = vmax.f32 %v2756, 0.0
    %v2773 = vmax.f32 %v2757, 0.0
    %v2774 = vmax.f32 %v2758, 0.0
    %v2775 = vmax.f32 %v2759, 0.0
    %2776 = vst.msk [vmem:[#allocation10] sm:$0xff] %vm135, %v2760
    %2777 = vst.msk [vmem:[#allocation10 + $0x8] sm:$0xff] %vm135, %v2761
    %2778 = vst.msk [vmem:[#allocation10 + $0x10] sm:$0xff] %vm135, %v2762
    %2779 = vst.msk [vmem:[#allocation10 + $0x18] sm:$0xff] %vm135, %v2763
    %2780 = vst.msk [vmem:[#allocation10 + $0x20] sm:$0xff] %vm135, %v2764
    %2781 = vst.msk [vmem:[#allocation10 + $0x28] sm:$0xff] %vm135, %v2765
    %2782 = vst.msk [vmem:[#allocation10 + $0x30] sm:$0xff] %vm135, %v2766
    %2783 = vst.msk [vmem:[#allocation10 + $0x38] sm:$0xff] %vm135, %v2767
    %2784 = vst.msk [vmem:[#allocation10 + $0x40] sm:$0xff] %vm135, %v2768
    %2785 = vst.msk [vmem:[#allocation10 + $0x48] sm:$0xff] %vm135, %v2769
    %2786 = vst.msk [vmem:[#allocation10 + $0x50] sm:$0xff] %vm135, %v2770
    %2787 = vst.msk [vmem:[#allocation10 + $0x58] sm:$0xff] %vm135, %v2771
    %2788 = vst.msk [vmem:[#allocation10 + $0x60] sm:$0xff] %vm135, %v2772
    %2789 = vst.msk [vmem:[#allocation10 + $0x68] sm:$0xff] %vm135, %v2773
    %2790 = vst.msk [vmem:[#allocation10 + $0x70] sm:$0xff] %vm135, %v2774
    %2791 = vst.msk [vmem:[#allocation10 + $0x78] sm:$0xff] %vm135, %v2775
    // Predicated region
    $region90: #{tpu_custom_call.1} parent=1 // pred_check
      _
    $region91: #{tpu_custom_call.1} parent=1 // pred_check_branch
      %2793 = sbr.rel (0) target = $region93
    $region92: #{tpu_custom_call.1} parent=1 // pred_region
      %s2795 = ssub.s32 2048, 2048
      %2796 = vsyncadd [#allocation4], %s2795
      %s2797 = sshll.u32 [#allocation10], 4
      %s2798 = int_to_ptr.vmem [resolvable:$true] %s2797
      %2803 = dma.vmem_to_hbm [thread:$0]  %s2798, 2048, %s18, [#allocation4], 128, 128, 8
    $region93: #{tpu_custom_call.1} parent=1 // pred_fallthru
      _
    // Predicated region
    $region94: #{tpu_custom_call.1} parent=1 // pred_check
      _
    $region95: #{tpu_custom_call.1} parent=1 // pred_check_branch
      %2805 = sbr.rel (0) target = $region97
    $region96: #{tpu_custom_call.1} parent=1 // pred_region
      %2806 = dma.done [#allocation4], 2048
    $region97: #{tpu_custom_call.1} parent=1 // pred_fallthru
      _
    %2807 = vsyncpa [#allocation3], 1
    %2808 = vsyncpa [#allocation6], 1
    %2809 = vsyncpa [#allocation9], 1
    %2810 = vsyncpa [#allocation4], 1

</llo_original>
